<compile_context>
chip_gen: v7x
topology: tpu7x:2x2x1
jax: 0.10.0
libtpu: 0.0.40
codegen_flags: <defaults>
</compile_context>

<pallas_src>
import functools

import jax
import jax.numpy as jnp
from jax.experimental import pallas as pl
from jax.experimental.pallas import tpu as pltpu


# ----------------------------- weight packing --------------------------------

def _pack_rows(vecs):
    """Pack 1-D vectors as rows (one 8-row slot each) of a lane-padded slab."""
    maxlen = max(int(v.shape[0]) for v in vecs)
    lanes = ((maxlen + 127) // 128) * 128
    slab = jnp.zeros((8 * len(vecs), lanes), jnp.float32)
    for i, v in enumerate(vecs):
        slab = slab.at[8 * i, : v.shape[0]].set(v)
    return slab


def _pack_cols_bcast(vecs, lanes=128):
    """Pack 1-D vectors as lane-replicated [len, 128] blocks (8-row aligned)."""
    offs, rows = [], 0
    for v in vecs:
        offs.append(rows)
        rows += ((int(v.shape[0]) + 7) // 8) * 8
    slab = jnp.zeros((rows, lanes), jnp.float32)
    for v, o in zip(vecs, offs):
        slab = slab.at[o: o + v.shape[0], :].set(jnp.tile(v[:, None], (1, lanes)))
    return slab, offs


def _pack_mats(mats):
    """Stack 2-D matrices along rows (8-row aligned) of one lane-padded slab."""
    lanes = ((max(int(m.shape[1]) for m in mats) + 127) // 128) * 128
    offs, r = [], 0
    for m in mats:
        offs.append(r)
        r += ((int(m.shape[0]) + 7) // 8) * 8
    slab = jnp.zeros((r, lanes), jnp.float32)
    for m, o in zip(mats, offs):
        slab = slab.at[o: o + m.shape[0], : m.shape[1]].set(m)
    return slab, offs


# ----------------------------- parameter init --------------------------------

def init_params(key, hidden_dim, dynamic_dim, patch_dim):
    C, D, K = hidden_dim, dynamic_dim, patch_dim
    C4, C16 = C // 4, C // 16
    K4, K16 = K // 4, K // 16
    num_params = C * D
    keys = iter(jax.random.split(key, 64))

    def lin(out_d, in_d):
        w = jax.random.normal(next(keys), (out_d, in_d), jnp.float32) / jnp.sqrt(float(in_d))
        b = 0.02 * jax.random.normal(next(keys), (out_d,), jnp.float32)
        return w, b

    def ln(d):
        g = 1.0 + 0.1 * jax.random.normal(next(keys), (d,), jnp.float32)
        b = 0.1 * jax.random.normal(next(keys), (d,), jnp.float32)
        return g, b

    p = {}
    p["Wd"], p["bd"] = lin(2 * num_params, C)          # self.dynamic
    p["g1"], p["b1"] = ln(D)                           # norm1
    p["g2"], p["b2"] = ln(C)                           # norm2
    dims = [(C, C4, K, K4), (C4, C16, K4, K16), (C16, 8, K16, 8)]
    for i, (ci, co, ki, ko) in enumerate(dims, start=1):
        p[f"WA{i}"], p[f"bA{i}"] = lin(co, ci)         # channel-side mlp Linear
        p[f"gA{i}"], p[f"btA{i}"] = ln(co)
        p[f"WB{i}"], p[f"bB{i}"] = lin(ko, ki)         # token-side mlp Linear
        p[f"gB{i}"], p[f"btB{i}"] = ln(ko)
    p["Wsz"], p["bsz"] = lin(2, 64)                    # size_layer
    return p


# ----------------------------- tile selection ---------------------------------

def _auto_tile(B, Q, K, C, D, tile_b=None):
    """VMEM-aware example-tile selection (TB batch rows -> G = TB*Q examples)."""
    try:
        vmem_cap = int(pltpu.get_tpu_info().vmem_capacity_bytes)
    except Exception:
        vmem_cap = 64 * 1024 * 1024            # conservative (v7x per-core VMEM)
    vmem_limit = int(min(vmem_cap // 2, 96 * 1024 * 1024))
    budget = vmem_limit // 2                   # inputs double-buffered + temp slack
    lane = 128
    ex_bytes = 4 * (3 * K * max(C, lane)       # f32 activations, lane-padded
                    + K * lane                 # dyn-conv intermediate [K, D->128]
                    + 2 * D * max(C, lane))    # dynamic-parameter block
    b_bytes = Q * ex_bytes + 4 * K * max(C, lane)
    tb_cap = max(1, budget // (2 * b_bytes))
    tb_cap = int(min(tb_cap, B, max(1, 1024 // max(Q, 1))))
    if tile_b is not None:
        tb_cap = max(1, min(tb_cap, int(tile_b)))
    # Prefer a tile that divides B: avoids an HBM jnp.pad copy of the inputs.
    tb_div = max(d for d in range(1, tb_cap + 1) if B % d == 0)
    tb = tb_div if tb_div * 2 >= tb_cap else tb_cap
    nsteps = -(-B // tb)
    pad_rows = nsteps * tb - B
    # NOTE: on v7x (2 TensorCores) the "parallel" grid axis only helps when
    # nsteps >= 2; auto tiling yields that whenever B exceeds the VMEM-derived cap.
    return tb, nsteps, pad_rows, vmem_limit


# ----------------------------- pallas wrapper ---------------------------------

def size_forward_pallas(params, target_feat, search_feat, dynamic_dim,
                        tile_b=None, use_bf16_inputs=False):
    Q, B, C = target_feat.shape
    K = search_feat.shape[0]
    D = dynamic_dim
    C4, C16 = C // 4, C // 16
    K4, K16 = K // 4, K // 16
    CD = C * D
    BQ = B * Q
    assert C % 16 == 0 and K % 16 == 0, "hidden_dim and patch_dim must be /16"

    # ---- glue: dynamic-parameter Linear (XLA).  Its weight rows are permuted so
    # pr.reshape(BQ, 2D, C) directly yields [param1^T ; param2] (lane-dense;
    # no activation transpose, no Q-fold repeat of search). ----
    t = jnp.transpose(target_feat, (1, 0, 2)).reshape(BQ, C)
    Wd, bd = params["Wd"], params["bd"]
    Wd_perm = jnp.concatenate(
        [Wd[:CD].reshape(C, D, C).transpose(1, 0, 2).reshape(CD, C), Wd[CD:]], axis=0)
    bd_perm = jnp.concatenate([bd[:CD].reshape(C, D).T.reshape(CD), bd[CD:]], axis=0)
    pdyn = (t @ Wd_perm.T + bd_perm).reshape(BQ, 2 * D, C)   # rows 0..D-1 = p1^T, D.. = p2
    search_b = jnp.transpose(search_feat, (1, 0, 2))          # [B, K, C]

    # ---- VMEM-aware example tiling: G = TB*Q examples per grid step ----
    TB, nsteps, pad_rows, vmem_limit = _auto_tile(B, Q, K, C, D, tile_b)
    G = TB * Q
    if pad_rows:                                              # fallback only (TB | B preferred)
        search_b = jnp.pad(search_b, ((0, pad_rows), (0, 0), (0, 0)))
        pdyn = jnp.pad(pdyn, ((0, pad_rows * Q), (0, 0), (0, 0)))
    in_dtype = jnp.bfloat16 if use_bf16_inputs else jnp.float32   # bf16 halves DMA on v6e/v7x
    search_b = search_b.astype(in_dtype)
    pdyn = pdyn.astype(in_dtype)

    # ---- pack the weight zoo into three resident slabs ----
    mat_list = [
        ("WA1T", params["WA1"].T), ("WA2T", params["WA2"].T), ("WA3T", params["WA3"].T),
        ("WB1", params["WB1"]), ("WB2", params["WB2"]), ("WB3", params["WB3"]),
        ("Wsz2", params["Wsz"].reshape(16, 8)),
    ]
    mat_slab, mat_offs = _pack_mats([m for _, m in mat_list])
    moff = {n: (o, int(m.shape[0]), int(m.shape[1]))
            for (n, m), o in zip(mat_list, mat_offs)}

    rvec_list = [
        ("g1", params["g1"]), ("b1", params["b1"]),
        ("g2", params["g2"]), ("b2", params["b2"]),
        ("bA1", params["bA1"]), ("gA1", params["gA1"]), ("btA1", params["btA1"]),
        ("bA2", params["bA2"]), ("gA2", params["gA2"]), ("btA2", params["btA2"]),
        ("bA3", params["bA3"]), ("gA3", params["gA3"]), ("btA3", params["btA3"]),
        ("bsz", params["bsz"]),
    ]
    rvec_slab = _pack_rows([v for _, v in rvec_list])
    roff = {n: (8 * i, int(v.shape[0])) for i, (n, v) in enumerate(rvec_list)}

    cvec_list = [
        ("bB1", params["bB1"]), ("gB1", params["gB1"]), ("btB1", params["btB1"]),
        ("bB2", params["bB2"]), ("gB2", params["gB2"]), ("btB2", params["btB2"]),
        ("bB3", params["bB3"]), ("gB3", params["gB3"]), ("btB3", params["btB3"]),
    ]
    cvec_slab, cvec_offs = _pack_cols_bcast([v for _, v in cvec_list])
    coff = {n: (o, int(v.shape[0])) for (n, v), o in zip(cvec_list, cvec_offs)}

    # ---- the batched kernel (closure over static dims & slab offsets) ----
    def kernel(search_ref, pdyn_ref, mat_ref, rvec_ref, cvec_ref, out_ref):
        relu = lambda v: jnp.maximum(v, 0.0)
        f32 = jnp.float32

        def mat(name):
            o, r, c = moff[name]
            return mat_ref[o:o + r, 0:c]

        def rvec(name):                       # -> [1, L] row vector
            o, l = roff[name]
            return rvec_ref[o:o + 1, 0:l]

        def cvec(name, width):                # -> [L, width] lane-replicated (pre-broadcast)
            o, l = coff[name]
            return cvec_ref[o:o + l, 0:width]

        def ln_last(x, g, b, eps=1e-5):       # LayerNorm over the lane (last) axis
            mu = jnp.mean(x, axis=-1, keepdims=True)
            var = jnp.mean(jnp.square(x - mu), axis=-1, keepdims=True)
            return (x - mu) * jax.lax.rsqrt(var + eps) * g + b

        def ln_axis1(x, g, b, eps=1e-5):      # LayerNorm over axis 1 of [G, J, C]
            mu = jnp.mean(x, axis=1, keepdims=True)
            var = jnp.mean(jnp.square(x - mu), axis=1, keepdims=True)
            return (x - mu) * jax.lax.rsqrt(var + eps) * g + b

        # replicate each batch row across its Q queries (VMEM-only broadcast)
        s = search_ref[...]                                            # [TB, K, C]
        sG = jnp.broadcast_to(s[:, None], (TB, Q, K, C)).reshape(G, K, C)

        pd = pdyn_ref[...]                                             # [G, 2D, C]
        p1t = pd[:, :D, :]                                             # param1 transposed
        p2 = pd[:, D:, :]                                              # param2

        # dynamic conv: relu(norm1(search @ p1)) ; relu(norm2(f @ p2))
        f = jnp.einsum("gkc,gdc->gkd", sG, p1t, preferred_element_type=f32)
        f = relu(ln_last(f, rvec("g1")[None], rvec("b1")[None]))       # [G, K, D]
        f = jnp.einsum("gkd,gdc->gkc", f, p2, preferred_element_type=f32)
        f = relu(ln_last(f, rvec("g2")[None], rvec("b2")[None]))       # [G, K, C]

        # ---- layer1: fused channel MLP over all G*K rows + batched token MLP ----
        x = jnp.dot(f.reshape(G * K, C), mat("WA1T"),
                    preferred_element_type=f32) + rvec("bA1")
        x = relu(ln_last(x, rvec("gA1"), rvec("btA1"))).reshape(G, K, C4)
        wb = jnp.broadcast_to(mat("WB1")[None], (G, K4, K))
        x = jnp.einsum("gjk,gkc->gjc", wb, x,
                       preferred_element_type=f32) + cvec("bB1", C4)[None]
        x = relu(ln_axis1(x, cvec("gB1", C4)[None], cvec("btB1", C4)[None]))   # [G, K4, C4]

        # ---- layer2 ----
        y = jnp.dot(x.reshape(G * K4, C4), mat("WA2T"),
                    preferred_element_type=f32) + rvec("bA2")
        y = relu(ln_last(y, rvec("gA2"), rvec("btA2"))).reshape(G, K4, C16)
        wb = jnp.broadcast_to(mat("WB2")[None], (G, K16, K4))
        y = jnp.einsum("gjk,gkc->gjc", wb, y,
                       preferred_element_type=f32) + cvec("bB2", C16)[None]
        y = relu(ln_axis1(y, cvec("gB2", C16)[None], cvec("btB2", C16)[None]))  # [G, K16, C16]

        # ---- layer3 (K16 may not be sublane aligned -> stay batched 3-D) ----
        wa = jnp.broadcast_to(mat("WA3T")[None], (G, C16, 8))
        z = jnp.einsum("gkc,gco->gko", y, wa,
                       preferred_element_type=f32) + rvec("bA3")[None]
        z = relu(ln_last(z, rvec("gA3")[None], rvec("btA3")[None]))             # [G, K16, 8]
        wb = jnp.broadcast_to(mat("WB3")[None], (G, 8, K16))
        z = jnp.einsum("gjk,gkc->gjc", wb, z,
                       preferred_element_type=f32) + cvec("bB3", 8)[None]
        z = relu(ln_axis1(z, cvec("gB3", 8)[None], cvec("btB3", 8)[None]))      # [G, 8, 8]

        # ---- size projection + sigmoid (k-major flatten; tiny -> stays on VPU) ----
        wsz = mat("Wsz2")                                                       # [16, 8]
        s0 = jnp.sum(jnp.sum(z * wsz[0:8, :][None], axis=2), axis=1, keepdims=True)
        s1 = jnp.sum(jnp.sum(z * wsz[8:16, :][None], axis=2), axis=1, keepdims=True)
        sz = jnp.concatenate([s0, s1], axis=1) + rvec("bsz")                    # [G, 2]
        out_ref[...] = jax.nn.sigmoid(sz)[None]                                 # (1, G, 2)

    in_specs = [
        pl.BlockSpec((TB, K, C), lambda i: (i, 0, 0)),       # search, shared across q
        pl.BlockSpec((G, 2 * D, C), lambda i: (i, 0, 0)),    # fused dynamic params (lane = C)
        pl.BlockSpec(mat_slab.shape, lambda i: (0, 0)),      # resident weight slabs
        pl.BlockSpec(rvec_slab.shape, lambda i: (0, 0)),
        pl.BlockSpec(cvec_slab.shape, lambda i: (0, 0)),
    ]
    out = pl.pallas_call(
        kernel,
        grid=(nsteps,),
        in_specs=in_specs,
        out_specs=pl.BlockSpec((1, G, 2), lambda i: (i, 0, 0)),
        out_shape=jax.ShapeDtypeStruct((nsteps, G, 2), jnp.float32),
        compiler_params=pltpu.CompilerParams(
            dimension_semantics=("parallel",),
            vmem_limit_bytes=vmem_limit),
    )(search_b, pdyn, mat_slab, rvec_slab, cvec_slab)
    return out.reshape(nsteps * G, 2)[:BQ]


# ----------------------------- pure-JAX reference -----------------------------

def size_forward_reference(params, target_feat, search_feat, dynamic_dim):
    Q, B, C = target_feat.shape
    D = dynamic_dim
    nump = C * D
    relu = lambda v: jnp.maximum(v, 0.0)

    def ln(x, g, b, eps=1e-5):
        mu = jnp.mean(x, axis=-1, keepdims=True)
        var = jnp.mean(jnp.square(x - mu), axis=-1, keepdims=True)
        return (x - mu) / jnp.sqrt(var + eps) * g + b

    t = jnp.transpose(target_feat, (1, 0, 2)).reshape(B * Q, C)
    s = jnp.repeat(jnp.transpose(search_feat, (1, 0, 2)), Q, axis=0)
    pr = t @ params["Wd"].T + params["bd"]
    p1 = pr[:, :nump].reshape(B * Q, C, D)
    p2 = pr[:, nump:].reshape(B * Q, D, C)
    f = jnp.einsum("bkc,bcd->bkd", s, p1)
    f = relu(ln(f, params["g1"], params["b1"]))
    f = jnp.einsum("bkd,bdc->bkc", f, p2)
    f = relu(ln(f, params["g2"], params["b2"]))
    for i in (1, 2, 3):
        f = relu(ln(f @ params[f"WA{i}"].T + params[f"bA{i}"],
                    params[f"gA{i}"], params[f"btA{i}"]))
        f = jnp.swapaxes(f, 1, 2)
        f = relu(ln(f @ params[f"WB{i}"].T + params[f"bB{i}"],
                    params[f"gB{i}"], params[f"btB{i}"]))
        f = jnp.swapaxes(f, 1, 2)
    flat = f.reshape(B * Q, 64)
    return jax.nn.sigmoid(flat @ params["Wsz"].T + params["bsz"])


# ----------------------------------- main --------------------------------------

if __name__ == "__main__":
    hidden_dim = 32     # C (divisible by 16)
    dynamic_dim = 8     # D
    patch_dim = 64      # K (square: 8x8, divisible by 16)
    Q, B = 2, 2

    key = jax.random.PRNGKey(0)
    k_p, k_t, k_s = jax.random.split(key, 3)
    params = init_params(k_p, hidden_dim, dynamic_dim, patch_dim)

    target_feat = jax.random.normal(k_t, (Q, B, hidden_dim), jnp.float32)          # [Q B C]
    search_feat = jax.random.normal(k_s, (patch_dim, B, hidden_dim), jnp.float32)  # [K B C]

    fwd = jax.jit(functools.partial(size_forward_pallas, dynamic_dim=dynamic_dim))
    out = fwd(params, target_feat, search_feat)
    out = jax.block_until_ready(out)

    ref = size_forward_reference(params, target_feat, search_feat, dynamic_dim)
    assert out.shape == (B * Q, 2), out.shape
    assert jnp.allclose(out, ref, atol=2e-3, rtol=2e-3), (out, ref)

    print("KERNEL_OK")
</pallas_src>

<mosaic_0001>
module attributes {stable_mosaic.version = 11 : i64} {
  func.func @kernel(%arg0: i32, %arg1: memref<2x64x32xf32, #tpu.memory_space<vmem>>, %arg2: memref<4x16x32xf32, #tpu.memory_space<vmem>>, %arg3: memref<96x128xf32, #tpu.memory_space<vmem>>, %arg4: memref<112x128xf32, #tpu.memory_space<vmem>>, %arg5: memref<96x128xf32, #tpu.memory_space<vmem>>, %arg6: memref<1x4x2xf32, #tpu.memory_space<vmem>>) attributes {dimension_semantics = [#tpu.dimension_semantics<parallel>], iteration_bounds = array<i64: 1>, scalar_prefetch = 0 : i64, scratch_operands = 0 : i64, tpu.core_type = #tpu.core_type<tc>, window_params = [{transform_indices = @transform_0, window_bounds = array<i64: 2, 64, 32>}, {transform_indices = @transform_1, window_bounds = array<i64: 4, 16, 32>}, {pipeline_mode = #tpu.pipeline_mode<synchronous>, transform_indices = @transform_2, window_bounds = array<i64: 96, 128>}, {pipeline_mode = #tpu.pipeline_mode<synchronous>, transform_indices = @transform_3, window_bounds = array<i64: 112, 128>}, {pipeline_mode = #tpu.pipeline_mode<synchronous>, transform_indices = @transform_4, window_bounds = array<i64: 96, 128>}, {transform_indices = @transform_5, window_bounds = array<i64: 1, 4, 2>}]} {
    %c0 = arith.constant 0 : index
    %c0_0 = arith.constant 0 : index
    %c0_1 = arith.constant 0 : index
    %0 = vector.load %arg1[%c0, %c0_0, %c0_1] : memref<2x64x32xf32, #tpu.memory_space<vmem>>, vector<2x64x32xf32>
    %1 = vector.shape_cast %0 : vector<2x64x32xf32> to vector<2x1x64x32xf32>
    %2 = vector.shape_cast %1 : vector<2x1x64x32xf32> to vector<2x1x64x32xf32>
    %3 = vector.broadcast %2 : vector<2x1x64x32xf32> to vector<2x2x64x32xf32>
    %4 = vector.shape_cast %3 : vector<2x2x64x32xf32> to vector<4x64x32xf32>
    %c0_2 = arith.constant 0 : index
    %c0_3 = arith.constant 0 : index
    %c0_4 = arith.constant 0 : index
    %5 = vector.load %arg2[%c0_2, %c0_3, %c0_4] : memref<4x16x32xf32, #tpu.memory_space<vmem>>, vector<4x16x32xf32>
    %6 = vector.extract_strided_slice %5 {offsets = [0, 0, 0], sizes = [4, 8, 32], strides = [1, 1, 1]} : vector<4x16x32xf32> to vector<4x8x32xf32>
    %7 = vector.extract_strided_slice %5 {offsets = [0, 8, 0], sizes = [4, 8, 32], strides = [1, 1, 1]} : vector<4x16x32xf32> to vector<4x8x32xf32>
    "tpu.trace_start"() <{level = 10 : i32, message = "gkc,gdc->gkd"}> : () -> ()
    %cst = arith.constant dense<0.000000e+00> : vector<4x64x8xf32>
    %8 = tpu.matmul %4, %6, %cst {dimension_numbers = #tpu.dot_dimension_numbers<[2], [2], [1], [1], [0, 0, 0, 1, 1, 1], [0], [0]>} : vector<4x64x32xf32>, vector<4x8x32xf32>, vector<4x64x8xf32> -> vector<4x64x8xf32>
    "tpu.trace_stop"() : () -> ()
    %c0_5 = arith.constant 0 : index
    %c0_6 = arith.constant 0 : index
    %9 = vector.load %arg4[%c0_5, %c0_6] : memref<112x128xf32, #tpu.memory_space<vmem>>, vector<1x8xf32>
    %10 = vector.shape_cast %9 : vector<1x8xf32> to vector<1x1x8xf32>
    %c8 = arith.constant 8 : index
    %c0_7 = arith.constant 0 : index
    %11 = vector.load %arg4[%c8, %c0_7] : memref<112x128xf32, #tpu.memory_space<vmem>>, vector<1x8xf32>
    %12 = vector.shape_cast %11 : vector<1x8xf32> to vector<1x1x8xf32>
    %cst_8 = arith.constant dense<0.000000e+00> : vector<4x64xf32>
    %13 = vector.multi_reduction <add>, %8, %cst_8 [2] : vector<4x64x8xf32> to vector<4x64xf32>
    %14 = vector.shape_cast %13 : vector<4x64xf32> to vector<4x64x1xf32>
    %cst_9 = arith.constant 8.000000e+00 : f32
    %15 = vector.broadcast %cst_9 : f32 to vector<4x64x1xf32>
    %16 = arith.divf %14, %15 : vector<4x64x1xf32>
    %17 = vector.broadcast %16 : vector<4x64x1xf32> to vector<4x64x8xf32>
    %18 = arith.subf %8, %17 : vector<4x64x8xf32>
    %19 = arith.mulf %18, %18 : vector<4x64x8xf32>
    %cst_10 = arith.constant dense<0.000000e+00> : vector<4x64xf32>
    %20 = vector.multi_reduction <add>, %19, %cst_10 [2] : vector<4x64x8xf32> to vector<4x64xf32>
    %21 = vector.shape_cast %20 : vector<4x64xf32> to vector<4x64x1xf32>
    %cst_11 = arith.constant 8.000000e+00 : f32
    %22 = vector.broadcast %cst_11 : f32 to vector<4x64x1xf32>
    %23 = arith.divf %21, %22 : vector<4x64x1xf32>
    %24 = vector.broadcast %16 : vector<4x64x1xf32> to vector<4x64x8xf32>
    %25 = arith.subf %8, %24 : vector<4x64x8xf32>
    %cst_12 = arith.constant 9.99999974E-6 : f32
    %26 = vector.broadcast %cst_12 : f32 to vector<4x64x1xf32>
    %27 = arith.addf %23, %26 : vector<4x64x1xf32>
    %28 = math.rsqrt %27 : vector<4x64x1xf32>
    %29 = vector.broadcast %28 : vector<4x64x1xf32> to vector<4x64x8xf32>
    %30 = arith.mulf %25, %29 : vector<4x64x8xf32>
    %31 = vector.broadcast %10 : vector<1x1x8xf32> to vector<4x64x8xf32>
    %32 = arith.mulf %30, %31 : vector<4x64x8xf32>
    %33 = vector.broadcast %12 : vector<1x1x8xf32> to vector<4x64x8xf32>
    %34 = arith.addf %32, %33 : vector<4x64x8xf32>
    %cst_13 = arith.constant 0.000000e+00 : f32
    %35 = vector.broadcast %cst_13 : f32 to vector<4x64x8xf32>
    %36 = arith.maximumf %34, %35 : vector<4x64x8xf32>
    "tpu.trace_start"() <{level = 10 : i32, message = "gkd,gdc->gkc"}> : () -> ()
    %cst_14 = arith.constant dense<0.000000e+00> : vector<4x64x32xf32>
    %37 = tpu.matmul %36, %7, %cst_14 {dimension_numbers = #tpu.dot_dimension_numbers<[2], [1], [1], [2], [0, 0, 0, 1, 1, 2], [0], [0]>} : vector<4x64x8xf32>, vector<4x8x32xf32>, vector<4x64x32xf32> -> vector<4x64x32xf32>
    "tpu.trace_stop"() : () -> ()
    %c16 = arith.constant 16 : index
    %c0_15 = arith.constant 0 : index
    %38 = vector.load %arg4[%c16, %c0_15] : memref<112x128xf32, #tpu.memory_space<vmem>>, vector<1x32xf32>
    %39 = vector.shape_cast %38 : vector<1x32xf32> to vector<1x1x32xf32>
    %c24 = arith.constant 24 : index
    %c0_16 = arith.constant 0 : index
    %40 = vector.load %arg4[%c24, %c0_16] : memref<112x128xf32, #tpu.memory_space<vmem>>, vector<1x32xf32>
    %41 = vector.shape_cast %40 : vector<1x32xf32> to vector<1x1x32xf32>
    %cst_17 = arith.constant dense<0.000000e+00> : vector<4x64xf32>
    %42 = vector.multi_reduction <add>, %37, %cst_17 [2] : vector<4x64x32xf32> to vector<4x64xf32>
    %43 = vector.shape_cast %42 : vector<4x64xf32> to vector<4x64x1xf32>
    %cst_18 = arith.constant 3.200000e+01 : f32
    %44 = vector.broadcast %cst_18 : f32 to vector<4x64x1xf32>
    %45 = arith.divf %43, %44 : vector<4x64x1xf32>
    %46 = vector.broadcast %45 : vector<4x64x1xf32> to vector<4x64x32xf32>
    %47 = arith.subf %37, %46 : vector<4x64x32xf32>
    %48 = arith.mulf %47, %47 : vector<4x64x32xf32>
    %cst_19 = arith.constant dense<0.000000e+00> : vector<4x64xf32>
    %49 = vector.multi_reduction <add>, %48, %cst_19 [2] : vector<4x64x32xf32> to vector<4x64xf32>
    %50 = vector.shape_cast %49 : vector<4x64xf32> to vector<4x64x1xf32>
    %cst_20 = arith.constant 3.200000e+01 : f32
    %51 = vector.broadcast %cst_20 : f32 to vector<4x64x1xf32>
    %52 = arith.divf %50, %51 : vector<4x64x1xf32>
    %53 = vector.broadcast %45 : vector<4x64x1xf32> to vector<4x64x32xf32>
    %54 = arith.subf %37, %53 : vector<4x64x32xf32>
    %cst_21 = arith.constant 9.99999974E-6 : f32
    %55 = vector.broadcast %cst_21 : f32 to vector<4x64x1xf32>
    %56 = arith.addf %52, %55 : vector<4x64x1xf32>
    %57 = math.rsqrt %56 : vector<4x64x1xf32>
    %58 = vector.broadcast %57 : vector<4x64x1xf32> to vector<4x64x32xf32>
    %59 = arith.mulf %54, %58 : vector<4x64x32xf32>
    %60 = vector.broadcast %39 : vector<1x1x32xf32> to vector<4x64x32xf32>
    %61 = arith.mulf %59, %60 : vector<4x64x32xf32>
    %62 = vector.broadcast %41 : vector<1x1x32xf32> to vector<4x64x32xf32>
    %63 = arith.addf %61, %62 : vector<4x64x32xf32>
    %cst_22 = arith.constant 0.000000e+00 : f32
    %64 = vector.broadcast %cst_22 : f32 to vector<4x64x32xf32>
    %65 = arith.maximumf %63, %64 : vector<4x64x32xf32>
    %66 = vector.shape_cast %65 : vector<4x64x32xf32> to vector<256x32xf32>
    %c0_23 = arith.constant 0 : index
    %c0_24 = arith.constant 0 : index
    %67 = vector.load %arg3[%c0_23, %c0_24] : memref<96x128xf32, #tpu.memory_space<vmem>>, vector<32x8xf32>
    %cst_25 = arith.constant dense<0.000000e+00> : vector<256x8xf32>
    %68 = tpu.matmul %66, %67, %cst_25 {dimension_numbers = #tpu.dot_dimension_numbers<[1], [0], [0], [1], [0, 0, 1, 1], [], []>} : vector<256x32xf32>, vector<32x8xf32>, vector<256x8xf32> -> vector<256x8xf32>
    %c32 = arith.constant 32 : index
    %c0_26 = arith.constant 0 : index
    %69 = vector.load %arg4[%c32, %c0_26] : memref<112x128xf32, #tpu.memory_space<vmem>>, vector<1x8xf32>
    %70 = vector.broadcast %69 : vector<1x8xf32> to vector<256x8xf32>
    %71 = arith.addf %68, %70 : vector<256x8xf32>
    %c40 = arith.constant 40 : index
    %c0_27 = arith.constant 0 : index
    %72 = vector.load %arg4[%c40, %c0_27] : memref<112x128xf32, #tpu.memory_space<vmem>>, vector<1x8xf32>
    %c48 = arith.constant 48 : index
    %c0_28 = arith.constant 0 : index
    %73 = vector.load %arg4[%c48, %c0_28] : memref<112x128xf32, #tpu.memory_space<vmem>>, vector<1x8xf32>
    %cst_29 = arith.constant dense<0.000000e+00> : vector<256xf32>
    %74 = vector.multi_reduction <add>, %71, %cst_29 [1] : vector<256x8xf32> to vector<256xf32>
    %75 = vector.shape_cast %74 : vector<256xf32> to vector<256x1xf32>
    %cst_30 = arith.constant 8.000000e+00 : f32
    %76 = vector.broadcast %cst_30 : f32 to vector<256x1xf32>
    %77 = arith.divf %75, %76 : vector<256x1xf32>
    %78 = vector.broadcast %77 : vector<256x1xf32> to vector<256x8xf32>
    %79 = arith.subf %71, %78 : vector<256x8xf32>
    %80 = arith.mulf %79, %79 : vector<256x8xf32>
    %cst_31 = arith.constant dense<0.000000e+00> : vector<256xf32>
    %81 = vector.multi_reduction <add>, %80, %cst_31 [1] : vector<256x8xf32> to vector<256xf32>
    %82 = vector.shape_cast %81 : vector<256xf32> to vector<256x1xf32>
    %cst_32 = arith.constant 8.000000e+00 : f32
    %83 = vector.broadcast %cst_32 : f32 to vector<256x1xf32>
    %84 = arith.divf %82, %83 : vector<256x1xf32>
    %85 = vector.broadcast %77 : vector<256x1xf32> to vector<256x8xf32>
    %86 = arith.subf %71, %85 : vector<256x8xf32>
    %cst_33 = arith.constant 9.99999974E-6 : f32
    %87 = vector.broadcast %cst_33 : f32 to vector<256x1xf32>
    %88 = arith.addf %84, %87 : vector<256x1xf32>
    %89 = math.rsqrt %88 : vector<256x1xf32>
    %90 = vector.broadcast %89 : vector<256x1xf32> to vector<256x8xf32>
    %91 = arith.mulf %86, %90 : vector<256x8xf32>
    %92 = vector.broadcast %72 : vector<1x8xf32> to vector<256x8xf32>
    %93 = arith.mulf %91, %92 : vector<256x8xf32>
    %94 = vector.broadcast %73 : vector<1x8xf32> to vector<256x8xf32>
    %95 = arith.addf %93, %94 : vector<256x8xf32>
    %cst_34 = arith.constant 0.000000e+00 : f32
    %96 = vector.broadcast %cst_34 : f32 to vector<256x8xf32>
    %97 = arith.maximumf %95, %96 : vector<256x8xf32>
    %98 = vector.shape_cast %97 : vector<256x8xf32> to vector<4x64x8xf32>
    %c48_35 = arith.constant 48 : index
    %c0_36 = arith.constant 0 : index
    %99 = vector.load %arg3[%c48_35, %c0_36] : memref<96x128xf32, #tpu.memory_space<vmem>>, vector<16x64xf32>
    %100 = vector.shape_cast %99 : vector<16x64xf32> to vector<1x16x64xf32>
    %101 = vector.shape_cast %100 : vector<1x16x64xf32> to vector<1x16x64xf32>
    %102 = vector.broadcast %101 : vector<1x16x64xf32> to vector<4x16x64xf32>
    "tpu.trace_start"() <{level = 10 : i32, message = "gjk,gkc->gjc"}> : () -> ()
    %cst_37 = arith.constant dense<0.000000e+00> : vector<4x16x8xf32>
    %103 = tpu.matmul %102, %98, %cst_37 {dimension_numbers = #tpu.dot_dimension_numbers<[2], [1], [1], [2], [0, 0, 0, 1, 1, 2], [0], [0]>} : vector<4x16x64xf32>, vector<4x64x8xf32>, vector<4x16x8xf32> -> vector<4x16x8xf32>
    "tpu.trace_stop"() : () -> ()
    %c0_38 = arith.constant 0 : index
    %c0_39 = arith.constant 0 : index
    %104 = vector.load %arg5[%c0_38, %c0_39] : memref<96x128xf32, #tpu.memory_space<vmem>>, vector<16x8xf32>
    %105 = vector.shape_cast %104 : vector<16x8xf32> to vector<1x16x8xf32>
    %106 = vector.broadcast %105 : vector<1x16x8xf32> to vector<4x16x8xf32>
    %107 = arith.addf %103, %106 : vector<4x16x8xf32>
    %c16_40 = arith.constant 16 : index
    %c0_41 = arith.constant 0 : index
    %108 = vector.load %arg5[%c16_40, %c0_41] : memref<96x128xf32, #tpu.memory_space<vmem>>, vector<16x8xf32>
    %109 = vector.shape_cast %108 : vector<16x8xf32> to vector<1x16x8xf32>
    %c32_42 = arith.constant 32 : index
    %c0_43 = arith.constant 0 : index
    %110 = vector.load %arg5[%c32_42, %c0_43] : memref<96x128xf32, #tpu.memory_space<vmem>>, vector<16x8xf32>
    %111 = vector.shape_cast %110 : vector<16x8xf32> to vector<1x16x8xf32>
    %cst_44 = arith.constant dense<0.000000e+00> : vector<4x8xf32>
    %112 = vector.multi_reduction <add>, %107, %cst_44 [1] : vector<4x16x8xf32> to vector<4x8xf32>
    %113 = vector.shape_cast %112 : vector<4x8xf32> to vector<4x1x8xf32>
    %cst_45 = arith.constant 1.600000e+01 : f32
    %114 = vector.broadcast %cst_45 : f32 to vector<4x1x8xf32>
    %115 = arith.divf %113, %114 : vector<4x1x8xf32>
    %116 = vector.broadcast %115 : vector<4x1x8xf32> to vector<4x16x8xf32>
    %117 = arith.subf %107, %116 : vector<4x16x8xf32>
    %118 = arith.mulf %117, %117 : vector<4x16x8xf32>
    %cst_46 = arith.constant dense<0.000000e+00> : vector<4x8xf32>
    %119 = vector.multi_reduction <add>, %118, %cst_46 [1] : vector<4x16x8xf32> to vector<4x8xf32>
    %120 = vector.shape_cast %119 : vector<4x8xf32> to vector<4x1x8xf32>
    %cst_47 = arith.constant 1.600000e+01 : f32
    %121 = vector.broadcast %cst_47 : f32 to vector<4x1x8xf32>
    %122 = arith.divf %120, %121 : vector<4x1x8xf32>
    %123 = vector.broadcast %115 : vector<4x1x8xf32> to vector<4x16x8xf32>
    %124 = arith.subf %107, %123 : vector<4x16x8xf32>
    %cst_48 = arith.constant 9.99999974E-6 : f32
    %125 = vector.broadcast %cst_48 : f32 to vector<4x1x8xf32>
    %126 = arith.addf %122, %125 : vector<4x1x8xf32>
    %127 = math.rsqrt %126 : vector<4x1x8xf32>
    %128 = vector.broadcast %127 : vector<4x1x8xf32> to vector<4x16x8xf32>
    %129 = arith.mulf %124, %128 : vector<4x16x8xf32>
    %130 = vector.broadcast %109 : vector<1x16x8xf32> to vector<4x16x8xf32>
    %131 = arith.mulf %129, %130 : vector<4x16x8xf32>
    %132 = vector.broadcast %111 : vector<1x16x8xf32> to vector<4x16x8xf32>
    %133 = arith.addf %131, %132 : vector<4x16x8xf32>
    %cst_49 = arith.constant 0.000000e+00 : f32
    %134 = vector.broadcast %cst_49 : f32 to vector<4x16x8xf32>
    %135 = arith.maximumf %133, %134 : vector<4x16x8xf32>
    %136 = vector.shape_cast %135 : vector<4x16x8xf32> to vector<64x8xf32>
    %c32_50 = arith.constant 32 : index
    %c0_51 = arith.constant 0 : index
    %137 = vector.load %arg3[%c32_50, %c0_51] : memref<96x128xf32, #tpu.memory_space<vmem>>, vector<8x2xf32>
    %cst_52 = arith.constant dense<0.000000e+00> : vector<64x2xf32>
    %138 = tpu.matmul %136, %137, %cst_52 {dimension_numbers = #tpu.dot_dimension_numbers<[1], [0], [0], [1], [0, 0, 1, 1], [], []>} : vector<64x8xf32>, vector<8x2xf32>, vector<64x2xf32> -> vector<64x2xf32>
    %c56 = arith.constant 56 : index
    %c0_53 = arith.constant 0 : index
    %139 = vector.load %arg4[%c56, %c0_53] : memref<112x128xf32, #tpu.memory_space<vmem>>, vector<1x2xf32>
    %140 = vector.broadcast %139 : vector<1x2xf32> to vector<64x2xf32>
    %141 = arith.addf %138, %140 : vector<64x2xf32>
    %c64 = arith.constant 64 : index
    %c0_54 = arith.constant 0 : index
    %142 = vector.load %arg4[%c64, %c0_54] : memref<112x128xf32, #tpu.memory_space<vmem>>, vector<1x2xf32>
    %c72 = arith.constant 72 : index
    %c0_55 = arith.constant 0 : index
    %143 = vector.load %arg4[%c72, %c0_55] : memref<112x128xf32, #tpu.memory_space<vmem>>, vector<1x2xf32>
    %cst_56 = arith.constant dense<0.000000e+00> : vector<64xf32>
    %144 = vector.multi_reduction <add>, %141, %cst_56 [1] : vector<64x2xf32> to vector<64xf32>
    %145 = vector.shape_cast %144 : vector<64xf32> to vector<64x1xf32>
    %cst_57 = arith.constant 2.000000e+00 : f32
    %146 = vector.broadcast %cst_57 : f32 to vector<64x1xf32>
    %147 = arith.divf %145, %146 : vector<64x1xf32>
    %148 = vector.broadcast %147 : vector<64x1xf32> to vector<64x2xf32>
    %149 = arith.subf %141, %148 : vector<64x2xf32>
    %150 = arith.mulf %149, %149 : vector<64x2xf32>
    %cst_58 = arith.constant dense<0.000000e+00> : vector<64xf32>
    %151 = vector.multi_reduction <add>, %150, %cst_58 [1] : vector<64x2xf32> to vector<64xf32>
    %152 = vector.shape_cast %151 : vector<64xf32> to vector<64x1xf32>
    %cst_59 = arith.constant 2.000000e+00 : f32
    %153 = vector.broadcast %cst_59 : f32 to vector<64x1xf32>
    %154 = arith.divf %152, %153 : vector<64x1xf32>
    %155 = vector.broadcast %147 : vector<64x1xf32> to vector<64x2xf32>
    %156 = arith.subf %141, %155 : vector<64x2xf32>
    %cst_60 = arith.constant 9.99999974E-6 : f32
    %157 = vector.broadcast %cst_60 : f32 to vector<64x1xf32>
    %158 = arith.addf %154, %157 : vector<64x1xf32>
    %159 = math.rsqrt %158 : vector<64x1xf32>
    %160 = vector.broadcast %159 : vector<64x1xf32> to vector<64x2xf32>
    %161 = arith.mulf %156, %160 : vector<64x2xf32>
    %162 = vector.broadcast %142 : vector<1x2xf32> to vector<64x2xf32>
    %163 = arith.mulf %161, %162 : vector<64x2xf32>
    %164 = vector.broadcast %143 : vector<1x2xf32> to vector<64x2xf32>
    %165 = arith.addf %163, %164 : vector<64x2xf32>
    %cst_61 = arith.constant 0.000000e+00 : f32
    %166 = vector.broadcast %cst_61 : f32 to vector<64x2xf32>
    %167 = arith.maximumf %165, %166 : vector<64x2xf32>
    %168 = vector.shape_cast %167 : vector<64x2xf32> to vector<4x16x2xf32>
    %c64_62 = arith.constant 64 : index
    %c0_63 = arith.constant 0 : index
    %169 = vector.load %arg3[%c64_62, %c0_63] : memref<96x128xf32, #tpu.memory_space<vmem>>, vector<4x16xf32>
    %170 = vector.shape_cast %169 : vector<4x16xf32> to vector<1x4x16xf32>
    %171 = vector.shape_cast %170 : vector<1x4x16xf32> to vector<1x4x16xf32>
    %172 = vector.broadcast %171 : vector<1x4x16xf32> to vector<4x4x16xf32>
    "tpu.trace_start"() <{level = 10 : i32, message = "gjk,gkc->gjc"}> : () -> ()
    %cst_64 = arith.constant dense<0.000000e+00> : vector<4x4x2xf32>
    %173 = tpu.matmul %172, %168, %cst_64 {dimension_numbers = #tpu.dot_dimension_numbers<[2], [1], [1], [2], [0, 0, 0, 1, 1, 2], [0], [0]>} : vector<4x4x16xf32>, vector<4x16x2xf32>, vector<4x4x2xf32> -> vector<4x4x2xf32>
    "tpu.trace_stop"() : () -> ()
    %c48_65 = arith.constant 48 : index
    %c0_66 = arith.constant 0 : index
    %174 = vector.load %arg5[%c48_65, %c0_66] : memref<96x128xf32, #tpu.memory_space<vmem>>, vector<4x2xf32>
    %175 = vector.shape_cast %174 : vector<4x2xf32> to vector<1x4x2xf32>
    %176 = vector.broadcast %175 : vector<1x4x2xf32> to vector<4x4x2xf32>
    %177 = arith.addf %173, %176 : vector<4x4x2xf32>
    %c56_67 = arith.constant 56 : index
    %c0_68 = arith.constant 0 : index
    %178 = vector.load %arg5[%c56_67, %c0_68] : memref<96x128xf32, #tpu.memory_space<vmem>>, vector<4x2xf32>
    %179 = vector.shape_cast %178 : vector<4x2xf32> to vector<1x4x2xf32>
    %c64_69 = arith.constant 64 : index
    %c0_70 = arith.constant 0 : index
    %180 = vector.load %arg5[%c64_69, %c0_70] : memref<96x128xf32, #tpu.memory_space<vmem>>, vector<4x2xf32>
    %181 = vector.shape_cast %180 : vector<4x2xf32> to vector<1x4x2xf32>
    %cst_71 = arith.constant dense<0.000000e+00> : vector<4x2xf32>
    %182 = vector.multi_reduction <add>, %177, %cst_71 [1] : vector<4x4x2xf32> to vector<4x2xf32>
    %183 = vector.shape_cast %182 : vector<4x2xf32> to vector<4x1x2xf32>
    %cst_72 = arith.constant 4.000000e+00 : f32
    %184 = vector.broadcast %cst_72 : f32 to vector<4x1x2xf32>
    %185 = arith.divf %183, %184 : vector<4x1x2xf32>
    %186 = vector.broadcast %185 : vector<4x1x2xf32> to vector<4x4x2xf32>
    %187 = arith.subf %177, %186 : vector<4x4x2xf32>
    %188 = arith.mulf %187, %187 : vector<4x4x2xf32>
    %cst_73 = arith.constant dense<0.000000e+00> : vector<4x2xf32>
    %189 = vector.multi_reduction <add>, %188, %cst_73 [1] : vector<4x4x2xf32> to vector<4x2xf32>
    %190 = vector.shape_cast %189 : vector<4x2xf32> to vector<4x1x2xf32>
    %cst_74 = arith.constant 4.000000e+00 : f32
    %191 = vector.broadcast %cst_74 : f32 to vector<4x1x2xf32>
    %192 = arith.divf %190, %191 : vector<4x1x2xf32>
    %193 = vector.broadcast %185 : vector<4x1x2xf32> to vector<4x4x2xf32>
    %194 = arith.subf %177, %193 : vector<4x4x2xf32>
    %cst_75 = arith.constant 9.99999974E-6 : f32
    %195 = vector.broadcast %cst_75 : f32 to vector<4x1x2xf32>
    %196 = arith.addf %192, %195 : vector<4x1x2xf32>
    %197 = math.rsqrt %196 : vector<4x1x2xf32>
    %198 = vector.broadcast %197 : vector<4x1x2xf32> to vector<4x4x2xf32>
    %199 = arith.mulf %194, %198 : vector<4x4x2xf32>
    %200 = vector.broadcast %179 : vector<1x4x2xf32> to vector<4x4x2xf32>
    %201 = arith.mulf %199, %200 : vector<4x4x2xf32>
    %202 = vector.broadcast %181 : vector<1x4x2xf32> to vector<4x4x2xf32>
    %203 = arith.addf %201, %202 : vector<4x4x2xf32>
    %cst_76 = arith.constant 0.000000e+00 : f32
    %204 = vector.broadcast %cst_76 : f32 to vector<4x4x2xf32>
    %205 = arith.maximumf %203, %204 : vector<4x4x2xf32>
    %c40_77 = arith.constant 40 : index
    %c0_78 = arith.constant 0 : index
    %206 = vector.load %arg3[%c40_77, %c0_78] : memref<96x128xf32, #tpu.memory_space<vmem>>, vector<2x8xf32>
    %207 = vector.shape_cast %206 : vector<2x8xf32> to vector<1x2x8xf32>
    %208 = vector.shape_cast %207 : vector<1x2x8xf32> to vector<1x2x8xf32>
    %209 = vector.broadcast %208 : vector<1x2x8xf32> to vector<4x2x8xf32>
    "tpu.trace_start"() <{level = 10 : i32, message = "gkc,gco->gko"}> : () -> ()
    %cst_79 = arith.constant dense<0.000000e+00> : vector<4x4x8xf32>
    %210 = tpu.matmul %205, %209, %cst_79 {dimension_numbers = #tpu.dot_dimension_numbers<[2], [1], [1], [2], [0, 0, 0, 1, 1, 2], [0], [0]>} : vector<4x4x2xf32>, vector<4x2x8xf32>, vector<4x4x8xf32> -> vector<4x4x8xf32>
    "tpu.trace_stop"() : () -> ()
    %c80 = arith.constant 80 : index
    %c0_80 = arith.constant 0 : index
    %211 = vector.load %arg4[%c80, %c0_80] : memref<112x128xf32, #tpu.memory_space<vmem>>, vector<1x8xf32>
    %212 = vector.shape_cast %211 : vector<1x8xf32> to vector<1x1x8xf32>
    %213 = vector.broadcast %212 : vector<1x1x8xf32> to vector<4x4x8xf32>
    %214 = arith.addf %210, %213 : vector<4x4x8xf32>
    %c88 = arith.constant 88 : index
    %c0_81 = arith.constant 0 : index
    %215 = vector.load %arg4[%c88, %c0_81] : memref<112x128xf32, #tpu.memory_space<vmem>>, vector<1x8xf32>
    %216 = vector.shape_cast %215 : vector<1x8xf32> to vector<1x1x8xf32>
    %c96 = arith.constant 96 : index
    %c0_82 = arith.constant 0 : index
    %217 = vector.load %arg4[%c96, %c0_82] : memref<112x128xf32, #tpu.memory_space<vmem>>, vector<1x8xf32>
    %218 = vector.shape_cast %217 : vector<1x8xf32> to vector<1x1x8xf32>
    %cst_83 = arith.constant dense<0.000000e+00> : vector<4x4xf32>
    %219 = vector.multi_reduction <add>, %214, %cst_83 [2] : vector<4x4x8xf32> to vector<4x4xf32>
    %220 = vector.shape_cast %219 : vector<4x4xf32> to vector<4x4x1xf32>
    %cst_84 = arith.constant 8.000000e+00 : f32
    %221 = vector.broadcast %cst_84 : f32 to vector<4x4x1xf32>
    %222 = arith.divf %220, %221 : vector<4x4x1xf32>
    %223 = vector.broadcast %222 : vector<4x4x1xf32> to vector<4x4x8xf32>
    %224 = arith.subf %214, %223 : vector<4x4x8xf32>
    %225 = arith.mulf %224, %224 : vector<4x4x8xf32>
    %cst_85 = arith.constant dense<0.000000e+00> : vector<4x4xf32>
    %226 = vector.multi_reduction <add>, %225, %cst_85 [2] : vector<4x4x8xf32> to vector<4x4xf32>
    %227 = vector.shape_cast %226 : vector<4x4xf32> to vector<4x4x1xf32>
    %cst_86 = arith.constant 8.000000e+00 : f32
    %228 = vector.broadcast %cst_86 : f32 to vector<4x4x1xf32>
    %229 = arith.divf %227, %228 : vector<4x4x1xf32>
    %230 = vector.broadcast %222 : vector<4x4x1xf32> to vector<4x4x8xf32>
    %231 = arith.subf %214, %230 : vector<4x4x8xf32>
    %cst_87 = arith.constant 9.99999974E-6 : f32
    %232 = vector.broadcast %cst_87 : f32 to vector<4x4x1xf32>
    %233 = arith.addf %229, %232 : vector<4x4x1xf32>
    %234 = math.rsqrt %233 : vector<4x4x1xf32>
    %235 = vector.broadcast %234 : vector<4x4x1xf32> to vector<4x4x8xf32>
    %236 = arith.mulf %231, %235 : vector<4x4x8xf32>
    %237 = vector.broadcast %216 : vector<1x1x8xf32> to vector<4x4x8xf32>
    %238 = arith.mulf %236, %237 : vector<4x4x8xf32>
    %239 = vector.broadcast %218 : vector<1x1x8xf32> to vector<4x4x8xf32>
    %240 = arith.addf %238, %239 : vector<4x4x8xf32>
    %cst_88 = arith.constant 0.000000e+00 : f32
    %241 = vector.broadcast %cst_88 : f32 to vector<4x4x8xf32>
    %242 = arith.maximumf %240, %241 : vector<4x4x8xf32>
    %c72_89 = arith.constant 72 : index
    %c0_90 = arith.constant 0 : index
    %243 = vector.load %arg3[%c72_89, %c0_90] : memref<96x128xf32, #tpu.memory_space<vmem>>, vector<8x4xf32>
    %244 = vector.shape_cast %243 : vector<8x4xf32> to vector<1x8x4xf32>
    %245 = vector.shape_cast %244 : vector<1x8x4xf32> to vector<1x8x4xf32>
    %246 = vector.broadcast %245 : vector<1x8x4xf32> to vector<4x8x4xf32>
    "tpu.trace_start"() <{level = 10 : i32, message = "gjk,gkc->gjc"}> : () -> ()
    %cst_91 = arith.constant dense<0.000000e+00> : vector<4x8x8xf32>
    %247 = tpu.matmul %246, %242, %cst_91 {dimension_numbers = #tpu.dot_dimension_numbers<[2], [1], [1], [2], [0, 0, 0, 1, 1, 2], [0], [0]>} : vector<4x8x4xf32>, vector<4x4x8xf32>, vector<4x8x8xf32> -> vector<4x8x8xf32>
    "tpu.trace_stop"() : () -> ()
    %c72_92 = arith.constant 72 : index
    %c0_93 = arith.constant 0 : index
    %248 = vector.load %arg5[%c72_92, %c0_93] : memref<96x128xf32, #tpu.memory_space<vmem>>, vector<8x8xf32>
    %249 = vector.shape_cast %248 : vector<8x8xf32> to vector<1x8x8xf32>
    %250 = vector.broadcast %249 : vector<1x8x8xf32> to vector<4x8x8xf32>
    %251 = arith.addf %247, %250 : vector<4x8x8xf32>
    %c80_94 = arith.constant 80 : index
    %c0_95 = arith.constant 0 : index
    %252 = vector.load %arg5[%c80_94, %c0_95] : memref<96x128xf32, #tpu.memory_space<vmem>>, vector<8x8xf32>
    %253 = vector.shape_cast %252 : vector<8x8xf32> to vector<1x8x8xf32>
    %c88_96 = arith.constant 88 : index
    %c0_97 = arith.constant 0 : index
    %254 = vector.load %arg5[%c88_96, %c0_97] : memref<96x128xf32, #tpu.memory_space<vmem>>, vector<8x8xf32>
    %255 = vector.shape_cast %254 : vector<8x8xf32> to vector<1x8x8xf32>
    %cst_98 = arith.constant dense<0.000000e+00> : vector<4x8xf32>
    %256 = vector.multi_reduction <add>, %251, %cst_98 [1] : vector<4x8x8xf32> to vector<4x8xf32>
    %257 = vector.shape_cast %256 : vector<4x8xf32> to vector<4x1x8xf32>
    %cst_99 = arith.constant 8.000000e+00 : f32
    %258 = vector.broadcast %cst_99 : f32 to vector<4x1x8xf32>
    %259 = arith.divf %257, %258 : vector<4x1x8xf32>
    %260 = vector.broadcast %259 : vector<4x1x8xf32> to vector<4x8x8xf32>
    %261 = arith.subf %251, %260 : vector<4x8x8xf32>
    %262 = arith.mulf %261, %261 : vector<4x8x8xf32>
    %cst_100 = arith.constant dense<0.000000e+00> : vector<4x8xf32>
    %263 = vector.multi_reduction <add>, %262, %cst_100 [1] : vector<4x8x8xf32> to vector<4x8xf32>
    %264 = vector.shape_cast %263 : vector<4x8xf32> to vector<4x1x8xf32>
    %cst_101 = arith.constant 8.000000e+00 : f32
    %265 = vector.broadcast %cst_101 : f32 to vector<4x1x8xf32>
    %266 = arith.divf %264, %265 : vector<4x1x8xf32>
    %267 = vector.broadcast %259 : vector<4x1x8xf32> to vector<4x8x8xf32>
    %268 = arith.subf %251, %267 : vector<4x8x8xf32>
    %cst_102 = arith.constant 9.99999974E-6 : f32
    %269 = vector.broadcast %cst_102 : f32 to vector<4x1x8xf32>
    %270 = arith.addf %266, %269 : vector<4x1x8xf32>
    %271 = math.rsqrt %270 : vector<4x1x8xf32>
    %272 = vector.broadcast %271 : vector<4x1x8xf32> to vector<4x8x8xf32>
    %273 = arith.mulf %268, %272 : vector<4x8x8xf32>
    %274 = vector.broadcast %253 : vector<1x8x8xf32> to vector<4x8x8xf32>
    %275 = arith.mulf %273, %274 : vector<4x8x8xf32>
    %276 = vector.broadcast %255 : vector<1x8x8xf32> to vector<4x8x8xf32>
    %277 = arith.addf %275, %276 : vector<4x8x8xf32>
    %cst_103 = arith.constant 0.000000e+00 : f32
    %278 = vector.broadcast %cst_103 : f32 to vector<4x8x8xf32>
    %279 = arith.maximumf %277, %278 : vector<4x8x8xf32>
    %c80_104 = arith.constant 80 : index
    %c0_105 = arith.constant 0 : index
    %280 = vector.load %arg3[%c80_104, %c0_105] : memref<96x128xf32, #tpu.memory_space<vmem>>, vector<16x8xf32>
    %281 = vector.extract_strided_slice %280 {offsets = [0, 0], sizes = [8, 8], strides = [1, 1]} : vector<16x8xf32> to vector<8x8xf32>
    %282 = vector.shape_cast %281 : vector<8x8xf32> to vector<1x8x8xf32>
    %283 = vector.broadcast %282 : vector<1x8x8xf32> to vector<4x8x8xf32>
    %284 = arith.mulf %279, %283 : vector<4x8x8xf32>
    %cst_106 = arith.constant dense<0.000000e+00> : vector<4x8xf32>
    %285 = vector.multi_reduction <add>, %284, %cst_106 [2] : vector<4x8x8xf32> to vector<4x8xf32>
    %cst_107 = arith.constant dense<0.000000e+00> : vector<4xf32>
    %286 = vector.multi_reduction <add>, %285, %cst_107 [1] : vector<4x8xf32> to vector<4xf32>
    %287 = vector.shape_cast %286 : vector<4xf32> to vector<4x1xf32>
    %288 = vector.extract_strided_slice %280 {offsets = [8, 0], sizes = [8, 8], strides = [1, 1]} : vector<16x8xf32> to vector<8x8xf32>
    %289 = vector.shape_cast %288 : vector<8x8xf32> to vector<1x8x8xf32>
    %290 = vector.broadcast %289 : vector<1x8x8xf32> to vector<4x8x8xf32>
    %291 = arith.mulf %279, %290 : vector<4x8x8xf32>
    %cst_108 = arith.constant dense<0.000000e+00> : vector<4x8xf32>
    %292 = vector.multi_reduction <add>, %291, %cst_108 [2] : vector<4x8x8xf32> to vector<4x8xf32>
    %cst_109 = arith.constant dense<0.000000e+00> : vector<4xf32>
    %293 = vector.multi_reduction <add>, %292, %cst_109 [1] : vector<4x8xf32> to vector<4xf32>
    %294 = vector.shape_cast %293 : vector<4xf32> to vector<4x1xf32>
    %295 = tpu.concatenate %287, %294 in 1 : vector<4x1xf32>, vector<4x1xf32> -> vector<4x2xf32>
    %c104 = arith.constant 104 : index
    %c0_110 = arith.constant 0 : index
    %296 = vector.load %arg4[%c104, %c0_110] : memref<112x128xf32, #tpu.memory_space<vmem>>, vector<1x2xf32>
    %297 = vector.broadcast %296 : vector<1x2xf32> to vector<4x2xf32>
    %298 = arith.addf %295, %297 : vector<4x2xf32>
    %299 = arith.negf %298 : vector<4x2xf32>
    %300 = math.exp %299 : vector<4x2xf32>
    %cst_111 = arith.constant 1.000000e+00 : f32
    %301 = vector.broadcast %cst_111 : f32 to vector<4x2xf32>
    %302 = arith.addf %301, %300 : vector<4x2xf32>
    %303 = arith.divf %301, %302 : vector<4x2xf32>
    %304 = vector.shape_cast %303 : vector<4x2xf32> to vector<1x4x2xf32>
    %c0_112 = arith.constant 0 : index
    %c0_113 = arith.constant 0 : index
    %c0_114 = arith.constant 0 : index
    %305 = vector.load %arg6[%c0_112, %c0_113, %c0_114] : memref<1x4x2xf32, #tpu.memory_space<vmem>>, vector<1x4x2xf32>
    tpu.vector_store %arg6[%c0_112, %c0_113, %c0_114], %304 {strides = array<i32>} : memref<1x4x2xf32, #tpu.memory_space<vmem>>, vector<1x4x2xf32>,
    return
  }
  func.func @transform_0(%arg0: i32) -> (i32, i32, i32) {
    %c0_i32 = arith.constant 0 : i32
    %c0_i32_0 = arith.constant 0 : i32
    %c0_i32_1 = arith.constant 0 : i32
    return %arg0, %c0_i32, %c0_i32_0 : i32, i32, i32
  }
  func.func @transform_1(%arg0: i32) -> (i32, i32, i32) {
    %c0_i32 = arith.constant 0 : i32
    %c0_i32_0 = arith.constant 0 : i32
    %c0_i32_1 = arith.constant 0 : i32
    return %arg0, %c0_i32, %c0_i32_0 : i32, i32, i32
  }
  func.func @transform_2(%arg0: i32) -> (i32, i32) {
    %c0_i32 = arith.constant 0 : i32
    %c0_i32_0 = arith.constant 0 : i32
    %c0_i32_1 = arith.constant 0 : i32
    return %c0_i32, %c0_i32_0 : i32, i32
  }
  func.func @transform_3(%arg0: i32) -> (i32, i32) {
    %c0_i32 = arith.constant 0 : i32
    %c0_i32_0 = arith.constant 0 : i32
    %c0_i32_1 = arith.constant 0 : i32
    return %c0_i32, %c0_i32_0 : i32, i32
  }
  func.func @transform_4(%arg0: i32) -> (i32, i32) {
    %c0_i32 = arith.constant 0 : i32
    %c0_i32_0 = arith.constant 0 : i32
    %c0_i32_1 = arith.constant 0 : i32
    return %c0_i32, %c0_i32_0 : i32, i32
  }
  func.func @transform_5(%arg0: i32) -> (i32, i32, i32) {
    %c0_i32 = arith.constant 0 : i32
    %c0_i32_0 = arith.constant 0 : i32
    %c0_i32_1 = arith.constant 0 : i32
    return %arg0, %c0_i32, %c0_i32_0 : i32, i32, i32
  }
}

</mosaic_0001>

<llo_original>
// kernel: size_forward_pallas.1
$region0: #{size_forward_pallas.1}
  #allocation0 [shape = 'u32[]', space=smem, size = 0x4, offset = 0x4, fixed_abs, tag = 'smem constant byte address 0x4 - core index']
  #allocation1 [shape = 'u32[144,128]{1,0:T(1,128)}', space=vmem, size = 0x12000, scoped, tag = 'internal scratch']
  %s0 = inlined_call_operand.vmem [shape: f32[2,64,32], index: 0, kind: input, shape index: {}]
  %s1 = inlined_call_operand.vmem [shape: f32[4,16,32], index: 1, kind: input, shape index: {}]
  %s2 = inlined_call_operand.vmem [shape: f32[96,128], index: 2, kind: input, shape index: {}]
  %s3 = inlined_call_operand.vmem [shape: f32[112,128], index: 3, kind: input, shape index: {}]
  %s4 = inlined_call_operand.vmem [shape: f32[96,128], index: 4, kind: input, shape index: {}]
  %s5 = inlined_call_operand.vmem [shape: f32[1,4,2], index: 5, kind: output, shape index: {}]
  %s6 = sld [smem:[#allocation0]]
  $region30: #{size_forward_pallas.1} parent=0
    _
  %s8 = ssub.s32 1, %s6
  %s9 = scalar_select 0, %s8, %s6
  // Predicated region
  $region2: #{size_forward_pallas.1} parent=0 // pred_check
    _
  $region3: #{size_forward_pallas.1} parent=0 // pred_check_branch
    %11 = sbr.rel (0) target = $region5
  $region4: #{size_forward_pallas.1} parent=0 // pred_region
    _
  $region5: #{size_forward_pallas.1} parent=0 // pred_fallthru
    _
  // Predicated region
  $region6: #{size_forward_pallas.1} parent=0 // pred_check
    _
  $region7: #{size_forward_pallas.1} parent=0 // pred_check_branch
    %13 = sbr.rel (0) target = $region9
  $region8: #{size_forward_pallas.1} parent=0 // pred_region
    _
  $region9: #{size_forward_pallas.1} parent=0 // pred_fallthru
    _
  // Predicated region
  $region10: #{size_forward_pallas.1} parent=0 // pred_check
    _
  $region11: #{size_forward_pallas.1} parent=0 // pred_check_branch
    %15 = sbr.rel (0) target = $region13
  $region12: #{size_forward_pallas.1} parent=0 // pred_region
    _
  $region13: #{size_forward_pallas.1} parent=0 // pred_fallthru
    _
  // Predicated region
  $region14: #{size_forward_pallas.1} parent=0 // pred_check
    _
  $region15: #{size_forward_pallas.1} parent=0 // pred_check_branch
    %17 = sbr.rel (0) target = $region17
  $region16: #{size_forward_pallas.1} parent=0 // pred_region
    _
  $region17: #{size_forward_pallas.1} parent=0 // pred_fallthru
    _
  // Predicated region
  $region18: #{size_forward_pallas.1} parent=0 // pred_check
    _
  $region19: #{size_forward_pallas.1} parent=0 // pred_check_branch
    %19 = sbr.rel (0) target = $region21
  $region20: #{size_forward_pallas.1} parent=0 // pred_region
    _
  $region21: #{size_forward_pallas.1} parent=0 // pred_fallthru
    _
  %v20 = vld [vmem:[%s0] sm:$0xff]
  %v21 = vld [vmem:[%s0 + $0x8] sm:$0xff]
  %v22 = vld [vmem:[%s0 + $0x10] sm:$0xff]
  %v23 = vld [vmem:[%s0 + $0x18] sm:$0xff]
  %v24 = vld [vmem:[%s0 + $0x20] sm:$0xff]
  %v25 = vld [vmem:[%s0 + $0x28] sm:$0xff]
  %v26 = vld [vmem:[%s0 + $0x30] sm:$0xff]
  %v27 = vld [vmem:[%s0 + $0x38] sm:$0xff]
  %v28 = vld [vmem:[%s0 + $0x40] sm:$0xff]
  %v29 = vld [vmem:[%s0 + $0x48] sm:$0xff]
  %v30 = vld [vmem:[%s0 + $0x50] sm:$0xff]
  %v31 = vld [vmem:[%s0 + $0x58] sm:$0xff]
  %v32 = vld [vmem:[%s0 + $0x60] sm:$0xff]
  %v33 = vld [vmem:[%s0 + $0x68] sm:$0xff]
  %v34 = vld [vmem:[%s0 + $0x70] sm:$0xff]
  %v35 = vld [vmem:[%s0 + $0x78] sm:$0xff]
  %v36 = vld [vmem:[%s1] sm:$0xff]
  %v37 = vld [vmem:[%s1 + $0x8] sm:$0xff]
  %v38 = vld [vmem:[%s1 + $0x10] sm:$0xff]
  %v39 = vld [vmem:[%s1 + $0x18] sm:$0xff]
  %v40 = vld [vmem:[%s1 + $0x20] sm:$0xff]
  %v41 = vld [vmem:[%s1 + $0x28] sm:$0xff]
  %v42 = vld [vmem:[%s1 + $0x30] sm:$0xff]
  %v43 = vld [vmem:[%s1 + $0x38] sm:$0xff]
  %vm44 = vcmask 261120
  %v46 = vsel %vm44, %v20, 0
  %v49 = vsel %vm44, %v21, 0
  %v52 = vsel %vm44, %v22, 0
  %v55 = vsel %vm44, %v23, 0
  %v58 = vsel %vm44, %v24, 0
  %v61 = vsel %vm44, %v25, 0
  %v64 = vsel %vm44, %v26, 0
  %v67 = vsel %vm44, %v27, 0
  %v70 = vsel %vm44, %v36, 0
  %72 = vmatprep.subr.mxu0 0.0
  %73 = vmatpush1.xpose.msra.mxu0 %v70
  %74 = vmatprep.subr.mxu0 0.0
  %75 = vmatpush1.xpose.msra.mxu0 0.0
  %76 = vmatprep.subr.mxu0 0.0
  %77 = vmatpush1.xpose.msra.mxu0 0.0
  %78 = vmatprep.subr.mxu0 0.0
  %79 = vmatpush1.xpose.msra.mxu0 0.0
  %80 = vmatprep.subr.mxu0 0.0
  %81 = vmatpush1.xpose.msra.mxu0 0.0
  %82 = vmatprep.subr.mxu0 0.0
  %83 = vmatpush1.xpose.msra.mxu0 0.0
  %84 = vmatprep.subr.mxu0 0.0
  %85 = vmatpush1.xpose.msra.mxu0 0.0
  %86 = vmatprep.subr.mxu0 0.0
  %87 = vmatpush1.xpose.msra.mxu0 0.0
  %88 = vmatprep.subr.mxu0 0.0
  %89 = vmatpush1.xpose.msra.mxu0 0.0
  %90 = vmatprep.subr.mxu0 0.0
  %91 = vmatpush1.xpose.msra.mxu0 0.0
  %92 = vmatprep.subr.mxu0 0.0
  %93 = vmatpush1.xpose.msra.mxu0 0.0
  %94 = vmatprep.subr.mxu0 0.0
  %95 = vmatpush1.xpose.msra.mxu0 0.0
  %96 = vmatprep.subr.mxu0 0.0
  %97 = vmatpush1.xpose.msra.mxu0 0.0
  %98 = vmatprep.subr.mxu0 0.0
  %99 = vmatpush1.xpose.msra.mxu0 0.0
  %100 = vmatprep.subr.mxu0 0.0
  %101 = vmatpush1.xpose.msra.mxu0 0.0
  %102 = vmatprep.subr.mxu0 0.0
  %103 = vmatpush1.xpose.msra.mxu0 0.0
  %104 = vmatprep.subr.mxu0 0.0
  %105 = vmatpush1.xpose.msra.mxu0 0.0
  %106 = vmatprep.subr.mxu0 0.0
  %107 = vmatpush1.xpose.msra.mxu0 0.0
  %108 = vmatprep.subr.mxu0 0.0
  %109 = vmatpush1.xpose.msra.mxu0 0.0
  %110 = vmatprep.subr.mxu0 0.0
  %111 = vmatpush1.xpose.msra.mxu0 0.0
  %112 = vmatprep.subr.mxu0 0.0
  %113 = vmatpush1.xpose.msra.mxu0 0.0
  %114 = vmatprep.subr.mxu0 0.0
  %115 = vmatpush1.xpose.msra.mxu0 0.0
  %116 = vmatprep.subr.mxu0 0.0
  %117 = vmatpush1.xpose.msra.mxu0 0.0
  %118 = vmatprep.subr.mxu0 0.0
  %119 = vmatpush1.xpose.msra.mxu0 0.0
  %120 = vmatprep.subr.mxu0 0.0
  %121 = vmatpush1.xpose.msra.mxu0 0.0
  %122 = vmatprep.subr.mxu0 0.0
  %123 = vmatpush1.xpose.msra.mxu0 0.0
  %124 = vmatprep.subr.mxu0 0.0
  %125 = vmatpush1.xpose.msra.mxu0 0.0
  %126 = vmatprep.subr.mxu0 0.0
  %127 = vmatpush1.xpose.msra.mxu0 0.0
  %128 = vmatprep.subr.mxu0 0.0
  %129 = vmatpush1.xpose.msra.mxu0 0.0
  %130 = vmatprep.subr.mxu0 0.0
  %131 = vmatpush1.xpose.msra.mxu0 0.0
  %132 = vmatprep.subr.mxu0 0.0
  %133 = vmatpush1.xpose.msra.mxu0 0.0
  %134 = vmatprep.subr.mxu0 0.0
  %135 = vmatpush1.xpose.msra.mxu0 0.0
  %136 = vmatprep.mubr.f32.mxu0 0.0
  %137 = vmatmul.mubr.f32.gmra.mrb[0].mxu0 %v46
  %v138 = vpop.f32.mrb[0].mxu0
  %v139 = vadd.f32 0.0, %v138
  %v140 = vpop.f32.mrb[0].mxu0
  %141 = vmatprep.mubr.f32.mxu0 0.0
  %142 = vmatmul.mubr.f32.gmra.mrb[0].mxu0 %v49
  %v143 = vpop.f32.mrb[0].mxu0
  %v144 = vadd.f32 0.0, %v143
  %v145 = vpop.f32.mrb[0].mxu0
  %146 = vmatprep.mubr.f32.mxu0 0.0
  %147 = vmatmul.mubr.f32.gmra.mrb[0].mxu0 %v52
  %v148 = vpop.f32.mrb[0].mxu0
  %v149 = vadd.f32 0.0, %v148
  %v150 = vpop.f32.mrb[0].mxu0
  %151 = vmatprep.mubr.f32.mxu0 0.0
  %152 = vmatmul.mubr.f32.gmra.mrb[0].mxu0 %v55
  %v153 = vpop.f32.mrb[0].mxu0
  %v154 = vadd.f32 0.0, %v153
  %v155 = vpop.f32.mrb[0].mxu0
  %156 = vmatprep.mubr.f32.mxu0 0.0
  %157 = vmatmul.mubr.f32.gmra.mrb[0].mxu0 %v58
  %v158 = vpop.f32.mrb[0].mxu0
  %v159 = vadd.f32 0.0, %v158
  %v160 = vpop.f32.mrb[0].mxu0
  %161 = vmatprep.mubr.f32.mxu0 0.0
  %162 = vmatmul.mubr.f32.gmra.mrb[0].mxu0 %v61
  %v163 = vpop.f32.mrb[0].mxu0
  %v164 = vadd.f32 0.0, %v163
  %v165 = vpop.f32.mrb[0].mxu0
  %166 = vmatprep.mubr.f32.mxu0 0.0
  %167 = vmatmul.mubr.f32.gmra.mrb[0].mxu0 %v64
  %v168 = vpop.f32.mrb[0].mxu0
  %v169 = vadd.f32 0.0, %v168
  %v170 = vpop.f32.mrb[0].mxu0
  %171 = vmatprep.mubr.f32.mxu0 0.0
  %172 = vmatmul.mubr.f32.gmra.mrb[0].mxu0 %v67
  %v173 = vpop.f32.mrb[0].mxu0
  %v174 = vadd.f32 0.0, %v173
  %v175 = vpop.f32.mrb[0].mxu0
  %176 = vdwg.mxu0
  %v178 = vsel %vm44, %v38, 0
  %180 = vmatprep.subr.mxu0 0.0
  %181 = vmatpush1.xpose.msra.mxu0 %v178
  %182 = vmatprep.subr.mxu0 0.0
  %183 = vmatpush1.xpose.msra.mxu0 0.0
  %184 = vmatprep.subr.mxu0 0.0
  %185 = vmatpush1.xpose.msra.mxu0 0.0
  %186 = vmatprep.subr.mxu0 0.0
  %187 = vmatpush1.xpose.msra.mxu0 0.0
  %188 = vmatprep.subr.mxu0 0.0
  %189 = vmatpush1.xpose.msra.mxu0 0.0
  %190 = vmatprep.subr.mxu0 0.0
  %191 = vmatpush1.xpose.msra.mxu0 0.0
  %192 = vmatprep.subr.mxu0 0.0
  %193 = vmatpush1.xpose.msra.mxu0 0.0
  %194 = vmatprep.subr.mxu0 0.0
  %195 = vmatpush1.xpose.msra.mxu0 0.0
  %196 = vmatprep.subr.mxu0 0.0
  %197 = vmatpush1.xpose.msra.mxu0 0.0
  %198 = vmatprep.subr.mxu0 0.0
  %199 = vmatpush1.xpose.msra.mxu0 0.0
  %200 = vmatprep.subr.mxu0 0.0
  %201 = vmatpush1.xpose.msra.mxu0 0.0
  %202 = vmatprep.subr.mxu0 0.0
  %203 = vmatpush1.xpose.msra.mxu0 0.0
  %204 = vmatprep.subr.mxu0 0.0
  %205 = vmatpush1.xpose.msra.mxu0 0.0
  %206 = vmatprep.subr.mxu0 0.0
  %207 = vmatpush1.xpose.msra.mxu0 0.0
  %208 = vmatprep.subr.mxu0 0.0
  %209 = vmatpush1.xpose.msra.mxu0 0.0
  %210 = vmatprep.subr.mxu0 0.0
  %211 = vmatpush1.xpose.msra.mxu0 0.0
  %212 = vmatprep.subr.mxu0 0.0
  %213 = vmatpush1.xpose.msra.mxu0 0.0
  %214 = vmatprep.subr.mxu0 0.0
  %215 = vmatpush1.xpose.msra.mxu0 0.0
  %216 = vmatprep.subr.mxu0 0.0
  %217 = vmatpush1.xpose.msra.mxu0 0.0
  %218 = vmatprep.subr.mxu0 0.0
  %219 = vmatpush1.xpose.msra.mxu0 0.0
  %220 = vmatprep.subr.mxu0 0.0
  %221 = vmatpush1.xpose.msra.mxu0 0.0
  %222 = vmatprep.subr.mxu0 0.0
  %223 = vmatpush1.xpose.msra.mxu0 0.0
  %224 = vmatprep.subr.mxu0 0.0
  %225 = vmatpush1.xpose.msra.mxu0 0.0
  %226 = vmatprep.subr.mxu0 0.0
  %227 = vmatpush1.xpose.msra.mxu0 0.0
  %228 = vmatprep.subr.mxu0 0.0
  %229 = vmatpush1.xpose.msra.mxu0 0.0
  %230 = vmatprep.subr.mxu0 0.0
  %231 = vmatpush1.xpose.msra.mxu0 0.0
  %232 = vmatprep.subr.mxu0 0.0
  %233 = vmatpush1.xpose.msra.mxu0 0.0
  %234 = vmatprep.subr.mxu0 0.0
  %235 = vmatpush1.xpose.msra.mxu0 0.0
  %236 = vmatprep.subr.mxu0 0.0
  %237 = vmatpush1.xpose.msra.mxu0 0.0
  %238 = vmatprep.subr.mxu0 0.0
  %239 = vmatpush1.xpose.msra.mxu0 0.0
  %240 = vmatprep.subr.mxu0 0.0
  %241 = vmatpush1.xpose.msra.mxu0 0.0
  %242 = vmatprep.subr.mxu0 0.0
  %243 = vmatpush1.xpose.msra.mxu0 0.0
  %244 = vmatprep.mubr.f32.mxu0 0.0
  %245 = vmatmul.mubr.f32.gmra.mrb[0].mxu0 %v46
  %v246 = vpop.f32.mrb[0].mxu0
  %v247 = vadd.f32 0.0, %v246
  %v248 = vpop.f32.mrb[0].mxu0
  %249 = vmatprep.mubr.f32.mxu0 0.0
  %250 = vmatmul.mubr.f32.gmra.mrb[0].mxu0 %v49
  %v251 = vpop.f32.mrb[0].mxu0
  %v252 = vadd.f32 0.0, %v251
  %v253 = vpop.f32.mrb[0].mxu0
  %254 = vmatprep.mubr.f32.mxu0 0.0
  %255 = vmatmul.mubr.f32.gmra.mrb[0].mxu0 %v52
  %v256 = vpop.f32.mrb[0].mxu0
  %v257 = vadd.f32 0.0, %v256
  %v258 = vpop.f32.mrb[0].mxu0
  %259 = vmatprep.mubr.f32.mxu0 0.0
  %260 = vmatmul.mubr.f32.gmra.mrb[0].mxu0 %v55
  %v261 = vpop.f32.mrb[0].mxu0
  %v262 = vadd.f32 0.0, %v261
  %v263 = vpop.f32.mrb[0].mxu0
  %264 = vmatprep.mubr.f32.mxu0 0.0
  %265 = vmatmul.mubr.f32.gmra.mrb[0].mxu0 %v58
  %v266 = vpop.f32.mrb[0].mxu0
  %v267 = vadd.f32 0.0, %v266
  %v268 = vpop.f32.mrb[0].mxu0
  %269 = vmatprep.mubr.f32.mxu0 0.0
  %270 = vmatmul.mubr.f32.gmra.mrb[0].mxu0 %v61
  %v271 = vpop.f32.mrb[0].mxu0
  %v272 = vadd.f32 0.0, %v271
  %v273 = vpop.f32.mrb[0].mxu0
  %274 = vmatprep.mubr.f32.mxu0 0.0
  %275 = vmatmul.mubr.f32.gmra.mrb[0].mxu0 %v64
  %v276 = vpop.f32.mrb[0].mxu0
  %v277 = vadd.f32 0.0, %v276
  %v278 = vpop.f32.mrb[0].mxu0
  %279 = vmatprep.mubr.f32.mxu0 0.0
  %280 = vmatmul.mubr.f32.gmra.mrb[0].mxu0 %v67
  %v281 = vpop.f32.mrb[0].mxu0
  %v282 = vadd.f32 0.0, %v281
  %v283 = vpop.f32.mrb[0].mxu0
  %284 = vdwg.mxu0
  %v286 = vsel %vm44, %v28, 0
  %v289 = vsel %vm44, %v29, 0
  %v292 = vsel %vm44, %v30, 0
  %v295 = vsel %vm44, %v31, 0
  %v298 = vsel %vm44, %v32, 0
  %v301 = vsel %vm44, %v33, 0
  %v304 = vsel %vm44, %v34, 0
  %v307 = vsel %vm44, %v35, 0
  %v310 = vsel %vm44, %v40, 0
  %312 = vmatprep.subr.mxu0 0.0
  %313 = vmatpush1.xpose.msra.mxu0 %v310
  %314 = vmatprep.subr.mxu0 0.0
  %315 = vmatpush1.xpose.msra.mxu0 0.0
  %316 = vmatprep.subr.mxu0 0.0
  %317 = vmatpush1.xpose.msra.mxu0 0.0
  %318 = vmatprep.subr.mxu0 0.0
  %319 = vmatpush1.xpose.msra.mxu0 0.0
  %320 = vmatprep.subr.mxu0 0.0
  %321 = vmatpush1.xpose.msra.mxu0 0.0
  %322 = vmatprep.subr.mxu0 0.0
  %323 = vmatpush1.xpose.msra.mxu0 0.0
  %324 = vmatprep.subr.mxu0 0.0
  %325 = vmatpush1.xpose.msra.mxu0 0.0
  %326 = vmatprep.subr.mxu0 0.0
  %327 = vmatpush1.xpose.msra.mxu0 0.0
  %328 = vmatprep.subr.mxu0 0.0
  %329 = vmatpush1.xpose.msra.mxu0 0.0
  %330 = vmatprep.subr.mxu0 0.0
  %331 = vmatpush1.xpose.msra.mxu0 0.0
  %332 = vmatprep.subr.mxu0 0.0
  %333 = vmatpush1.xpose.msra.mxu0 0.0
  %334 = vmatprep.subr.mxu0 0.0
  %335 = vmatpush1.xpose.msra.mxu0 0.0
  %336 = vmatprep.subr.mxu0 0.0
  %337 = vmatpush1.xpose.msra.mxu0 0.0
  %338 = vmatprep.subr.mxu0 0.0
  %339 = vmatpush1.xpose.msra.mxu0 0.0
  %340 = vmatprep.subr.mxu0 0.0
  %341 = vmatpush1.xpose.msra.mxu0 0.0
  %342 = vmatprep.subr.mxu0 0.0
  %343 = vmatpush1.xpose.msra.mxu0 0.0
  %344 = vmatprep.subr.mxu0 0.0
  %345 = vmatpush1.xpose.msra.mxu0 0.0
  %346 = vmatprep.subr.mxu0 0.0
  %347 = vmatpush1.xpose.msra.mxu0 0.0
  %348 = vmatprep.subr.mxu0 0.0
  %349 = vmatpush1.xpose.msra.mxu0 0.0
  %350 = vmatprep.subr.mxu0 0.0
  %351 = vmatpush1.xpose.msra.mxu0 0.0
  %352 = vmatprep.subr.mxu0 0.0
  %353 = vmatpush1.xpose.msra.mxu0 0.0
  %354 = vmatprep.subr.mxu0 0.0
  %355 = vmatpush1.xpose.msra.mxu0 0.0
  %356 = vmatprep.subr.mxu0 0.0
  %357 = vmatpush1.xpose.msra.mxu0 0.0
  %358 = vmatprep.subr.mxu0 0.0
  %359 = vmatpush1.xpose.msra.mxu0 0.0
  %360 = vmatprep.subr.mxu0 0.0
  %361 = vmatpush1.xpose.msra.mxu0 0.0
  %362 = vmatprep.subr.mxu0 0.0
  %363 = vmatpush1.xpose.msra.mxu0 0.0
  %364 = vmatprep.subr.mxu0 0.0
  %365 = vmatpush1.xpose.msra.mxu0 0.0
  %366 = vmatprep.subr.mxu0 0.0
  %367 = vmatpush1.xpose.msra.mxu0 0.0
  %368 = vmatprep.subr.mxu0 0.0
  %369 = vmatpush1.xpose.msra.mxu0 0.0
  %370 = vmatprep.subr.mxu0 0.0
  %371 = vmatpush1.xpose.msra.mxu0 0.0
  %372 = vmatprep.subr.mxu0 0.0
  %373 = vmatpush1.xpose.msra.mxu0 0.0
  %374 = vmatprep.subr.mxu0 0.0
  %375 = vmatpush1.xpose.msra.mxu0 0.0
  %376 = vmatprep.mubr.f32.mxu0 0.0
  %377 = vmatmul.mubr.f32.gmra.mrb[0].mxu0 %v286
  %v378 = vpop.f32.mrb[0].mxu0
  %v379 = vadd.f32 0.0, %v378
  %v380 = vpop.f32.mrb[0].mxu0
  %381 = vmatprep.mubr.f32.mxu0 0.0
  %382 = vmatmul.mubr.f32.gmra.mrb[0].mxu0 %v289
  %v383 = vpop.f32.mrb[0].mxu0
  %v384 = vadd.f32 0.0, %v383
  %v385 = vpop.f32.mrb[0].mxu0
  %386 = vmatprep.mubr.f32.mxu0 0.0
  %387 = vmatmul.mubr.f32.gmra.mrb[0].mxu0 %v292
  %v388 = vpop.f32.mrb[0].mxu0
  %v389 = vadd.f32 0.0, %v388
  %v390 = vpop.f32.mrb[0].mxu0
  %391 = vmatprep.mubr.f32.mxu0 0.0
  %392 = vmatmul.mubr.f32.gmra.mrb[0].mxu0 %v295
  %v393 = vpop.f32.mrb[0].mxu0
  %v394 = vadd.f32 0.0, %v393
  %v395 = vpop.f32.mrb[0].mxu0
  %396 = vmatprep.mubr.f32.mxu0 0.0
  %397 = vmatmul.mubr.f32.gmra.mrb[0].mxu0 %v298
  %v398 = vpop.f32.mrb[0].mxu0
  %v399 = vadd.f32 0.0, %v398
  %v400 = vpop.f32.mrb[0].mxu0
  %401 = vmatprep.mubr.f32.mxu0 0.0
  %402 = vmatmul.mubr.f32.gmra.mrb[0].mxu0 %v301
  %v403 = vpop.f32.mrb[0].mxu0
  %v404 = vadd.f32 0.0, %v403
  %v405 = vpop.f32.mrb[0].mxu0
  %406 = vmatprep.mubr.f32.mxu0 0.0
  %407 = vmatmul.mubr.f32.gmra.mrb[0].mxu0 %v304
  %v408 = vpop.f32.mrb[0].mxu0
  %v409 = vadd.f32 0.0, %v408
  %v410 = vpop.f32.mrb[0].mxu0
  %411 = vmatprep.mubr.f32.mxu0 0.0
  %412 = vmatmul.mubr.f32.gmra.mrb[0].mxu0 %v307
  %v413 = vpop.f32.mrb[0].mxu0
  %v414 = vadd.f32 0.0, %v413
  %v415 = vpop.f32.mrb[0].mxu0
  %416 = vdwg.mxu0
  %v418 = vsel %vm44, %v42, 0
  %420 = vmatprep.subr.mxu0 0.0
  %421 = vmatpush1.xpose.msra.mxu0 %v418
  %422 = vmatprep.subr.mxu0 0.0
  %423 = vmatpush1.xpose.msra.mxu0 0.0
  %424 = vmatprep.subr.mxu0 0.0
  %425 = vmatpush1.xpose.msra.mxu0 0.0
  %426 = vmatprep.subr.mxu0 0.0
  %427 = vmatpush1.xpose.msra.mxu0 0.0
  %428 = vmatprep.subr.mxu0 0.0
  %429 = vmatpush1.xpose.msra.mxu0 0.0
  %430 = vmatprep.subr.mxu0 0.0
  %431 = vmatpush1.xpose.msra.mxu0 0.0
  %432 = vmatprep.subr.mxu0 0.0
  %433 = vmatpush1.xpose.msra.mxu0 0.0
  %434 = vmatprep.subr.mxu0 0.0
  %435 = vmatpush1.xpose.msra.mxu0 0.0
  %436 = vmatprep.subr.mxu0 0.0
  %437 = vmatpush1.xpose.msra.mxu0 0.0
  %438 = vmatprep.subr.mxu0 0.0
  %439 = vmatpush1.xpose.msra.mxu0 0.0
  %440 = vmatprep.subr.mxu0 0.0
  %441 = vmatpush1.xpose.msra.mxu0 0.0
  %442 = vmatprep.subr.mxu0 0.0
  %443 = vmatpush1.xpose.msra.mxu0 0.0
  %444 = vmatprep.subr.mxu0 0.0
  %445 = vmatpush1.xpose.msra.mxu0 0.0
  %446 = vmatprep.subr.mxu0 0.0
  %447 = vmatpush1.xpose.msra.mxu0 0.0
  %448 = vmatprep.subr.mxu0 0.0
  %449 = vmatpush1.xpose.msra.mxu0 0.0
  %450 = vmatprep.subr.mxu0 0.0
  %451 = vmatpush1.xpose.msra.mxu0 0.0
  %452 = vmatprep.subr.mxu0 0.0
  %453 = vmatpush1.xpose.msra.mxu0 0.0
  %454 = vmatprep.subr.mxu0 0.0
  %455 = vmatpush1.xpose.msra.mxu0 0.0
  %456 = vmatprep.subr.mxu0 0.0
  %457 = vmatpush1.xpose.msra.mxu0 0.0
  %458 = vmatprep.subr.mxu0 0.0
  %459 = vmatpush1.xpose.msra.mxu0 0.0
  %460 = vmatprep.subr.mxu0 0.0
  %461 = vmatpush1.xpose.msra.mxu0 0.0
  %462 = vmatprep.subr.mxu0 0.0
  %463 = vmatpush1.xpose.msra.mxu0 0.0
  %464 = vmatprep.subr.mxu0 0.0
  %465 = vmatpush1.xpose.msra.mxu0 0.0
  %466 = vmatprep.subr.mxu0 0.0
  %467 = vmatpush1.xpose.msra.mxu0 0.0
  %468 = vmatprep.subr.mxu0 0.0
  %469 = vmatpush1.xpose.msra.mxu0 0.0
  %470 = vmatprep.subr.mxu0 0.0
  %471 = vmatpush1.xpose.msra.mxu0 0.0
  %472 = vmatprep.subr.mxu0 0.0
  %473 = vmatpush1.xpose.msra.mxu0 0.0
  %474 = vmatprep.subr.mxu0 0.0
  %475 = vmatpush1.xpose.msra.mxu0 0.0
  %476 = vmatprep.subr.mxu0 0.0
  %477 = vmatpush1.xpose.msra.mxu0 0.0
  %478 = vmatprep.subr.mxu0 0.0
  %479 = vmatpush1.xpose.msra.mxu0 0.0
  %480 = vmatprep.subr.mxu0 0.0
  %481 = vmatpush1.xpose.msra.mxu0 0.0
  %482 = vmatprep.subr.mxu0 0.0
  %483 = vmatpush1.xpose.msra.mxu0 0.0
  %484 = vmatprep.mubr.f32.mxu0 0.0
  %485 = vmatmul.mubr.f32.gmra.mrb[0].mxu0 %v286
  %v486 = vpop.f32.mrb[0].mxu0
  %v487 = vadd.f32 0.0, %v486
  %v488 = vpop.f32.mrb[0].mxu0
  %489 = vmatprep.mubr.f32.mxu0 0.0
  %490 = vmatmul.mubr.f32.gmra.mrb[0].mxu0 %v289
  %v491 = vpop.f32.mrb[0].mxu0
  %v492 = vadd.f32 0.0, %v491
  %v493 = vpop.f32.mrb[0].mxu0
  %494 = vmatprep.mubr.f32.mxu0 0.0
  %495 = vmatmul.mubr.f32.gmra.mrb[0].mxu0 %v292
  %v496 = vpop.f32.mrb[0].mxu0
  %v497 = vadd.f32 0.0, %v496
  %v498 = vpop.f32.mrb[0].mxu0
  %499 = vmatprep.mubr.f32.mxu0 0.0
  %500 = vmatmul.mubr.f32.gmra.mrb[0].mxu0 %v295
  %v501 = vpop.f32.mrb[0].mxu0
  %v502 = vadd.f32 0.0, %v501
  %v503 = vpop.f32.mrb[0].mxu0
  %504 = vmatprep.mubr.f32.mxu0 0.0
  %505 = vmatmul.mubr.f32.gmra.mrb[0].mxu0 %v298
  %v506 = vpop.f32.mrb[0].mxu0
  %v507 = vadd.f32 0.0, %v506
  %v508 = vpop.f32.mrb[0].mxu0
  %509 = vmatprep.mubr.f32.mxu0 0.0
  %510 = vmatmul.mubr.f32.gmra.mrb[0].mxu0 %v301
  %v511 = vpop.f32.mrb[0].mxu0
  %v512 = vadd.f32 0.0, %v511
  %v513 = vpop.f32.mrb[0].mxu0
  %514 = vmatprep.mubr.f32.mxu0 0.0
  %515 = vmatmul.mubr.f32.gmra.mrb[0].mxu0 %v304
  %v516 = vpop.f32.mrb[0].mxu0
  %v517 = vadd.f32 0.0, %v516
  %v518 = vpop.f32.mrb[0].mxu0
  %519 = vmatprep.mubr.f32.mxu0 0.0
  %520 = vmatmul.mubr.f32.gmra.mrb[0].mxu0 %v307
  %v521 = vpop.f32.mrb[0].mxu0
  %v522 = vadd.f32 0.0, %v521
  %v523 = vpop.f32.mrb[0].mxu0
  %524 = vdwg.mxu0
  %v525 = vld [vmem:[%s3] sm:$0x1]
  %v526 = vld [vmem:[%s3 + $0x8] sm:$0x1]
  %vm527 = vcmask 64512
  %v528 = vsel %vm527, %v139, 0.0
  %529 = vadd.xlane.f32.xlu0 %v528
  %v530 = vpop.xlane.xlu0 %529
  %v531 = vsel %vm527, %v144, 0.0
  %532 = vadd.xlane.f32.xlu0 %v531
  %v533 = vpop.xlane.xlu0 %532
  %v534 = vsel %vm527, %v149, 0.0
  %535 = vadd.xlane.f32.xlu0 %v534
  %v536 = vpop.xlane.xlu0 %535
  %v537 = vsel %vm527, %v154, 0.0
  %538 = vadd.xlane.f32.xlu0 %v537
  %v539 = vpop.xlane.xlu0 %538
  %v540 = vsel %vm527, %v159, 0.0
  %541 = vadd.xlane.f32.xlu0 %v540
  %v542 = vpop.xlane.xlu0 %541
  %v543 = vsel %vm527, %v164, 0.0
  %544 = vadd.xlane.f32.xlu0 %v543
  %v545 = vpop.xlane.xlu0 %544
  %v546 = vsel %vm527, %v169, 0.0
  %547 = vadd.xlane.f32.xlu0 %v546
  %v548 = vpop.xlane.xlu0 %547
  %v549 = vsel %vm527, %v174, 0.0
  %550 = vadd.xlane.f32.xlu0 %v549
  %v551 = vpop.xlane.xlu0 %550
  %v552 = vsel %vm527, %v247, 0.0
  %553 = vadd.xlane.f32.xlu0 %v552
  %v554 = vpop.xlane.xlu0 %553
  %v555 = vsel %vm527, %v252, 0.0
  %556 = vadd.xlane.f32.xlu0 %v555
  %v557 = vpop.xlane.xlu0 %556
  %v558 = vsel %vm527, %v257, 0.0
  %559 = vadd.xlane.f32.xlu0 %v558
  %v560 = vpop.xlane.xlu0 %559
  %v561 = vsel %vm527, %v262, 0.0
  %562 = vadd.xlane.f32.xlu0 %v561
  %v563 = vpop.xlane.xlu0 %562
  %v564 = vsel %vm527, %v267, 0.0
  %565 = vadd.xlane.f32.xlu0 %v564
  %v566 = vpop.xlane.xlu0 %565
  %v567 = vsel %vm527, %v272, 0.0
  %568 = vadd.xlane.f32.xlu0 %v567
  %v569 = vpop.xlane.xlu0 %568
  %v570 = vsel %vm527, %v277, 0.0
  %571 = vadd.xlane.f32.xlu0 %v570
  %v572 = vpop.xlane.xlu0 %571
  %v573 = vsel %vm527, %v282, 0.0
  %574 = vadd.xlane.f32.xlu0 %v573
  %v575 = vpop.xlane.xlu0 %574
  %v576 = vsel %vm527, %v379, 0.0
  %577 = vadd.xlane.f32.xlu0 %v576
  %v578 = vpop.xlane.xlu0 %577
  %v579 = vsel %vm527, %v384, 0.0
  %580 = vadd.xlane.f32.xlu0 %v579
  %v581 = vpop.xlane.xlu0 %580
  %v582 = vsel %vm527, %v389, 0.0
  %583 = vadd.xlane.f32.xlu0 %v582
  %v584 = vpop.xlane.xlu0 %583
  %v585 = vsel %vm527, %v394, 0.0
  %586 = vadd.xlane.f32.xlu0 %v585
  %v587 = vpop.xlane.xlu0 %586
  %v588 = vsel %vm527, %v399, 0.0
  %589 = vadd.xlane.f32.xlu0 %v588
  %v590 = vpop.xlane.xlu0 %589
  %v591 = vsel %vm527, %v404, 0.0
  %592 = vadd.xlane.f32.xlu0 %v591
  %v593 = vpop.xlane.xlu0 %592
  %v594 = vsel %vm527, %v409, 0.0
  %595 = vadd.xlane.f32.xlu0 %v594
  %v596 = vpop.xlane.xlu0 %595
  %v597 = vsel %vm527, %v414, 0.0
  %598 = vadd.xlane.f32.xlu0 %v597
  %v599 = vpop.xlane.xlu0 %598
  %v600 = vsel %vm527, %v487, 0.0
  %601 = vadd.xlane.f32.xlu0 %v600
  %v602 = vpop.xlane.xlu0 %601
  %v603 = vsel %vm527, %v492, 0.0
  %604 = vadd.xlane.f32.xlu0 %v603
  %v605 = vpop.xlane.xlu0 %604
  %v606 = vsel %vm527, %v497, 0.0
  %607 = vadd.xlane.f32.xlu0 %v606
  %v608 = vpop.xlane.xlu0 %607
  %v609 = vsel %vm527, %v502, 0.0
  %610 = vadd.xlane.f32.xlu0 %v609
  %v611 = vpop.xlane.xlu0 %610
  %v612 = vsel %vm527, %v507, 0.0
  %613 = vadd.xlane.f32.xlu0 %v612
  %v614 = vpop.xlane.xlu0 %613
  %v615 = vsel %vm527, %v512, 0.0
  %616 = vadd.xlane.f32.xlu0 %v615
  %v617 = vpop.xlane.xlu0 %616
  %v618 = vsel %vm527, %v517, 0.0
  %619 = vadd.xlane.f32.xlu0 %v618
  %v620 = vpop.xlane.xlu0 %619
  %v621 = vsel %vm527, %v522, 0.0
  %622 = vadd.xlane.f32.xlu0 %v621
  %v623 = vpop.xlane.xlu0 %622
  %v624 = vrcp.pop 8.0
  %v625 = vmul.f32 %v530, %v624
  %v626 = vmul.f32 %v533, %v624
  %v627 = vmul.f32 %v536, %v624
  %v628 = vmul.f32 %v539, %v624
  %v629 = vmul.f32 %v542, %v624
  %v630 = vmul.f32 %v545, %v624
  %v631 = vmul.f32 %v548, %v624
  %v632 = vmul.f32 %v551, %v624
  %v633 = vmul.f32 %v554, %v624
  %v634 = vmul.f32 %v557, %v624
  %v635 = vmul.f32 %v560, %v624
  %v636 = vmul.f32 %v563, %v624
  %v637 = vmul.f32 %v566, %v624
  %v638 = vmul.f32 %v569, %v624
  %v639 = vmul.f32 %v572, %v624
  %v640 = vmul.f32 %v575, %v624
  %v641 = vmul.f32 %v578, %v624
  %v642 = vmul.f32 %v581, %v624
  %v643 = vmul.f32 %v584, %v624
  %v644 = vmul.f32 %v587, %v624
  %v645 = vmul.f32 %v590, %v624
  %v646 = vmul.f32 %v593, %v624
  %v647 = vmul.f32 %v596, %v624
  %v648 = vmul.f32 %v599, %v624
  %v649 = vmul.f32 %v602, %v624
  %v650 = vmul.f32 %v605, %v624
  %v651 = vmul.f32 %v608, %v624
  %v652 = vmul.f32 %v611, %v624
  %v653 = vmul.f32 %v614, %v624
  %v654 = vmul.f32 %v617, %v624
  %v655 = vmul.f32 %v620, %v624
  %v656 = vmul.f32 %v623, %v624
  %v657 = vsub.f32 %v139, %v625
  %v658 = vsub.f32 %v144, %v626
  %v659 = vsub.f32 %v149, %v627
  %v660 = vsub.f32 %v154, %v628
  %v661 = vsub.f32 %v159, %v629
  %v662 = vsub.f32 %v164, %v630
  %v663 = vsub.f32 %v169, %v631
  %v664 = vsub.f32 %v174, %v632
  %v665 = vsub.f32 %v247, %v633
  %v666 = vsub.f32 %v252, %v634
  %v667 = vsub.f32 %v257, %v635
  %v668 = vsub.f32 %v262, %v636
  %v669 = vsub.f32 %v267, %v637
  %v670 = vsub.f32 %v272, %v638
  %v671 = vsub.f32 %v277, %v639
  %v672 = vsub.f32 %v282, %v640
  %v673 = vsub.f32 %v379, %v641
  %v674 = vsub.f32 %v384, %v642
  %v675 = vsub.f32 %v389, %v643
  %v676 = vsub.f32 %v394, %v644
  %v677 = vsub.f32 %v399, %v645
  %v678 = vsub.f32 %v404, %v646
  %v679 = vsub.f32 %v409, %v647
  %v680 = vsub.f32 %v414, %v648
  %v681 = vsub.f32 %v487, %v649
  %v682 = vsub.f32 %v492, %v650
  %v683 = vsub.f32 %v497, %v651
  %v684 = vsub.f32 %v502, %v652
  %v685 = vsub.f32 %v507, %v653
  %v686 = vsub.f32 %v512, %v654
  %v687 = vsub.f32 %v517, %v655
  %v688 = vsub.f32 %v522, %v656
  %v689 = vmul.f32 %v657, %v657
  %v690 = vmul.f32 %v658, %v658
  %v691 = vmul.f32 %v659, %v659
  %v692 = vmul.f32 %v660, %v660
  %v693 = vmul.f32 %v661, %v661
  %v694 = vmul.f32 %v662, %v662
  %v695 = vmul.f32 %v663, %v663
  %v696 = vmul.f32 %v664, %v664
  %v697 = vmul.f32 %v665, %v665
  %v698 = vmul.f32 %v666, %v666
  %v699 = vmul.f32 %v667, %v667
  %v700 = vmul.f32 %v668, %v668
  %v701 = vmul.f32 %v669, %v669
  %v702 = vmul.f32 %v670, %v670
  %v703 = vmul.f32 %v671, %v671
  %v704 = vmul.f32 %v672, %v672
  %v705 = vmul.f32 %v673, %v673
  %v706 = vmul.f32 %v674, %v674
  %v707 = vmul.f32 %v675, %v675
  %v708 = vmul.f32 %v676, %v676
  %v709 = vmul.f32 %v677, %v677
  %v710 = vmul.f32 %v678, %v678
  %v711 = vmul.f32 %v679, %v679
  %v712 = vmul.f32 %v680, %v680
  %v713 = vmul.f32 %v681, %v681
  %v714 = vmul.f32 %v682, %v682
  %v715 = vmul.f32 %v683, %v683
  %v716 = vmul.f32 %v684, %v684
  %v717 = vmul.f32 %v685, %v685
  %v718 = vmul.f32 %v686, %v686
  %v719 = vmul.f32 %v687, %v687
  %v720 = vmul.f32 %v688, %v688
  %v721 = vsel %vm527, %v689, 0.0
  %722 = vadd.xlane.f32.xlu0 %v721
  %v723 = vpop.xlane.xlu0 %722
  %v724 = vsel %vm527, %v690, 0.0
  %725 = vadd.xlane.f32.xlu0 %v724
  %v726 = vpop.xlane.xlu0 %725
  %v727 = vsel %vm527, %v691, 0.0
  %728 = vadd.xlane.f32.xlu0 %v727
  %v729 = vpop.xlane.xlu0 %728
  %v730 = vsel %vm527, %v692, 0.0
  %731 = vadd.xlane.f32.xlu0 %v730
  %v732 = vpop.xlane.xlu0 %731
  %v733 = vsel %vm527, %v693, 0.0
  %734 = vadd.xlane.f32.xlu0 %v733
  %v735 = vpop.xlane.xlu0 %734
  %v736 = vsel %vm527, %v694, 0.0
  %737 = vadd.xlane.f32.xlu0 %v736
  %v738 = vpop.xlane.xlu0 %737
  %v739 = vsel %vm527, %v695, 0.0
  %740 = vadd.xlane.f32.xlu0 %v739
  %v741 = vpop.xlane.xlu0 %740
  %v742 = vsel %vm527, %v696, 0.0
  %743 = vadd.xlane.f32.xlu0 %v742
  %v744 = vpop.xlane.xlu0 %743
  %v745 = vsel %vm527, %v697, 0.0
  %746 = vadd.xlane.f32.xlu0 %v745
  %v747 = vpop.xlane.xlu0 %746
  %v748 = vsel %vm527, %v698, 0.0
  %749 = vadd.xlane.f32.xlu0 %v748
  %v750 = vpop.xlane.xlu0 %749
  %v751 = vsel %vm527, %v699, 0.0
  %752 = vadd.xlane.f32.xlu0 %v751
  %v753 = vpop.xlane.xlu0 %752
  %v754 = vsel %vm527, %v700, 0.0
  %755 = vadd.xlane.f32.xlu0 %v754
  %v756 = vpop.xlane.xlu0 %755
  %v757 = vsel %vm527, %v701, 0.0
  %758 = vadd.xlane.f32.xlu0 %v757
  %v759 = vpop.xlane.xlu0 %758
  %v760 = vsel %vm527, %v702, 0.0
  %761 = vadd.xlane.f32.xlu0 %v760
  %v762 = vpop.xlane.xlu0 %761
  %v763 = vsel %vm527, %v703, 0.0
  %764 = vadd.xlane.f32.xlu0 %v763
  %v765 = vpop.xlane.xlu0 %764
  %v766 = vsel %vm527, %v704, 0.0
  %767 = vadd.xlane.f32.xlu0 %v766
  %v768 = vpop.xlane.xlu0 %767
  %v769 = vsel %vm527, %v705, 0.0
  %770 = vadd.xlane.f32.xlu0 %v769
  %v771 = vpop.xlane.xlu0 %770
  %v772 = vsel %vm527, %v706, 0.0
  %773 = vadd.xlane.f32.xlu0 %v772
  %v774 = vpop.xlane.xlu0 %773
  %v775 = vsel %vm527, %v707, 0.0
  %776 = vadd.xlane.f32.xlu0 %v775
  %v777 = vpop.xlane.xlu0 %776
  %v778 = vsel %vm527, %v708, 0.0
  %779 = vadd.xlane.f32.xlu0 %v778
  %v780 = vpop.xlane.xlu0 %779
  %v781 = vsel %vm527, %v709, 0.0
  %782 = vadd.xlane.f32.xlu0 %v781
  %v783 = vpop.xlane.xlu0 %782
  %v784 = vsel %vm527, %v710, 0.0
  %785 = vadd.xlane.f32.xlu0 %v784
  %v786 = vpop.xlane.xlu0 %785
  %v787 = vsel %vm527, %v711, 0.0
  %788 = vadd.xlane.f32.xlu0 %v787
  %v789 = vpop.xlane.xlu0 %788
  %v790 = vsel %vm527, %v712, 0.0
  %791 = vadd.xlane.f32.xlu0 %v790
  %v792 = vpop.xlane.xlu0 %791
  %v793 = vsel %vm527, %v713, 0.0
  %794 = vadd.xlane.f32.xlu0 %v793
  %v795 = vpop.xlane.xlu0 %794
  %v796 = vsel %vm527, %v714, 0.0
  %797 = vadd.xlane.f32.xlu0 %v796
  %v798 = vpop.xlane.xlu0 %797
  %v799 = vsel %vm527, %v715, 0.0
  %800 = vadd.xlane.f32.xlu0 %v799
  %v801 = vpop.xlane.xlu0 %800
  %v802 = vsel %vm527, %v716, 0.0
  %803 = vadd.xlane.f32.xlu0 %v802
  %v804 = vpop.xlane.xlu0 %803
  %v805 = vsel %vm527, %v717, 0.0
  %806 = vadd.xlane.f32.xlu0 %v805
  %v807 = vpop.xlane.xlu0 %806
  %v808 = vsel %vm527, %v718, 0.0
  %809 = vadd.xlane.f32.xlu0 %v808
  %v810 = vpop.xlane.xlu0 %809
  %v811 = vsel %vm527, %v719, 0.0
  %812 = vadd.xlane.f32.xlu0 %v811
  %v813 = vpop.xlane.xlu0 %812
  %v814 = vsel %vm527, %v720, 0.0
  %815 = vadd.xlane.f32.xlu0 %v814
  %v816 = vpop.xlane.xlu0 %815
  %v817 = vmul.f32 %v723, %v624
  %v818 = vmul.f32 %v726, %v624
  %v819 = vmul.f32 %v729, %v624
  %v820 = vmul.f32 %v732, %v624
  %v821 = vmul.f32 %v735, %v624
  %v822 = vmul.f32 %v738, %v624
  %v823 = vmul.f32 %v741, %v624
  %v824 = vmul.f32 %v744, %v624
  %v825 = vmul.f32 %v747, %v624
  %v826 = vmul.f32 %v750, %v624
  %v827 = vmul.f32 %v753, %v624
  %v828 = vmul.f32 %v756, %v624
  %v829 = vmul.f32 %v759, %v624
  %v830 = vmul.f32 %v762, %v624
  %v831 = vmul.f32 %v765, %v624
  %v832 = vmul.f32 %v768, %v624
  %v833 = vmul.f32 %v771, %v624
  %v834 = vmul.f32 %v774, %v624
  %v835 = vmul.f32 %v777, %v624
  %v836 = vmul.f32 %v780, %v624
  %v837 = vmul.f32 %v783, %v624
  %v838 = vmul.f32 %v786, %v624
  %v839 = vmul.f32 %v789, %v624
  %v840 = vmul.f32 %v792, %v624
  %v841 = vmul.f32 %v795, %v624
  %v842 = vmul.f32 %v798, %v624
  %v843 = vmul.f32 %v801, %v624
  %v844 = vmul.f32 %v804, %v624
  %v845 = vmul.f32 %v807, %v624
  %v846 = vmul.f32 %v810, %v624
  %v847 = vmul.f32 %v813, %v624
  %v848 = vmul.f32 %v816, %v624
  %v849 = vadd.f32 %v817, 1e-05
  %v850 = vadd.f32 %v818, 1e-05
  %v851 = vadd.f32 %v819, 1e-05
  %v852 = vadd.f32 %v820, 1e-05
  %v853 = vadd.f32 %v821, 1e-05
  %v854 = vadd.f32 %v822, 1e-05
  %v855 = vadd.f32 %v823, 1e-05
  %v856 = vadd.f32 %v824, 1e-05
  %v857 = vadd.f32 %v825, 1e-05
  %v858 = vadd.f32 %v826, 1e-05
  %v859 = vadd.f32 %v827, 1e-05
  %v860 = vadd.f32 %v828, 1e-05
  %v861 = vadd.f32 %v829, 1e-05
  %v862 = vadd.f32 %v830, 1e-05
  %v863 = vadd.f32 %v831, 1e-05
  %v864 = vadd.f32 %v832, 1e-05
  %v865 = vadd.f32 %v833, 1e-05
  %v866 = vadd.f32 %v834, 1e-05
  %v867 = vadd.f32 %v835, 1e-05
  %v868 = vadd.f32 %v836, 1e-05
  %v869 = vadd.f32 %v837, 1e-05
  %v870 = vadd.f32 %v838, 1e-05
  %v871 = vadd.f32 %v839, 1e-05
  %v872 = vadd.f32 %v840, 1e-05
  %v873 = vadd.f32 %v841, 1e-05
  %v874 = vadd.f32 %v842, 1e-05
  %v875 = vadd.f32 %v843, 1e-05
  %v876 = vadd.f32 %v844, 1e-05
  %v877 = vadd.f32 %v845, 1e-05
  %v878 = vadd.f32 %v846, 1e-05
  %v879 = vadd.f32 %v847, 1e-05
  %v880 = vadd.f32 %v848, 1e-05
  %v881 = vrsqrt.pop %v849
  %v882 = vrsqrt.pop %v850
  %v883 = vrsqrt.pop %v851
  %v884 = vrsqrt.pop %v852
  %v885 = vrsqrt.pop %v853
  %v886 = vrsqrt.pop %v854
  %v887 = vrsqrt.pop %v855
  %v888 = vrsqrt.pop %v856
  %v889 = vrsqrt.pop %v857
  %v890 = vrsqrt.pop %v858
  %v891 = vrsqrt.pop %v859
  %v892 = vrsqrt.pop %v860
  %v893 = vrsqrt.pop %v861
  %v894 = vrsqrt.pop %v862
  %v895 = vrsqrt.pop %v863
  %v896 = vrsqrt.pop %v864
  %v897 = vrsqrt.pop %v865
  %v898 = vrsqrt.pop %v866
  %v899 = vrsqrt.pop %v867
  %v900 = vrsqrt.pop %v868
  %v901 = vrsqrt.pop %v869
  %v902 = vrsqrt.pop %v870
  %v903 = vrsqrt.pop %v871
  %v904 = vrsqrt.pop %v872
  %v905 = vrsqrt.pop %v873
  %v906 = vrsqrt.pop %v874
  %v907 = vrsqrt.pop %v875
  %v908 = vrsqrt.pop %v876
  %v909 = vrsqrt.pop %v877
  %v910 = vrsqrt.pop %v878
  %v911 = vrsqrt.pop %v879
  %v912 = vrsqrt.pop %v880
  %v913 = vmul.f32 %v657, %v881
  %v914 = vmul.f32 %v658, %v882
  %v915 = vmul.f32 %v659, %v883
  %v916 = vmul.f32 %v660, %v884
  %v917 = vmul.f32 %v661, %v885
  %v918 = vmul.f32 %v662, %v886
  %v919 = vmul.f32 %v663, %v887
  %v920 = vmul.f32 %v664, %v888
  %v921 = vmul.f32 %v665, %v889
  %v922 = vmul.f32 %v666, %v890
  %v923 = vmul.f32 %v667, %v891
  %v924 = vmul.f32 %v668, %v892
  %v925 = vmul.f32 %v669, %v893
  %v926 = vmul.f32 %v670, %v894
  %v927 = vmul.f32 %v671, %v895
  %v928 = vmul.f32 %v672, %v896
  %v929 = vmul.f32 %v673, %v897
  %v930 = vmul.f32 %v674, %v898
  %v931 = vmul.f32 %v675, %v899
  %v932 = vmul.f32 %v676, %v900
  %v933 = vmul.f32 %v677, %v901
  %v934 = vmul.f32 %v678, %v902
  %v935 = vmul.f32 %v679, %v903
  %v936 = vmul.f32 %v680, %v904
  %v937 = vmul.f32 %v681, %v905
  %v938 = vmul.f32 %v682, %v906
  %v939 = vmul.f32 %v683, %v907
  %v940 = vmul.f32 %v684, %v908
  %v941 = vmul.f32 %v685, %v909
  %v942 = vmul.f32 %v686, %v910
  %v943 = vmul.f32 %v687, %v911
  %v944 = vmul.f32 %v688, %v912
  %v945 = vlaneseq
  %v946 = vshrl.u32 %v945, 7
  %v947 = vsub.s32 0, %v946
  %v948 = vrot.slane %v525, %v947
  %v949 = vmul.f32 %v913, %v948
  %v950 = vmul.f32 %v914, %v948
  %v951 = vmul.f32 %v915, %v948
  %v952 = vmul.f32 %v916, %v948
  %v953 = vmul.f32 %v917, %v948
  %v954 = vmul.f32 %v918, %v948
  %v955 = vmul.f32 %v919, %v948
  %v956 = vmul.f32 %v920, %v948
  %v957 = vmul.f32 %v921, %v948
  %v958 = vmul.f32 %v922, %v948
  %v959 = vmul.f32 %v923, %v948
  %v960 = vmul.f32 %v924, %v948
  %v961 = vmul.f32 %v925, %v948
  %v962 = vmul.f32 %v926, %v948
  %v963 = vmul.f32 %v927, %v948
  %v964 = vmul.f32 %v928, %v948
  %v965 = vmul.f32 %v929, %v948
  %v966 = vmul.f32 %v930, %v948
  %v967 = vmul.f32 %v931, %v948
  %v968 = vmul.f32 %v932, %v948
  %v969 = vmul.f32 %v933, %v948
  %v970 = vmul.f32 %v934, %v948
  %v971 = vmul.f32 %v935, %v948
  %v972 = vmul.f32 %v936, %v948
  %v973 = vmul.f32 %v937, %v948
  %v974 = vmul.f32 %v938, %v948
  %v975 = vmul.f32 %v939, %v948
  %v976 = vmul.f32 %v940, %v948
  %v977 = vmul.f32 %v941, %v948
  %v978 = vmul.f32 %v942, %v948
  %v979 = vmul.f32 %v943, %v948
  %v980 = vmul.f32 %v944, %v948
  %v981 = vlaneseq
  %v982 = vshrl.u32 %v981, 7
  %v983 = vsub.s32 0, %v982
  %v984 = vrot.slane %v526, %v983
  %v985 = vadd.f32 %v949, %v984
  %v986 = vadd.f32 %v950, %v984
  %v987 = vadd.f32 %v951, %v984
  %v988 = vadd.f32 %v952, %v984
  %v989 = vadd.f32 %v953, %v984
  %v990 = vadd.f32 %v954, %v984
  %v991 = vadd.f32 %v955, %v984
  %v992 = vadd.f32 %v956, %v984
  %v993 = vadd.f32 %v957, %v984
  %v994 = vadd.f32 %v958, %v984
  %v995 = vadd.f32 %v959, %v984
  %v996 = vadd.f32 %v960, %v984
  %v997 = vadd.f32 %v961, %v984
  %v998 = vadd.f32 %v962, %v984
  %v999 = vadd.f32 %v963, %v984
  %v1000 = vadd.f32 %v964, %v984
  %v1001 = vadd.f32 %v965, %v984
  %v1002 = vadd.f32 %v966, %v984
  %v1003 = vadd.f32 %v967, %v984
  %v1004 = vadd.f32 %v968, %v984
  %v1005 = vadd.f32 %v969, %v984
  %v1006 = vadd.f32 %v970, %v984
  %v1007 = vadd.f32 %v971, %v984
  %v1008 = vadd.f32 %v972, %v984
  %v1009 = vadd.f32 %v973, %v984
  %v1010 = vadd.f32 %v974, %v984
  %v1011 = vadd.f32 %v975, %v984
  %v1012 = vadd.f32 %v976, %v984
  %v1013 = vadd.f32 %v977, %v984
  %v1014 = vadd.f32 %v978, %v984
  %v1015 = vadd.f32 %v979, %v984
  %v1016 = vadd.f32 %v980, %v984
  %v1017 = vmax.f32 %v985, 0.0
  %v1018 = vmax.f32 %v986, 0.0
  %v1019 = vmax.f32 %v987, 0.0
  %v1020 = vmax.f32 %v988, 0.0
  %v1021 = vmax.f32 %v989, 0.0
  %v1022 = vmax.f32 %v990, 0.0
  %v1023 = vmax.f32 %v991, 0.0
  %v1024 = vmax.f32 %v992, 0.0
  %v1025 = vmax.f32 %v993, 0.0
  %v1026 = vmax.f32 %v994, 0.0
  %v1027 = vmax.f32 %v995, 0.0
  %v1028 = vmax.f32 %v996, 0.0
  %v1029 = vmax.f32 %v997, 0.0
  %v1030 = vmax.f32 %v998, 0.0
  %v1031 = vmax.f32 %v999, 0.0
  %v1032 = vmax.f32 %v1000, 0.0
  %v1033 = vmax.f32 %v1001, 0.0
  %v1034 = vmax.f32 %v1002, 0.0
  %v1035 = vmax.f32 %v1003, 0.0
  %v1036 = vmax.f32 %v1004, 0.0
  %v1037 = vmax.f32 %v1005, 0.0
  %v1038 = vmax.f32 %v1006, 0.0
  %v1039 = vmax.f32 %v1007, 0.0
  %v1040 = vmax.f32 %v1008, 0.0
  %v1041 = vmax.f32 %v1009, 0.0
  %v1042 = vmax.f32 %v1010, 0.0
  %v1043 = vmax.f32 %v1011, 0.0
  %v1044 = vmax.f32 %v1012, 0.0
  %v1045 = vmax.f32 %v1013, 0.0
  %v1046 = vmax.f32 %v1014, 0.0
  %v1047 = vmax.f32 %v1015, 0.0
  %v1048 = vmax.f32 %v1016, 0.0
  %v1050 = vsel %vm527, %v1017, 0
  %v1053 = vsel %vm527, %v1018, 0
  %v1056 = vsel %vm527, %v1019, 0
  %v1059 = vsel %vm527, %v1020, 0
  %v1062 = vsel %vm527, %v1021, 0
  %v1065 = vsel %vm527, %v1022, 0
  %v1068 = vsel %vm527, %v1023, 0
  %v1071 = vsel %vm527, %v1024, 0
  %1073 = vmatprep.subr.mxu0 0.0
  %1074 = vmatpush1.msra.mxu0 %v37
  %1075 = vmatprep.subr.mxu0 0.0
  %1076 = vmatpush1.msra.mxu0 0.0
  %1077 = vmatprep.subr.mxu0 0.0
  %1078 = vmatpush1.msra.mxu0 0.0
  %1079 = vmatprep.subr.mxu0 0.0
  %1080 = vmatpush1.msra.mxu0 0.0
  %1081 = vmatprep.subr.mxu0 0.0
  %1082 = vmatpush1.msra.mxu0 0.0
  %1083 = vmatprep.subr.mxu0 0.0
  %1084 = vmatpush1.msra.mxu0 0.0
  %1085 = vmatprep.subr.mxu0 0.0
  %1086 = vmatpush1.msra.mxu0 0.0
  %1087 = vmatprep.subr.mxu0 0.0
  %1088 = vmatpush1.msra.mxu0 0.0
  %1089 = vmatprep.subr.mxu0 0.0
  %1090 = vmatpush1.msra.mxu0 0.0
  %1091 = vmatprep.subr.mxu0 0.0
  %1092 = vmatpush1.msra.mxu0 0.0
  %1093 = vmatprep.subr.mxu0 0.0
  %1094 = vmatpush1.msra.mxu0 0.0
  %1095 = vmatprep.subr.mxu0 0.0
  %1096 = vmatpush1.msra.mxu0 0.0
  %1097 = vmatprep.subr.mxu0 0.0
  %1098 = vmatpush1.msra.mxu0 0.0
  %1099 = vmatprep.subr.mxu0 0.0
  %1100 = vmatpush1.msra.mxu0 0.0
  %1101 = vmatprep.subr.mxu0 0.0
  %1102 = vmatpush1.msra.mxu0 0.0
  %1103 = vmatprep.subr.mxu0 0.0
  %1104 = vmatpush1.msra.mxu0 0.0
  %1105 = vmatprep.subr.mxu0 0.0
  %1106 = vmatpush1.msra.mxu0 0.0
  %1107 = vmatprep.subr.mxu0 0.0
  %1108 = vmatpush1.msra.mxu0 0.0
  %1109 = vmatprep.subr.mxu0 0.0
  %1110 = vmatpush1.msra.mxu0 0.0
  %1111 = vmatprep.subr.mxu0 0.0
  %1112 = vmatpush1.msra.mxu0 0.0
  %1113 = vmatprep.subr.mxu0 0.0
  %1114 = vmatpush1.msra.mxu0 0.0
  %1115 = vmatprep.subr.mxu0 0.0
  %1116 = vmatpush1.msra.mxu0 0.0
  %1117 = vmatprep.subr.mxu0 0.0
  %1118 = vmatpush1.msra.mxu0 0.0
  %1119 = vmatprep.subr.mxu0 0.0
  %1120 = vmatpush1.msra.mxu0 0.0
  %1121 = vmatprep.subr.mxu0 0.0
  %1122 = vmatpush1.msra.mxu0 0.0
  %1123 = vmatprep.subr.mxu0 0.0
  %1124 = vmatpush1.msra.mxu0 0.0
  %1125 = vmatprep.subr.mxu0 0.0
  %1126 = vmatpush1.msra.mxu0 0.0
  %1127 = vmatprep.subr.mxu0 0.0
  %1128 = vmatpush1.msra.mxu0 0.0
  %1129 = vmatprep.subr.mxu0 0.0
  %1130 = vmatpush1.msra.mxu0 0.0
  %1131 = vmatprep.subr.mxu0 0.0
  %1132 = vmatpush1.msra.mxu0 0.0
  %1133 = vmatprep.subr.mxu0 0.0
  %1134 = vmatpush1.msra.mxu0 0.0
  %1135 = vmatprep.subr.mxu0 0.0
  %1136 = vmatpush1.msra.mxu0 0.0
  %1137 = vmatprep.mubr.f32.mxu0 0.0
  %1138 = vmatmul.mubr.f32.gmra.mrb[0].mxu0 %v1050
  %v1139 = vpop.f32.mrb[0].mxu0
  %v1140 = vadd.f32 0.0, %v1139
  %v1141 = vpop.f32.mrb[0].mxu0
  %1142 = vmatprep.mubr.f32.mxu0 0.0
  %1143 = vmatmul.mubr.f32.gmra.mrb[0].mxu0 %v1053
  %v1144 = vpop.f32.mrb[0].mxu0
  %v1145 = vadd.f32 0.0, %v1144
  %v1146 = vpop.f32.mrb[0].mxu0
  %1147 = vmatprep.mubr.f32.mxu0 0.0
  %1148 = vmatmul.mubr.f32.gmra.mrb[0].mxu0 %v1056
  %v1149 = vpop.f32.mrb[0].mxu0
  %v1150 = vadd.f32 0.0, %v1149
  %v1151 = vpop.f32.mrb[0].mxu0
  %1152 = vmatprep.mubr.f32.mxu0 0.0
  %1153 = vmatmul.mubr.f32.gmra.mrb[0].mxu0 %v1059
  %v1154 = vpop.f32.mrb[0].mxu0
  %v1155 = vadd.f32 0.0, %v1154
  %v1156 = vpop.f32.mrb[0].mxu0
  %1157 = vmatprep.mubr.f32.mxu0 0.0
  %1158 = vmatmul.mubr.f32.gmra.mrb[0].mxu0 %v1062
  %v1159 = vpop.f32.mrb[0].mxu0
  %v1160 = vadd.f32 0.0, %v1159
  %v1161 = vpop.f32.mrb[0].mxu0
  %1162 = vmatprep.mubr.f32.mxu0 0.0
  %1163 = vmatmul.mubr.f32.gmra.mrb[0].mxu0 %v1065
  %v1164 = vpop.f32.mrb[0].mxu0
  %v1165 = vadd.f32 0.0, %v1164
  %v1166 = vpop.f32.mrb[0].mxu0
  %1167 = vmatprep.mubr.f32.mxu0 0.0
  %1168 = vmatmul.mubr.f32.gmra.mrb[0].mxu0 %v1068
  %v1169 = vpop.f32.mrb[0].mxu0
  %v1170 = vadd.f32 0.0, %v1169
  %v1171 = vpop.f32.mrb[0].mxu0
  %1172 = vmatprep.mubr.f32.mxu0 0.0
  %1173 = vmatmul.mubr.f32.gmra.mrb[0].mxu0 %v1071
  %v1174 = vpop.f32.mrb[0].mxu0
  %v1175 = vadd.f32 0.0, %v1174
  %v1176 = vpop.f32.mrb[0].mxu0
  %1177 = vdwg.mxu0
  %v1179 = vsel %vm527, %v1025, 0
  %v1182 = vsel %vm527, %v1026, 0
  %v1185 = vsel %vm527, %v1027, 0
  %v1188 = vsel %vm527, %v1028, 0
  %v1191 = vsel %vm527, %v1029, 0
  %v1194 = vsel %vm527, %v1030, 0
  %v1197 = vsel %vm527, %v1031, 0
  %v1200 = vsel %vm527, %v1032, 0
  %1202 = vmatprep.subr.mxu0 0.0
  %1203 = vmatpush1.msra.mxu0 %v39
  %1204 = vmatprep.subr.mxu0 0.0
  %1205 = vmatpush1.msra.mxu0 0.0
  %1206 = vmatprep.subr.mxu0 0.0
  %1207 = vmatpush1.msra.mxu0 0.0
  %1208 = vmatprep.subr.mxu0 0.0
  %1209 = vmatpush1.msra.mxu0 0.0
  %1210 = vmatprep.subr.mxu0 0.0
  %1211 = vmatpush1.msra.mxu0 0.0
  %1212 = vmatprep.subr.mxu0 0.0
  %1213 = vmatpush1.msra.mxu0 0.0
  %1214 = vmatprep.subr.mxu0 0.0
  %1215 = vmatpush1.msra.mxu0 0.0
  %1216 = vmatprep.subr.mxu0 0.0
  %1217 = vmatpush1.msra.mxu0 0.0
  %1218 = vmatprep.subr.mxu0 0.0
  %1219 = vmatpush1.msra.mxu0 0.0
  %1220 = vmatprep.subr.mxu0 0.0
  %1221 = vmatpush1.msra.mxu0 0.0
  %1222 = vmatprep.subr.mxu0 0.0
  %1223 = vmatpush1.msra.mxu0 0.0
  %1224 = vmatprep.subr.mxu0 0.0
  %1225 = vmatpush1.msra.mxu0 0.0
  %1226 = vmatprep.subr.mxu0 0.0
  %1227 = vmatpush1.msra.mxu0 0.0
  %1228 = vmatprep.subr.mxu0 0.0
  %1229 = vmatpush1.msra.mxu0 0.0
  %1230 = vmatprep.subr.mxu0 0.0
  %1231 = vmatpush1.msra.mxu0 0.0
  %1232 = vmatprep.subr.mxu0 0.0
  %1233 = vmatpush1.msra.mxu0 0.0
  %1234 = vmatprep.subr.mxu0 0.0
  %1235 = vmatpush1.msra.mxu0 0.0
  %1236 = vmatprep.subr.mxu0 0.0
  %1237 = vmatpush1.msra.mxu0 0.0
  %1238 = vmatprep.subr.mxu0 0.0
  %1239 = vmatpush1.msra.mxu0 0.0
  %1240 = vmatprep.subr.mxu0 0.0
  %1241 = vmatpush1.msra.mxu0 0.0
  %1242 = vmatprep.subr.mxu0 0.0
  %1243 = vmatpush1.msra.mxu0 0.0
  %1244 = vmatprep.subr.mxu0 0.0
  %1245 = vmatpush1.msra.mxu0 0.0
  %1246 = vmatprep.subr.mxu0 0.0
  %1247 = vmatpush1.msra.mxu0 0.0
  %1248 = vmatprep.subr.mxu0 0.0
  %1249 = vmatpush1.msra.mxu0 0.0
  %1250 = vmatprep.subr.mxu0 0.0
  %1251 = vmatpush1.msra.mxu0 0.0
  %1252 = vmatprep.subr.mxu0 0.0
  %1253 = vmatpush1.msra.mxu0 0.0
  %1254 = vmatprep.subr.mxu0 0.0
  %1255 = vmatpush1.msra.mxu0 0.0
  %1256 = vmatprep.subr.mxu0 0.0
  %1257 = vmatpush1.msra.mxu0 0.0
  %1258 = vmatprep.subr.mxu0 0.0
  %1259 = vmatpush1.msra.mxu0 0.0
  %1260 = vmatprep.subr.mxu0 0.0
  %1261 = vmatpush1.msra.mxu0 0.0
  %1262 = vmatprep.subr.mxu0 0.0
  %1263 = vmatpush1.msra.mxu0 0.0
  %1264 = vmatprep.subr.mxu0 0.0
  %1265 = vmatpush1.msra.mxu0 0.0
  %1266 = vmatprep.mubr.f32.mxu0 0.0
  %1267 = vmatmul.mubr.f32.gmra.mrb[0].mxu0 %v1179
  %v1268 = vpop.f32.mrb[0].mxu0
  %v1269 = vadd.f32 0.0, %v1268
  %v1270 = vpop.f32.mrb[0].mxu0
  %1271 = vmatprep.mubr.f32.mxu0 0.0
  %1272 = vmatmul.mubr.f32.gmra.mrb[0].mxu0 %v1182
  %v1273 = vpop.f32.mrb[0].mxu0
  %v1274 = vadd.f32 0.0, %v1273
  %v1275 = vpop.f32.mrb[0].mxu0
  %1276 = vmatprep.mubr.f32.mxu0 0.0
  %1277 = vmatmul.mubr.f32.gmra.mrb[0].mxu0 %v1185
  %v1278 = vpop.f32.mrb[0].mxu0
  %v1279 = vadd.f32 0.0, %v1278
  %v1280 = vpop.f32.mrb[0].mxu0
  %1281 = vmatprep.mubr.f32.mxu0 0.0
  %1282 = vmatmul.mubr.f32.gmra.mrb[0].mxu0 %v1188
  %v1283 = vpop.f32.mrb[0].mxu0
  %v1284 = vadd.f32 0.0, %v1283
  %v1285 = vpop.f32.mrb[0].mxu0
  %1286 = vmatprep.mubr.f32.mxu0 0.0
  %1287 = vmatmul.mubr.f32.gmra.mrb[0].mxu0 %v1191
  %v1288 = vpop.f32.mrb[0].mxu0
  %v1289 = vadd.f32 0.0, %v1288
  %v1290 = vpop.f32.mrb[0].mxu0
  %1291 = vmatprep.mubr.f32.mxu0 0.0
  %1292 = vmatmul.mubr.f32.gmra.mrb[0].mxu0 %v1194
  %v1293 = vpop.f32.mrb[0].mxu0
  %v1294 = vadd.f32 0.0, %v1293
  %v1295 = vpop.f32.mrb[0].mxu0
  %1296 = vmatprep.mubr.f32.mxu0 0.0
  %1297 = vmatmul.mubr.f32.gmra.mrb[0].mxu0 %v1197
  %v1298 = vpop.f32.mrb[0].mxu0
  %v1299 = vadd.f32 0.0, %v1298
  %v1300 = vpop.f32.mrb[0].mxu0
  %1301 = vmatprep.mubr.f32.mxu0 0.0
  %1302 = vmatmul.mubr.f32.gmra.mrb[0].mxu0 %v1200
  %v1303 = vpop.f32.mrb[0].mxu0
  %v1304 = vadd.f32 0.0, %v1303
  %v1305 = vpop.f32.mrb[0].mxu0
  %1306 = vdwg.mxu0
  %v1308 = vsel %vm527, %v1033, 0
  %v1311 = vsel %vm527, %v1034, 0
  %v1314 = vsel %vm527, %v1035, 0
  %v1317 = vsel %vm527, %v1036, 0
  %v1320 = vsel %vm527, %v1037, 0
  %v1323 = vsel %vm527, %v1038, 0
  %v1326 = vsel %vm527, %v1039, 0
  %v1329 = vsel %vm527, %v1040, 0
  %1331 = vmatprep.subr.mxu0 0.0
  %1332 = vmatpush1.msra.mxu0 %v41
  %1333 = vmatprep.subr.mxu0 0.0
  %1334 = vmatpush1.msra.mxu0 0.0
  %1335 = vmatprep.subr.mxu0 0.0
  %1336 = vmatpush1.msra.mxu0 0.0
  %1337 = vmatprep.subr.mxu0 0.0
  %1338 = vmatpush1.msra.mxu0 0.0
  %1339 = vmatprep.subr.mxu0 0.0
  %1340 = vmatpush1.msra.mxu0 0.0
  %1341 = vmatprep.subr.mxu0 0.0
  %1342 = vmatpush1.msra.mxu0 0.0
  %1343 = vmatprep.subr.mxu0 0.0
  %1344 = vmatpush1.msra.mxu0 0.0
  %1345 = vmatprep.subr.mxu0 0.0
  %1346 = vmatpush1.msra.mxu0 0.0
  %1347 = vmatprep.subr.mxu0 0.0
  %1348 = vmatpush1.msra.mxu0 0.0
  %1349 = vmatprep.subr.mxu0 0.0
  %1350 = vmatpush1.msra.mxu0 0.0
  %1351 = vmatprep.subr.mxu0 0.0
  %1352 = vmatpush1.msra.mxu0 0.0
  %1353 = vmatprep.subr.mxu0 0.0
  %1354 = vmatpush1.msra.mxu0 0.0
  %1355 = vmatprep.subr.mxu0 0.0
  %1356 = vmatpush1.msra.mxu0 0.0
  %1357 = vmatprep.subr.mxu0 0.0
  %1358 = vmatpush1.msra.mxu0 0.0
  %1359 = vmatprep.subr.mxu0 0.0
  %1360 = vmatpush1.msra.mxu0 0.0
  %1361 = vmatprep.subr.mxu0 0.0
  %1362 = vmatpush1.msra.mxu0 0.0
  %1363 = vmatprep.subr.mxu0 0.0
  %1364 = vmatpush1.msra.mxu0 0.0
  %1365 = vmatprep.subr.mxu0 0.0
  %1366 = vmatpush1.msra.mxu0 0.0
  %1367 = vmatprep.subr.mxu0 0.0
  %1368 = vmatpush1.msra.mxu0 0.0
  %1369 = vmatprep.subr.mxu0 0.0
  %1370 = vmatpush1.msra.mxu0 0.0
  %1371 = vmatprep.subr.mxu0 0.0
  %1372 = vmatpush1.msra.mxu0 0.0
  %1373 = vmatprep.subr.mxu0 0.0
  %1374 = vmatpush1.msra.mxu0 0.0
  %1375 = vmatprep.subr.mxu0 0.0
  %1376 = vmatpush1.msra.mxu0 0.0
  %1377 = vmatprep.subr.mxu0 0.0
  %1378 = vmatpush1.msra.mxu0 0.0
  %1379 = vmatprep.subr.mxu0 0.0
  %1380 = vmatpush1.msra.mxu0 0.0
  %1381 = vmatprep.subr.mxu0 0.0
  %1382 = vmatpush1.msra.mxu0 0.0
  %1383 = vmatprep.subr.mxu0 0.0
  %1384 = vmatpush1.msra.mxu0 0.0
  %1385 = vmatprep.subr.mxu0 0.0
  %1386 = vmatpush1.msra.mxu0 0.0
  %1387 = vmatprep.subr.mxu0 0.0
  %1388 = vmatpush1.msra.mxu0 0.0
  %1389 = vmatprep.subr.mxu0 0.0
  %1390 = vmatpush1.msra.mxu0 0.0
  %1391 = vmatprep.subr.mxu0 0.0
  %1392 = vmatpush1.msra.mxu0 0.0
  %1393 = vmatprep.subr.mxu0 0.0
  %1394 = vmatpush1.msra.mxu0 0.0
  %1395 = vmatprep.mubr.f32.mxu0 0.0
  %1396 = vmatmul.mubr.f32.gmra.mrb[0].mxu0 %v1308
  %v1397 = vpop.f32.mrb[0].mxu0
  %v1398 = vadd.f32 0.0, %v1397
  %v1399 = vpop.f32.mrb[0].mxu0
  %1400 = vmatprep.mubr.f32.mxu0 0.0
  %1401 = vmatmul.mubr.f32.gmra.mrb[0].mxu0 %v1311
  %v1402 = vpop.f32.mrb[0].mxu0
  %v1403 = vadd.f32 0.0, %v1402
  %v1404 = vpop.f32.mrb[0].mxu0
  %1405 = vmatprep.mubr.f32.mxu0 0.0
  %1406 = vmatmul.mubr.f32.gmra.mrb[0].mxu0 %v1314
  %v1407 = vpop.f32.mrb[0].mxu0
  %v1408 = vadd.f32 0.0, %v1407
  %v1409 = vpop.f32.mrb[0].mxu0
  %1410 = vmatprep.mubr.f32.mxu0 0.0
  %1411 = vmatmul.mubr.f32.gmra.mrb[0].mxu0 %v1317
  %v1412 = vpop.f32.mrb[0].mxu0
  %v1413 = vadd.f32 0.0, %v1412
  %v1414 = vpop.f32.mrb[0].mxu0
  %1415 = vmatprep.mubr.f32.mxu0 0.0
  %1416 = vmatmul.mubr.f32.gmra.mrb[0].mxu0 %v1320
  %v1417 = vpop.f32.mrb[0].mxu0
  %v1418 = vadd.f32 0.0, %v1417
  %v1419 = vpop.f32.mrb[0].mxu0
  %1420 = vmatprep.mubr.f32.mxu0 0.0
  %1421 = vmatmul.mubr.f32.gmra.mrb[0].mxu0 %v1323
  %v1422 = vpop.f32.mrb[0].mxu0
  %v1423 = vadd.f32 0.0, %v1422
  %v1424 = vpop.f32.mrb[0].mxu0
  %1425 = vmatprep.mubr.f32.mxu0 0.0
  %1426 = vmatmul.mubr.f32.gmra.mrb[0].mxu0 %v1326
  %v1427 = vpop.f32.mrb[0].mxu0
  %v1428 = vadd.f32 0.0, %v1427
  %v1429 = vpop.f32.mrb[0].mxu0
  %1430 = vmatprep.mubr.f32.mxu0 0.0
  %1431 = vmatmul.mubr.f32.gmra.mrb[0].mxu0 %v1329
  %v1432 = vpop.f32.mrb[0].mxu0
  %v1433 = vadd.f32 0.0, %v1432
  %v1434 = vpop.f32.mrb[0].mxu0
  %1435 = vdwg.mxu0
  %v1437 = vsel %vm527, %v1041, 0
  %v1440 = vsel %vm527, %v1042, 0
  %v1443 = vsel %vm527, %v1043, 0
  %v1446 = vsel %vm527, %v1044, 0
  %v1449 = vsel %vm527, %v1045, 0
  %v1452 = vsel %vm527, %v1046, 0
  %v1455 = vsel %vm527, %v1047, 0
  %v1458 = vsel %vm527, %v1048, 0
  %1460 = vmatprep.subr.mxu0 0.0
  %1461 = vmatpush1.msra.mxu0 %v43
  %1462 = vmatprep.subr.mxu0 0.0
  %1463 = vmatpush1.msra.mxu0 0.0
  %1464 = vmatprep.subr.mxu0 0.0
  %1465 = vmatpush1.msra.mxu0 0.0
  %1466 = vmatprep.subr.mxu0 0.0
  %1467 = vmatpush1.msra.mxu0 0.0
  %1468 = vmatprep.subr.mxu0 0.0
  %1469 = vmatpush1.msra.mxu0 0.0
  %1470 = vmatprep.subr.mxu0 0.0
  %1471 = vmatpush1.msra.mxu0 0.0
  %1472 = vmatprep.subr.mxu0 0.0
  %1473 = vmatpush1.msra.mxu0 0.0
  %1474 = vmatprep.subr.mxu0 0.0
  %1475 = vmatpush1.msra.mxu0 0.0
  %1476 = vmatprep.subr.mxu0 0.0
  %1477 = vmatpush1.msra.mxu0 0.0
  %1478 = vmatprep.subr.mxu0 0.0
  %1479 = vmatpush1.msra.mxu0 0.0
  %1480 = vmatprep.subr.mxu0 0.0
  %1481 = vmatpush1.msra.mxu0 0.0
  %1482 = vmatprep.subr.mxu0 0.0
  %1483 = vmatpush1.msra.mxu0 0.0
  %1484 = vmatprep.subr.mxu0 0.0
  %1485 = vmatpush1.msra.mxu0 0.0
  %1486 = vmatprep.subr.mxu0 0.0
  %1487 = vmatpush1.msra.mxu0 0.0
  %1488 = vmatprep.subr.mxu0 0.0
  %1489 = vmatpush1.msra.mxu0 0.0
  %1490 = vmatprep.subr.mxu0 0.0
  %1491 = vmatpush1.msra.mxu0 0.0
  %1492 = vmatprep.subr.mxu0 0.0
  %1493 = vmatpush1.msra.mxu0 0.0
  %1494 = vmatprep.subr.mxu0 0.0
  %1495 = vmatpush1.msra.mxu0 0.0
  %1496 = vmatprep.subr.mxu0 0.0
  %1497 = vmatpush1.msra.mxu0 0.0
  %1498 = vmatprep.subr.mxu0 0.0
  %1499 = vmatpush1.msra.mxu0 0.0
  %1500 = vmatprep.subr.mxu0 0.0
  %1501 = vmatpush1.msra.mxu0 0.0
  %1502 = vmatprep.subr.mxu0 0.0
  %1503 = vmatpush1.msra.mxu0 0.0
  %1504 = vmatprep.subr.mxu0 0.0
  %1505 = vmatpush1.msra.mxu0 0.0
  %1506 = vmatprep.subr.mxu0 0.0
  %1507 = vmatpush1.msra.mxu0 0.0
  %1508 = vmatprep.subr.mxu0 0.0
  %1509 = vmatpush1.msra.mxu0 0.0
  %1510 = vmatprep.subr.mxu0 0.0
  %1511 = vmatpush1.msra.mxu0 0.0
  %1512 = vmatprep.subr.mxu0 0.0
  %1513 = vmatpush1.msra.mxu0 0.0
  %1514 = vmatprep.subr.mxu0 0.0
  %1515 = vmatpush1.msra.mxu0 0.0
  %1516 = vmatprep.subr.mxu0 0.0
  %1517 = vmatpush1.msra.mxu0 0.0
  %1518 = vmatprep.subr.mxu0 0.0
  %1519 = vmatpush1.msra.mxu0 0.0
  %1520 = vmatprep.subr.mxu0 0.0
  %1521 = vmatpush1.msra.mxu0 0.0
  %1522 = vmatprep.subr.mxu0 0.0
  %1523 = vmatpush1.msra.mxu0 0.0
  %1524 = vmatprep.mubr.f32.mxu0 0.0
  %1525 = vmatmul.mubr.f32.gmra.mrb[0].mxu0 %v1437
  %v1526 = vpop.f32.mrb[0].mxu0
  %v1527 = vadd.f32 0.0, %v1526
  %v1528 = vpop.f32.mrb[0].mxu0
  %1529 = vmatprep.mubr.f32.mxu0 0.0
  %1530 = vmatmul.mubr.f32.gmra.mrb[0].mxu0 %v1440
  %v1531 = vpop.f32.mrb[0].mxu0
  %v1532 = vadd.f32 0.0, %v1531
  %v1533 = vpop.f32.mrb[0].mxu0
  %1534 = vmatprep.mubr.f32.mxu0 0.0
  %1535 = vmatmul.mubr.f32.gmra.mrb[0].mxu0 %v1443
  %v1536 = vpop.f32.mrb[0].mxu0
  %v1537 = vadd.f32 0.0, %v1536
  %v1538 = vpop.f32.mrb[0].mxu0
  %1539 = vmatprep.mubr.f32.mxu0 0.0
  %1540 = vmatmul.mubr.f32.gmra.mrb[0].mxu0 %v1446
  %v1541 = vpop.f32.mrb[0].mxu0
  %v1542 = vadd.f32 0.0, %v1541
  %v1543 = vpop.f32.mrb[0].mxu0
  %1544 = vmatprep.mubr.f32.mxu0 0.0
  %1545 = vmatmul.mubr.f32.gmra.mrb[0].mxu0 %v1449
  %v1546 = vpop.f32.mrb[0].mxu0
  %v1547 = vadd.f32 0.0, %v1546
  %v1548 = vpop.f32.mrb[0].mxu0
  %1549 = vmatprep.mubr.f32.mxu0 0.0
  %1550 = vmatmul.mubr.f32.gmra.mrb[0].mxu0 %v1452
  %v1551 = vpop.f32.mrb[0].mxu0
  %v1552 = vadd.f32 0.0, %v1551
  %v1553 = vpop.f32.mrb[0].mxu0
  %1554 = vmatprep.mubr.f32.mxu0 0.0
  %1555 = vmatmul.mubr.f32.gmra.mrb[0].mxu0 %v1455
  %v1556 = vpop.f32.mrb[0].mxu0
  %v1557 = vadd.f32 0.0, %v1556
  %v1558 = vpop.f32.mrb[0].mxu0
  %1559 = vmatprep.mubr.f32.mxu0 0.0
  %1560 = vmatmul.mubr.f32.gmra.mrb[0].mxu0 %v1458
  %v1561 = vpop.f32.mrb[0].mxu0
  %v1562 = vadd.f32 0.0, %v1561
  %v1563 = vpop.f32.mrb[0].mxu0
  %1564 = vdwg.mxu0
  %v1565 = vld [vmem:[%s3 + $0x10] sm:$0x1]
  %v1566 = vld [vmem:[%s3 + $0x18] sm:$0x1]
  %v1567 = vsel %vm44, %v1140, 0.0
  %1568 = vadd.xlane.f32.xlu0 %v1567
  %v1569 = vpop.xlane.xlu0 %1568
  %v1570 = vsel %vm44, %v1145, 0.0
  %1571 = vadd.xlane.f32.xlu0 %v1570
  %v1572 = vpop.xlane.xlu0 %1571
  %v1573 = vsel %vm44, %v1150, 0.0
  %1574 = vadd.xlane.f32.xlu0 %v1573
  %v1575 = vpop.xlane.xlu0 %1574
  %v1576 = vsel %vm44, %v1155, 0.0
  %1577 = vadd.xlane.f32.xlu0 %v1576
  %v1578 = vpop.xlane.xlu0 %1577
  %v1579 = vsel %vm44, %v1160, 0.0
  %1580 = vadd.xlane.f32.xlu0 %v1579
  %v1581 = vpop.xlane.xlu0 %1580
  %v1582 = vsel %vm44, %v1165, 0.0
  %1583 = vadd.xlane.f32.xlu0 %v1582
  %v1584 = vpop.xlane.xlu0 %1583
  %v1585 = vsel %vm44, %v1170, 0.0
  %1586 = vadd.xlane.f32.xlu0 %v1585
  %v1587 = vpop.xlane.xlu0 %1586
  %v1588 = vsel %vm44, %v1175, 0.0
  %1589 = vadd.xlane.f32.xlu0 %v1588
  %v1590 = vpop.xlane.xlu0 %1589
  %v1591 = vsel %vm44, %v1269, 0.0
  %1592 = vadd.xlane.f32.xlu0 %v1591
  %v1593 = vpop.xlane.xlu0 %1592
  %v1594 = vsel %vm44, %v1274, 0.0
  %1595 = vadd.xlane.f32.xlu0 %v1594
  %v1596 = vpop.xlane.xlu0 %1595
  %v1597 = vsel %vm44, %v1279, 0.0
  %1598 = vadd.xlane.f32.xlu0 %v1597
  %v1599 = vpop.xlane.xlu0 %1598
  %v1600 = vsel %vm44, %v1284, 0.0
  %1601 = vadd.xlane.f32.xlu0 %v1600
  %v1602 = vpop.xlane.xlu0 %1601
  %v1603 = vsel %vm44, %v1289, 0.0
  %1604 = vadd.xlane.f32.xlu0 %v1603
  %v1605 = vpop.xlane.xlu0 %1604
  %v1606 = vsel %vm44, %v1294, 0.0
  %1607 = vadd.xlane.f32.xlu0 %v1606
  %v1608 = vpop.xlane.xlu0 %1607
  %v1609 = vsel %vm44, %v1299, 0.0
  %1610 = vadd.xlane.f32.xlu0 %v1609
  %v1611 = vpop.xlane.xlu0 %1610
  %v1612 = vsel %vm44, %v1304, 0.0
  %1613 = vadd.xlane.f32.xlu0 %v1612
  %v1614 = vpop.xlane.xlu0 %1613
  %v1615 = vsel %vm44, %v1398, 0.0
  %1616 = vadd.xlane.f32.xlu0 %v1615
  %v1617 = vpop.xlane.xlu0 %1616
  %v1618 = vsel %vm44, %v1403, 0.0
  %1619 = vadd.xlane.f32.xlu0 %v1618
  %v1620 = vpop.xlane.xlu0 %1619
  %v1621 = vsel %vm44, %v1408, 0.0
  %1622 = vadd.xlane.f32.xlu0 %v1621
  %v1623 = vpop.xlane.xlu0 %1622
  %v1624 = vsel %vm44, %v1413, 0.0
  %1625 = vadd.xlane.f32.xlu0 %v1624
  %v1626 = vpop.xlane.xlu0 %1625
  %v1627 = vsel %vm44, %v1418, 0.0
  %1628 = vadd.xlane.f32.xlu0 %v1627
  %v1629 = vpop.xlane.xlu0 %1628
  %v1630 = vsel %vm44, %v1423, 0.0
  %1631 = vadd.xlane.f32.xlu0 %v1630
  %v1632 = vpop.xlane.xlu0 %1631
  %v1633 = vsel %vm44, %v1428, 0.0
  %1634 = vadd.xlane.f32.xlu0 %v1633
  %v1635 = vpop.xlane.xlu0 %1634
  %v1636 = vsel %vm44, %v1433, 0.0
  %1637 = vadd.xlane.f32.xlu0 %v1636
  %v1638 = vpop.xlane.xlu0 %1637
  %v1639 = vsel %vm44, %v1527, 0.0
  %1640 = vadd.xlane.f32.xlu0 %v1639
  %v1641 = vpop.xlane.xlu0 %1640
  %v1642 = vsel %vm44, %v1532, 0.0
  %1643 = vadd.xlane.f32.xlu0 %v1642
  %v1644 = vpop.xlane.xlu0 %1643
  %v1645 = vsel %vm44, %v1537, 0.0
  %1646 = vadd.xlane.f32.xlu0 %v1645
  %v1647 = vpop.xlane.xlu0 %1646
  %v1648 = vsel %vm44, %v1542, 0.0
  %1649 = vadd.xlane.f32.xlu0 %v1648
  %v1650 = vpop.xlane.xlu0 %1649
  %v1651 = vsel %vm44, %v1547, 0.0
  %1652 = vadd.xlane.f32.xlu0 %v1651
  %v1653 = vpop.xlane.xlu0 %1652
  %v1654 = vsel %vm44, %v1552, 0.0
  %1655 = vadd.xlane.f32.xlu0 %v1654
  %v1656 = vpop.xlane.xlu0 %1655
  %v1657 = vsel %vm44, %v1557, 0.0
  %1658 = vadd.xlane.f32.xlu0 %v1657
  %v1659 = vpop.xlane.xlu0 %1658
  %v1660 = vsel %vm44, %v1562, 0.0
  %1661 = vadd.xlane.f32.xlu0 %v1660
  %v1662 = vpop.xlane.xlu0 %1661
  %v1663 = vrcp.pop 32.0
  %v1664 = vmul.f32 %v1569, %v1663
  %v1665 = vmul.f32 %v1572, %v1663
  %v1666 = vmul.f32 %v1575, %v1663
  %v1667 = vmul.f32 %v1578, %v1663
  %v1668 = vmul.f32 %v1581, %v1663
  %v1669 = vmul.f32 %v1584, %v1663
  %v1670 = vmul.f32 %v1587, %v1663
  %v1671 = vmul.f32 %v1590, %v1663
  %v1672 = vmul.f32 %v1593, %v1663
  %v1673 = vmul.f32 %v1596, %v1663
  %v1674 = vmul.f32 %v1599, %v1663
  %v1675 = vmul.f32 %v1602, %v1663
  %v1676 = vmul.f32 %v1605, %v1663
  %v1677 = vmul.f32 %v1608, %v1663
  %v1678 = vmul.f32 %v1611, %v1663
  %v1679 = vmul.f32 %v1614, %v1663
  %v1680 = vmul.f32 %v1617, %v1663
  %v1681 = vmul.f32 %v1620, %v1663
  %v1682 = vmul.f32 %v1623, %v1663
  %v1683 = vmul.f32 %v1626, %v1663
  %v1684 = vmul.f32 %v1629, %v1663
  %v1685 = vmul.f32 %v1632, %v1663
  %v1686 = vmul.f32 %v1635, %v1663
  %v1687 = vmul.f32 %v1638, %v1663
  %v1688 = vmul.f32 %v1641, %v1663
  %v1689 = vmul.f32 %v1644, %v1663
  %v1690 = vmul.f32 %v1647, %v1663
  %v1691 = vmul.f32 %v1650, %v1663
  %v1692 = vmul.f32 %v1653, %v1663
  %v1693 = vmul.f32 %v1656, %v1663
  %v1694 = vmul.f32 %v1659, %v1663
  %v1695 = vmul.f32 %v1662, %v1663
  %v1696 = vsub.f32 %v1140, %v1664
  %v1697 = vsub.f32 %v1145, %v1665
  %v1698 = vsub.f32 %v1150, %v1666
  %v1699 = vsub.f32 %v1155, %v1667
  %v1700 = vsub.f32 %v1160, %v1668
  %v1701 = vsub.f32 %v1165, %v1669
  %v1702 = vsub.f32 %v1170, %v1670
  %v1703 = vsub.f32 %v1175, %v1671
  %v1704 = vsub.f32 %v1269, %v1672
  %v1705 = vsub.f32 %v1274, %v1673
  %v1706 = vsub.f32 %v1279, %v1674
  %v1707 = vsub.f32 %v1284, %v1675
  %v1708 = vsub.f32 %v1289, %v1676
  %v1709 = vsub.f32 %v1294, %v1677
  %v1710 = vsub.f32 %v1299, %v1678
  %v1711 = vsub.f32 %v1304, %v1679
  %v1712 = vsub.f32 %v1398, %v1680
  %v1713 = vsub.f32 %v1403, %v1681
  %v1714 = vsub.f32 %v1408, %v1682
  %v1715 = vsub.f32 %v1413, %v1683
  %v1716 = vsub.f32 %v1418, %v1684
  %v1717 = vsub.f32 %v1423, %v1685
  %v1718 = vsub.f32 %v1428, %v1686
  %v1719 = vsub.f32 %v1433, %v1687
  %v1720 = vsub.f32 %v1527, %v1688
  %v1721 = vsub.f32 %v1532, %v1689
  %v1722 = vsub.f32 %v1537, %v1690
  %v1723 = vsub.f32 %v1542, %v1691
  %v1724 = vsub.f32 %v1547, %v1692
  %v1725 = vsub.f32 %v1552, %v1693
  %v1726 = vsub.f32 %v1557, %v1694
  %v1727 = vsub.f32 %v1562, %v1695
  %v1728 = vmul.f32 %v1696, %v1696
  %v1729 = vmul.f32 %v1697, %v1697
  %v1730 = vmul.f32 %v1698, %v1698
  %v1731 = vmul.f32 %v1699, %v1699
  %v1732 = vmul.f32 %v1700, %v1700
  %v1733 = vmul.f32 %v1701, %v1701
  %v1734 = vmul.f32 %v1702, %v1702
  %v1735 = vmul.f32 %v1703, %v1703
  %v1736 = vmul.f32 %v1704, %v1704
  %v1737 = vmul.f32 %v1705, %v1705
  %v1738 = vmul.f32 %v1706, %v1706
  %v1739 = vmul.f32 %v1707, %v1707
  %v1740 = vmul.f32 %v1708, %v1708
  %v1741 = vmul.f32 %v1709, %v1709
  %v1742 = vmul.f32 %v1710, %v1710
  %v1743 = vmul.f32 %v1711, %v1711
  %v1744 = vmul.f32 %v1712, %v1712
  %v1745 = vmul.f32 %v1713, %v1713
  %v1746 = vmul.f32 %v1714, %v1714
  %v1747 = vmul.f32 %v1715, %v1715
  %v1748 = vmul.f32 %v1716, %v1716
  %v1749 = vmul.f32 %v1717, %v1717
  %v1750 = vmul.f32 %v1718, %v1718
  %v1751 = vmul.f32 %v1719, %v1719
  %v1752 = vmul.f32 %v1720, %v1720
  %v1753 = vmul.f32 %v1721, %v1721
  %v1754 = vmul.f32 %v1722, %v1722
  %v1755 = vmul.f32 %v1723, %v1723
  %v1756 = vmul.f32 %v1724, %v1724
  %v1757 = vmul.f32 %v1725, %v1725
  %v1758 = vmul.f32 %v1726, %v1726
  %v1759 = vmul.f32 %v1727, %v1727
  %v1760 = vsel %vm44, %v1728, 0.0
  %1761 = vadd.xlane.f32.xlu0 %v1760
  %v1762 = vpop.xlane.xlu0 %1761
  %v1763 = vsel %vm44, %v1729, 0.0
  %1764 = vadd.xlane.f32.xlu0 %v1763
  %v1765 = vpop.xlane.xlu0 %1764
  %v1766 = vsel %vm44, %v1730, 0.0
  %1767 = vadd.xlane.f32.xlu0 %v1766
  %v1768 = vpop.xlane.xlu0 %1767
  %v1769 = vsel %vm44, %v1731, 0.0
  %1770 = vadd.xlane.f32.xlu0 %v1769
  %v1771 = vpop.xlane.xlu0 %1770
  %v1772 = vsel %vm44, %v1732, 0.0
  %1773 = vadd.xlane.f32.xlu0 %v1772
  %v1774 = vpop.xlane.xlu0 %1773
  %v1775 = vsel %vm44, %v1733, 0.0
  %1776 = vadd.xlane.f32.xlu0 %v1775
  %v1777 = vpop.xlane.xlu0 %1776
  %v1778 = vsel %vm44, %v1734, 0.0
  %1779 = vadd.xlane.f32.xlu0 %v1778
  %v1780 = vpop.xlane.xlu0 %1779
  %v1781 = vsel %vm44, %v1735, 0.0
  %1782 = vadd.xlane.f32.xlu0 %v1781
  %v1783 = vpop.xlane.xlu0 %1782
  %v1784 = vsel %vm44, %v1736, 0.0
  %1785 = vadd.xlane.f32.xlu0 %v1784
  %v1786 = vpop.xlane.xlu0 %1785
  %v1787 = vsel %vm44, %v1737, 0.0
  %1788 = vadd.xlane.f32.xlu0 %v1787
  %v1789 = vpop.xlane.xlu0 %1788
  %v1790 = vsel %vm44, %v1738, 0.0
  %1791 = vadd.xlane.f32.xlu0 %v1790
  %v1792 = vpop.xlane.xlu0 %1791
  %v1793 = vsel %vm44, %v1739, 0.0
  %1794 = vadd.xlane.f32.xlu0 %v1793
  %v1795 = vpop.xlane.xlu0 %1794
  %v1796 = vsel %vm44, %v1740, 0.0
  %1797 = vadd.xlane.f32.xlu0 %v1796
  %v1798 = vpop.xlane.xlu0 %1797
  %v1799 = vsel %vm44, %v1741, 0.0
  %1800 = vadd.xlane.f32.xlu0 %v1799
  %v1801 = vpop.xlane.xlu0 %1800
  %v1802 = vsel %vm44, %v1742, 0.0
  %1803 = vadd.xlane.f32.xlu0 %v1802
  %v1804 = vpop.xlane.xlu0 %1803
  %v1805 = vsel %vm44, %v1743, 0.0
  %1806 = vadd.xlane.f32.xlu0 %v1805
  %v1807 = vpop.xlane.xlu0 %1806
  %v1808 = vsel %vm44, %v1744, 0.0
  %1809 = vadd.xlane.f32.xlu0 %v1808
  %v1810 = vpop.xlane.xlu0 %1809
  %v1811 = vsel %vm44, %v1745, 0.0
  %1812 = vadd.xlane.f32.xlu0 %v1811
  %v1813 = vpop.xlane.xlu0 %1812
  %v1814 = vsel %vm44, %v1746, 0.0
  %1815 = vadd.xlane.f32.xlu0 %v1814
  %v1816 = vpop.xlane.xlu0 %1815
  %v1817 = vsel %vm44, %v1747, 0.0
  %1818 = vadd.xlane.f32.xlu0 %v1817
  %v1819 = vpop.xlane.xlu0 %1818
  %v1820 = vsel %vm44, %v1748, 0.0
  %1821 = vadd.xlane.f32.xlu0 %v1820
  %v1822 = vpop.xlane.xlu0 %1821
  %v1823 = vsel %vm44, %v1749, 0.0
  %1824 = vadd.xlane.f32.xlu0 %v1823
  %v1825 = vpop.xlane.xlu0 %1824
  %v1826 = vsel %vm44, %v1750, 0.0
  %1827 = vadd.xlane.f32.xlu0 %v1826
  %v1828 = vpop.xlane.xlu0 %1827
  %v1829 = vsel %vm44, %v1751, 0.0
  %1830 = vadd.xlane.f32.xlu0 %v1829
  %v1831 = vpop.xlane.xlu0 %1830
  %v1832 = vsel %vm44, %v1752, 0.0
  %1833 = vadd.xlane.f32.xlu0 %v1832
  %v1834 = vpop.xlane.xlu0 %1833
  %v1835 = vsel %vm44, %v1753, 0.0
  %1836 = vadd.xlane.f32.xlu0 %v1835
  %v1837 = vpop.xlane.xlu0 %1836
  %v1838 = vsel %vm44, %v1754, 0.0
  %1839 = vadd.xlane.f32.xlu0 %v1838
  %v1840 = vpop.xlane.xlu0 %1839
  %v1841 = vsel %vm44, %v1755, 0.0
  %1842 = vadd.xlane.f32.xlu0 %v1841
  %v1843 = vpop.xlane.xlu0 %1842
  %v1844 = vsel %vm44, %v1756, 0.0
  %1845 = vadd.xlane.f32.xlu0 %v1844
  %v1846 = vpop.xlane.xlu0 %1845
  %v1847 = vsel %vm44, %v1757, 0.0
  %1848 = vadd.xlane.f32.xlu0 %v1847
  %v1849 = vpop.xlane.xlu0 %1848
  %v1850 = vsel %vm44, %v1758, 0.0
  %1851 = vadd.xlane.f32.xlu0 %v1850
  %v1852 = vpop.xlane.xlu0 %1851
  %v1853 = vsel %vm44, %v1759, 0.0
  %1854 = vadd.xlane.f32.xlu0 %v1853
  %v1855 = vpop.xlane.xlu0 %1854
  %v1856 = vmul.f32 %v1762, %v1663
  %v1857 = vmul.f32 %v1765, %v1663
  %v1858 = vmul.f32 %v1768, %v1663
  %v1859 = vmul.f32 %v1771, %v1663
  %v1860 = vmul.f32 %v1774, %v1663
  %v1861 = vmul.f32 %v1777, %v1663
  %v1862 = vmul.f32 %v1780, %v1663
  %v1863 = vmul.f32 %v1783, %v1663
  %v1864 = vmul.f32 %v1786, %v1663
  %v1865 = vmul.f32 %v1789, %v1663
  %v1866 = vmul.f32 %v1792, %v1663
  %v1867 = vmul.f32 %v1795, %v1663
  %v1868 = vmul.f32 %v1798, %v1663
  %v1869 = vmul.f32 %v1801, %v1663
  %v1870 = vmul.f32 %v1804, %v1663
  %v1871 = vmul.f32 %v1807, %v1663
  %v1872 = vmul.f32 %v1810, %v1663
  %v1873 = vmul.f32 %v1813, %v1663
  %v1874 = vmul.f32 %v1816, %v1663
  %v1875 = vmul.f32 %v1819, %v1663
  %v1876 = vmul.f32 %v1822, %v1663
  %v1877 = vmul.f32 %v1825, %v1663
  %v1878 = vmul.f32 %v1828, %v1663
  %v1879 = vmul.f32 %v1831, %v1663
  %v1880 = vmul.f32 %v1834, %v1663
  %v1881 = vmul.f32 %v1837, %v1663
  %v1882 = vmul.f32 %v1840, %v1663
  %v1883 = vmul.f32 %v1843, %v1663
  %v1884 = vmul.f32 %v1846, %v1663
  %v1885 = vmul.f32 %v1849, %v1663
  %v1886 = vmul.f32 %v1852, %v1663
  %v1887 = vmul.f32 %v1855, %v1663
  %v1888 = vadd.f32 %v1856, 1e-05
  %v1889 = vadd.f32 %v1857, 1e-05
  %v1890 = vadd.f32 %v1858, 1e-05
  %v1891 = vadd.f32 %v1859, 1e-05
  %v1892 = vadd.f32 %v1860, 1e-05
  %v1893 = vadd.f32 %v1861, 1e-05
  %v1894 = vadd.f32 %v1862, 1e-05
  %v1895 = vadd.f32 %v1863, 1e-05
  %v1896 = vadd.f32 %v1864, 1e-05
  %v1897 = vadd.f32 %v1865, 1e-05
  %v1898 = vadd.f32 %v1866, 1e-05
  %v1899 = vadd.f32 %v1867, 1e-05
  %v1900 = vadd.f32 %v1868, 1e-05
  %v1901 = vadd.f32 %v1869, 1e-05
  %v1902 = vadd.f32 %v1870, 1e-05
  %v1903 = vadd.f32 %v1871, 1e-05
  %v1904 = vadd.f32 %v1872, 1e-05
  %v1905 = vadd.f32 %v1873, 1e-05
  %v1906 = vadd.f32 %v1874, 1e-05
  %v1907 = vadd.f32 %v1875, 1e-05
  %v1908 = vadd.f32 %v1876, 1e-05
  %v1909 = vadd.f32 %v1877, 1e-05
  %v1910 = vadd.f32 %v1878, 1e-05
  %v1911 = vadd.f32 %v1879, 1e-05
  %v1912 = vadd.f32 %v1880, 1e-05
  %v1913 = vadd.f32 %v1881, 1e-05
  %v1914 = vadd.f32 %v1882, 1e-05
  %v1915 = vadd.f32 %v1883, 1e-05
  %v1916 = vadd.f32 %v1884, 1e-05
  %v1917 = vadd.f32 %v1885, 1e-05
  %v1918 = vadd.f32 %v1886, 1e-05
  %v1919 = vadd.f32 %v1887, 1e-05
  %v1920 = vrsqrt.pop %v1888
  %v1921 = vrsqrt.pop %v1889
  %v1922 = vrsqrt.pop %v1890
  %v1923 = vrsqrt.pop %v1891
  %v1924 = vrsqrt.pop %v1892
  %v1925 = vrsqrt.pop %v1893
  %v1926 = vrsqrt.pop %v1894
  %v1927 = vrsqrt.pop %v1895
  %v1928 = vrsqrt.pop %v1896
  %v1929 = vrsqrt.pop %v1897
  %v1930 = vrsqrt.pop %v1898
  %v1931 = vrsqrt.pop %v1899
  %v1932 = vrsqrt.pop %v1900
  %v1933 = vrsqrt.pop %v1901
  %v1934 = vrsqrt.pop %v1902
  %v1935 = vrsqrt.pop %v1903
  %v1936 = vrsqrt.pop %v1904
  %v1937 = vrsqrt.pop %v1905
  %v1938 = vrsqrt.pop %v1906
  %v1939 = vrsqrt.pop %v1907
  %v1940 = vrsqrt.pop %v1908
  %v1941 = vrsqrt.pop %v1909
  %v1942 = vrsqrt.pop %v1910
  %v1943 = vrsqrt.pop %v1911
  %v1944 = vrsqrt.pop %v1912
  %v1945 = vrsqrt.pop %v1913
  %v1946 = vrsqrt.pop %v1914
  %v1947 = vrsqrt.pop %v1915
  %v1948 = vrsqrt.pop %v1916
  %v1949 = vrsqrt.pop %v1917
  %v1950 = vrsqrt.pop %v1918
  %v1951 = vrsqrt.pop %v1919
  %v1952 = vmul.f32 %v1696, %v1920
  %v1953 = vmul.f32 %v1697, %v1921
  %v1954 = vmul.f32 %v1698, %v1922
  %v1955 = vmul.f32 %v1699, %v1923
  %v1956 = vmul.f32 %v1700, %v1924
  %v1957 = vmul.f32 %v1701, %v1925
  %v1958 = vmul.f32 %v1702, %v1926
  %v1959 = vmul.f32 %v1703, %v1927
  %v1960 = vmul.f32 %v1704, %v1928
  %v1961 = vmul.f32 %v1705, %v1929
  %v1962 = vmul.f32 %v1706, %v1930
  %v1963 = vmul.f32 %v1707, %v1931
  %v1964 = vmul.f32 %v1708, %v1932
  %v1965 = vmul.f32 %v1709, %v1933
  %v1966 = vmul.f32 %v1710, %v1934
  %v1967 = vmul.f32 %v1711, %v1935
  %v1968 = vmul.f32 %v1712, %v1936
  %v1969 = vmul.f32 %v1713, %v1937
  %v1970 = vmul.f32 %v1714, %v1938
  %v1971 = vmul.f32 %v1715, %v1939
  %v1972 = vmul.f32 %v1716, %v1940
  %v1973 = vmul.f32 %v1717, %v1941
  %v1974 = vmul.f32 %v1718, %v1942
  %v1975 = vmul.f32 %v1719, %v1943
  %v1976 = vmul.f32 %v1720, %v1944
  %v1977 = vmul.f32 %v1721, %v1945
  %v1978 = vmul.f32 %v1722, %v1946
  %v1979 = vmul.f32 %v1723, %v1947
  %v1980 = vmul.f32 %v1724, %v1948
  %v1981 = vmul.f32 %v1725, %v1949
  %v1982 = vmul.f32 %v1726, %v1950
  %v1983 = vmul.f32 %v1727, %v1951
  %v1984 = vlaneseq
  %v1985 = vshrl.u32 %v1984, 7
  %v1986 = vsub.s32 0, %v1985
  %v1987 = vrot.slane %v1565, %v1986
  %v1988 = vmul.f32 %v1952, %v1987
  %v1989 = vmul.f32 %v1953, %v1987
  %v1990 = vmul.f32 %v1954, %v1987
  %v1991 = vmul.f32 %v1955, %v1987
  %v1992 = vmul.f32 %v1956, %v1987
  %v1993 = vmul.f32 %v1957, %v1987
  %v1994 = vmul.f32 %v1958, %v1987
  %v1995 = vmul.f32 %v1959, %v1987
  %v1996 = vmul.f32 %v1960, %v1987
  %v1997 = vmul.f32 %v1961, %v1987
  %v1998 = vmul.f32 %v1962, %v1987
  %v1999 = vmul.f32 %v1963, %v1987
  %v2000 = vmul.f32 %v1964, %v1987
  %v2001 = vmul.f32 %v1965, %v1987
  %v2002 = vmul.f32 %v1966, %v1987
  %v2003 = vmul.f32 %v1967, %v1987
  %v2004 = vmul.f32 %v1968, %v1987
  %v2005 = vmul.f32 %v1969, %v1987
  %v2006 = vmul.f32 %v1970, %v1987
  %v2007 = vmul.f32 %v1971, %v1987
  %v2008 = vmul.f32 %v1972, %v1987
  %v2009 = vmul.f32 %v1973, %v1987
  %v2010 = vmul.f32 %v1974, %v1987
  %v2011 = vmul.f32 %v1975, %v1987
  %v2012 = vmul.f32 %v1976, %v1987
  %v2013 = vmul.f32 %v1977, %v1987
  %v2014 = vmul.f32 %v1978, %v1987
  %v2015 = vmul.f32 %v1979, %v1987
  %v2016 = vmul.f32 %v1980, %v1987
  %v2017 = vmul.f32 %v1981, %v1987
  %v2018 = vmul.f32 %v1982, %v1987
  %v2019 = vmul.f32 %v1983, %v1987
  %v2020 = vlaneseq
  %v2021 = vshrl.u32 %v2020, 7
  %v2022 = vsub.s32 0, %v2021
  %v2023 = vrot.slane %v1566, %v2022
  %v2024 = vadd.f32 %v1988, %v2023
  %v2025 = vadd.f32 %v1989, %v2023
  %v2026 = vadd.f32 %v1990, %v2023
  %v2027 = vadd.f32 %v1991, %v2023
  %v2028 = vadd.f32 %v1992, %v2023
  %v2029 = vadd.f32 %v1993, %v2023
  %v2030 = vadd.f32 %v1994, %v2023
  %v2031 = vadd.f32 %v1995, %v2023
  %v2032 = vadd.f32 %v1996, %v2023
  %v2033 = vadd.f32 %v1997, %v2023
  %v2034 = vadd.f32 %v1998, %v2023
  %v2035 = vadd.f32 %v1999, %v2023
  %v2036 = vadd.f32 %v2000, %v2023
  %v2037 = vadd.f32 %v2001, %v2023
  %v2038 = vadd.f32 %v2002, %v2023
  %v2039 = vadd.f32 %v2003, %v2023
  %v2040 = vadd.f32 %v2004, %v2023
  %v2041 = vadd.f32 %v2005, %v2023
  %v2042 = vadd.f32 %v2006, %v2023
  %v2043 = vadd.f32 %v2007, %v2023
  %v2044 = vadd.f32 %v2008, %v2023
  %v2045 = vadd.f32 %v2009, %v2023
  %v2046 = vadd.f32 %v2010, %v2023
  %v2047 = vadd.f32 %v2011, %v2023
  %v2048 = vadd.f32 %v2012, %v2023
  %v2049 = vadd.f32 %v2013, %v2023
  %v2050 = vadd.f32 %v2014, %v2023
  %v2051 = vadd.f32 %v2015, %v2023
  %v2052 = vadd.f32 %v2016, %v2023
  %v2053 = vadd.f32 %v2017, %v2023
  %v2054 = vadd.f32 %v2018, %v2023
  %v2055 = vadd.f32 %v2019, %v2023
  %v2056 = vmax.f32 %v2024, 0.0
  %v2057 = vmax.f32 %v2025, 0.0
  %v2058 = vmax.f32 %v2026, 0.0
  %v2059 = vmax.f32 %v2027, 0.0
  %v2060 = vmax.f32 %v2028, 0.0
  %v2061 = vmax.f32 %v2029, 0.0
  %v2062 = vmax.f32 %v2030, 0.0
  %v2063 = vmax.f32 %v2031, 0.0
  %v2064 = vmax.f32 %v2032, 0.0
  %v2065 = vmax.f32 %v2033, 0.0
  %v2066 = vmax.f32 %v2034, 0.0
  %v2067 = vmax.f32 %v2035, 0.0
  %v2068 = vmax.f32 %v2036, 0.0
  %v2069 = vmax.f32 %v2037, 0.0
  %v2070 = vmax.f32 %v2038, 0.0
  %v2071 = vmax.f32 %v2039, 0.0
  %v2072 = vmax.f32 %v2040, 0.0
  %v2073 = vmax.f32 %v2041, 0.0
  %v2074 = vmax.f32 %v2042, 0.0
  %v2075 = vmax.f32 %v2043, 0.0
  %v2076 = vmax.f32 %v2044, 0.0
  %v2077 = vmax.f32 %v2045, 0.0
  %v2078 = vmax.f32 %v2046, 0.0
  %v2079 = vmax.f32 %v2047, 0.0
  %v2080 = vmax.f32 %v2048, 0.0
  %v2081 = vmax.f32 %v2049, 0.0
  %v2082 = vmax.f32 %v2050, 0.0
  %v2083 = vmax.f32 %v2051, 0.0
  %v2084 = vmax.f32 %v2052, 0.0
  %v2085 = vmax.f32 %v2053, 0.0
  %v2086 = vmax.f32 %v2054, 0.0
  %v2087 = vmax.f32 %v2055, 0.0
  %v2088 = vld [vmem:[%s2] sm:$0xff]
  %v2089 = vld [vmem:[%s2 + $0x8] sm:$0xff]
  %v2090 = vld [vmem:[%s2 + $0x10] sm:$0xff]
  %v2091 = vld [vmem:[%s2 + $0x18] sm:$0xff]
  %v2092 = vld [vmem:[%s3 + $0x20] sm:$0x1]
  %v2093 = vlaneseq
  %v2094 = vshrl.u32 %v2093, 7
  %v2095 = vsub.s32 0, %v2094
  %v2096 = vrot.slane %v2092, %v2095
  %v2098 = vsel %vm44, %v2056, 0
  %v2101 = vsel %vm44, %v2057, 0
  %v2104 = vsel %vm44, %v2058, 0
  %v2107 = vsel %vm44, %v2059, 0
  %v2110 = vsel %vm44, %v2060, 0
  %v2113 = vsel %vm44, %v2061, 0
  %v2116 = vsel %vm44, %v2062, 0
  %v2119 = vsel %vm44, %v2063, 0
  %v2122 = vsel %vm44, %v2064, 0
  %v2125 = vsel %vm44, %v2065, 0
  %v2128 = vsel %vm44, %v2066, 0
  %v2131 = vsel %vm44, %v2067, 0
  %v2134 = vsel %vm44, %v2068, 0
  %v2137 = vsel %vm44, %v2069, 0
  %v2140 = vsel %vm44, %v2070, 0
  %v2143 = vsel %vm44, %v2071, 0
  %v2146 = vsel %vm44, %v2072, 0
  %v2149 = vsel %vm44, %v2073, 0
  %v2152 = vsel %vm44, %v2074, 0
  %v2155 = vsel %vm44, %v2075, 0
  %v2158 = vsel %vm44, %v2076, 0
  %v2161 = vsel %vm44, %v2077, 0
  %v2164 = vsel %vm44, %v2078, 0
  %v2167 = vsel %vm44, %v2079, 0
  %v2170 = vsel %vm44, %v2080, 0
  %v2173 = vsel %vm44, %v2081, 0
  %v2176 = vsel %vm44, %v2082, 0
  %v2179 = vsel %vm44, %v2083, 0
  %v2182 = vsel %vm44, %v2084, 0
  %v2185 = vsel %vm44, %v2085, 0
  %v2188 = vsel %vm44, %v2086, 0
  %v2191 = vsel %vm44, %v2087, 0
  %2193 = vmatprep.subr.mxu0 0.0
  %2194 = vmatpush1.msra.mxu0 %v2088
  %2195 = vmatprep.subr.mxu0 0.0
  %2196 = vmatpush1.msra.mxu0 %v2089
  %2197 = vmatprep.subr.mxu0 0.0
  %2198 = vmatpush1.msra.mxu0 %v2090
  %2199 = vmatprep.subr.mxu0 0.0
  %2200 = vmatpush1.msra.mxu0 %v2091
  %2201 = vmatprep.subr.mxu0 0.0
  %2202 = vmatpush1.msra.mxu0 0.0
  %2203 = vmatprep.subr.mxu0 0.0
  %2204 = vmatpush1.msra.mxu0 0.0
  %2205 = vmatprep.subr.mxu0 0.0
  %2206 = vmatpush1.msra.mxu0 0.0
  %2207 = vmatprep.subr.mxu0 0.0
  %2208 = vmatpush1.msra.mxu0 0.0
  %2209 = vmatprep.subr.mxu0 0.0
  %2210 = vmatpush1.msra.mxu0 0.0
  %2211 = vmatprep.subr.mxu0 0.0
  %2212 = vmatpush1.msra.mxu0 0.0
  %2213 = vmatprep.subr.mxu0 0.0
  %2214 = vmatpush1.msra.mxu0 0.0
  %2215 = vmatprep.subr.mxu0 0.0
  %2216 = vmatpush1.msra.mxu0 0.0
  %2217 = vmatprep.subr.mxu0 0.0
  %2218 = vmatpush1.msra.mxu0 0.0
  %2219 = vmatprep.subr.mxu0 0.0
  %2220 = vmatpush1.msra.mxu0 0.0
  %2221 = vmatprep.subr.mxu0 0.0
  %2222 = vmatpush1.msra.mxu0 0.0
  %2223 = vmatprep.subr.mxu0 0.0
  %2224 = vmatpush1.msra.mxu0 0.0
  %2225 = vmatprep.subr.mxu0 0.0
  %2226 = vmatpush1.msra.mxu0 0.0
  %2227 = vmatprep.subr.mxu0 0.0
  %2228 = vmatpush1.msra.mxu0 0.0
  %2229 = vmatprep.subr.mxu0 0.0
  %2230 = vmatpush1.msra.mxu0 0.0
  %2231 = vmatprep.subr.mxu0 0.0
  %2232 = vmatpush1.msra.mxu0 0.0
  %2233 = vmatprep.subr.mxu0 0.0
  %2234 = vmatpush1.msra.mxu0 0.0
  %2235 = vmatprep.subr.mxu0 0.0
  %2236 = vmatpush1.msra.mxu0 0.0
  %2237 = vmatprep.subr.mxu0 0.0
  %2238 = vmatpush1.msra.mxu0 0.0
  %2239 = vmatprep.subr.mxu0 0.0
  %2240 = vmatpush1.msra.mxu0 0.0
  %2241 = vmatprep.subr.mxu0 0.0
  %2242 = vmatpush1.msra.mxu0 0.0
  %2243 = vmatprep.subr.mxu0 0.0
  %2244 = vmatpush1.msra.mxu0 0.0
  %2245 = vmatprep.subr.mxu0 0.0
  %2246 = vmatpush1.msra.mxu0 0.0
  %2247 = vmatprep.subr.mxu0 0.0
  %2248 = vmatpush1.msra.mxu0 0.0
  %2249 = vmatprep.subr.mxu0 0.0
  %2250 = vmatpush1.msra.mxu0 0.0
  %2251 = vmatprep.subr.mxu0 0.0
  %2252 = vmatpush1.msra.mxu0 0.0
  %2253 = vmatprep.subr.mxu0 0.0
  %2254 = vmatpush1.msra.mxu0 0.0
  %2255 = vmatprep.subr.mxu0 0.0
  %2256 = vmatpush1.msra.mxu0 0.0
  %2257 = vmatprep.mubr.f32.mxu0 0.0
  %2258 = vmatmul.mubr.f32.gmra.mrb[0].mxu0 %v2098
  %v2259 = vpop.f32.mrb[0].mxu0
  %v2260 = vadd.f32 %v2096, %v2259
  %v2261 = vpop.f32.mrb[0].mxu0
  %2262 = vmatprep.mubr.f32.mxu0 0.0
  %2263 = vmatmul.mubr.f32.gmra.mrb[0].mxu0 %v2101
  %v2264 = vpop.f32.mrb[0].mxu0
  %v2265 = vadd.f32 %v2096, %v2264
  %v2266 = vpop.f32.mrb[0].mxu0
  %2267 = vmatprep.mubr.f32.mxu0 0.0
  %2268 = vmatmul.mubr.f32.gmra.mrb[0].mxu0 %v2104
  %v2269 = vpop.f32.mrb[0].mxu0
  %v2270 = vadd.f32 %v2096, %v2269
  %v2271 = vpop.f32.mrb[0].mxu0
  %2272 = vmatprep.mubr.f32.mxu0 0.0
  %2273 = vmatmul.mubr.f32.gmra.mrb[0].mxu0 %v2107
  %v2274 = vpop.f32.mrb[0].mxu0
  %v2275 = vadd.f32 %v2096, %v2274
  %v2276 = vpop.f32.mrb[0].mxu0
  %2277 = vmatprep.mubr.f32.mxu0 0.0
  %2278 = vmatmul.mubr.f32.gmra.mrb[0].mxu0 %v2110
  %v2279 = vpop.f32.mrb[0].mxu0
  %v2280 = vadd.f32 %v2096, %v2279
  %v2281 = vpop.f32.mrb[0].mxu0
  %2282 = vmatprep.mubr.f32.mxu0 0.0
  %2283 = vmatmul.mubr.f32.gmra.mrb[0].mxu0 %v2113
  %v2284 = vpop.f32.mrb[0].mxu0
  %v2285 = vadd.f32 %v2096, %v2284
  %v2286 = vpop.f32.mrb[0].mxu0
  %2287 = vmatprep.mubr.f32.mxu0 0.0
  %2288 = vmatmul.mubr.f32.gmra.mrb[0].mxu0 %v2116
  %v2289 = vpop.f32.mrb[0].mxu0
  %v2290 = vadd.f32 %v2096, %v2289
  %v2291 = vpop.f32.mrb[0].mxu0
  %2292 = vmatprep.mubr.f32.mxu0 0.0
  %2293 = vmatmul.mubr.f32.gmra.mrb[0].mxu0 %v2119
  %v2294 = vpop.f32.mrb[0].mxu0
  %v2295 = vadd.f32 %v2096, %v2294
  %v2296 = vpop.f32.mrb[0].mxu0
  %2297 = vmatprep.mubr.f32.mxu0 0.0
  %2298 = vmatmul.mubr.f32.gmra.mrb[0].mxu0 %v2122
  %v2299 = vpop.f32.mrb[0].mxu0
  %v2300 = vadd.f32 %v2096, %v2299
  %v2301 = vpop.f32.mrb[0].mxu0
  %2302 = vmatprep.mubr.f32.mxu0 0.0
  %2303 = vmatmul.mubr.f32.gmra.mrb[0].mxu0 %v2125
  %v2304 = vpop.f32.mrb[0].mxu0
  %v2305 = vadd.f32 %v2096, %v2304
  %v2306 = vpop.f32.mrb[0].mxu0
  %2307 = vmatprep.mubr.f32.mxu0 0.0
  %2308 = vmatmul.mubr.f32.gmra.mrb[0].mxu0 %v2128
  %v2309 = vpop.f32.mrb[0].mxu0
  %v2310 = vadd.f32 %v2096, %v2309
  %v2311 = vpop.f32.mrb[0].mxu0
  %2312 = vmatprep.mubr.f32.mxu0 0.0
  %2313 = vmatmul.mubr.f32.gmra.mrb[0].mxu0 %v2131
  %v2314 = vpop.f32.mrb[0].mxu0
  %v2315 = vadd.f32 %v2096, %v2314
  %v2316 = vpop.f32.mrb[0].mxu0
  %2317 = vmatprep.mubr.f32.mxu0 0.0
  %2318 = vmatmul.mubr.f32.gmra.mrb[0].mxu0 %v2134
  %v2319 = vpop.f32.mrb[0].mxu0
  %v2320 = vadd.f32 %v2096, %v2319
  %v2321 = vpop.f32.mrb[0].mxu0
  %2322 = vmatprep.mubr.f32.mxu0 0.0
  %2323 = vmatmul.mubr.f32.gmra.mrb[0].mxu0 %v2137
  %v2324 = vpop.f32.mrb[0].mxu0
  %v2325 = vadd.f32 %v2096, %v2324
  %v2326 = vpop.f32.mrb[0].mxu0
  %2327 = vmatprep.mubr.f32.mxu0 0.0
  %2328 = vmatmul.mubr.f32.gmra.mrb[0].mxu0 %v2140
  %v2329 = vpop.f32.mrb[0].mxu0
  %v2330 = vadd.f32 %v2096, %v2329
  %v2331 = vpop.f32.mrb[0].mxu0
  %2332 = vmatprep.mubr.f32.mxu0 0.0
  %2333 = vmatmul.mubr.f32.gmra.mrb[0].mxu0 %v2143
  %v2334 = vpop.f32.mrb[0].mxu0
  %v2335 = vadd.f32 %v2096, %v2334
  %v2336 = vpop.f32.mrb[0].mxu0
  %2337 = vmatprep.mubr.f32.mxu0 0.0
  %2338 = vmatmul.mubr.f32.gmra.mrb[0].mxu0 %v2146
  %v2339 = vpop.f32.mrb[0].mxu0
  %v2340 = vadd.f32 %v2096, %v2339
  %v2341 = vpop.f32.mrb[0].mxu0
  %2342 = vmatprep.mubr.f32.mxu0 0.0
  %2343 = vmatmul.mubr.f32.gmra.mrb[0].mxu0 %v2149
  %v2344 = vpop.f32.mrb[0].mxu0
  %v2345 = vadd.f32 %v2096, %v2344
  %v2346 = vpop.f32.mrb[0].mxu0
  %2347 = vmatprep.mubr.f32.mxu0 0.0
  %2348 = vmatmul.mubr.f32.gmra.mrb[0].mxu0 %v2152
  %v2349 = vpop.f32.mrb[0].mxu0
  %v2350 = vadd.f32 %v2096, %v2349
  %v2351 = vpop.f32.mrb[0].mxu0
  %2352 = vmatprep.mubr.f32.mxu0 0.0
  %2353 = vmatmul.mubr.f32.gmra.mrb[0].mxu0 %v2155
  %v2354 = vpop.f32.mrb[0].mxu0
  %v2355 = vadd.f32 %v2096, %v2354
  %v2356 = vpop.f32.mrb[0].mxu0
  %2357 = vmatprep.mubr.f32.mxu0 0.0
  %2358 = vmatmul.mubr.f32.gmra.mrb[0].mxu0 %v2158
  %v2359 = vpop.f32.mrb[0].mxu0
  %v2360 = vadd.f32 %v2096, %v2359
  %v2361 = vpop.f32.mrb[0].mxu0
  %2362 = vmatprep.mubr.f32.mxu0 0.0
  %2363 = vmatmul.mubr.f32.gmra.mrb[0].mxu0 %v2161
  %v2364 = vpop.f32.mrb[0].mxu0
  %v2365 = vadd.f32 %v2096, %v2364
  %v2366 = vpop.f32.mrb[0].mxu0
  %2367 = vmatprep.mubr.f32.mxu0 0.0
  %2368 = vmatmul.mubr.f32.gmra.mrb[0].mxu0 %v2164
  %v2369 = vpop.f32.mrb[0].mxu0
  %v2370 = vadd.f32 %v2096, %v2369
  %v2371 = vpop.f32.mrb[0].mxu0
  %2372 = vmatprep.mubr.f32.mxu0 0.0
  %2373 = vmatmul.mubr.f32.gmra.mrb[0].mxu0 %v2167
  %v2374 = vpop.f32.mrb[0].mxu0
  %v2375 = vadd.f32 %v2096, %v2374
  %v2376 = vpop.f32.mrb[0].mxu0
  %2377 = vmatprep.mubr.f32.mxu0 0.0
  %2378 = vmatmul.mubr.f32.gmra.mrb[0].mxu0 %v2170
  %v2379 = vpop.f32.mrb[0].mxu0
  %v2380 = vadd.f32 %v2096, %v2379
  %v2381 = vpop.f32.mrb[0].mxu0
  %2382 = vmatprep.mubr.f32.mxu0 0.0
  %2383 = vmatmul.mubr.f32.gmra.mrb[0].mxu0 %v2173
  %v2384 = vpop.f32.mrb[0].mxu0
  %v2385 = vadd.f32 %v2096, %v2384
  %v2386 = vpop.f32.mrb[0].mxu0
  %2387 = vmatprep.mubr.f32.mxu0 0.0
  %2388 = vmatmul.mubr.f32.gmra.mrb[0].mxu0 %v2176
  %v2389 = vpop.f32.mrb[0].mxu0
  %v2390 = vadd.f32 %v2096, %v2389
  %v2391 = vpop.f32.mrb[0].mxu0
  %2392 = vmatprep.mubr.f32.mxu0 0.0
  %2393 = vmatmul.mubr.f32.gmra.mrb[0].mxu0 %v2179
  %v2394 = vpop.f32.mrb[0].mxu0
  %v2395 = vadd.f32 %v2096, %v2394
  %v2396 = vpop.f32.mrb[0].mxu0
  %2397 = vmatprep.mubr.f32.mxu0 0.0
  %2398 = vmatmul.mubr.f32.gmra.mrb[0].mxu0 %v2182
  %v2399 = vpop.f32.mrb[0].mxu0
  %v2400 = vadd.f32 %v2096, %v2399
  %v2401 = vpop.f32.mrb[0].mxu0
  %2402 = vmatprep.mubr.f32.mxu0 0.0
  %2403 = vmatmul.mubr.f32.gmra.mrb[0].mxu0 %v2185
  %v2404 = vpop.f32.mrb[0].mxu0
  %v2405 = vadd.f32 %v2096, %v2404
  %v2406 = vpop.f32.mrb[0].mxu0
  %2407 = vmatprep.mubr.f32.mxu0 0.0
  %2408 = vmatmul.mubr.f32.gmra.mrb[0].mxu0 %v2188
  %v2409 = vpop.f32.mrb[0].mxu0
  %v2410 = vadd.f32 %v2096, %v2409
  %v2411 = vpop.f32.mrb[0].mxu0
  %2412 = vmatprep.mubr.f32.mxu0 0.0
  %2413 = vmatmul.mubr.f32.gmra.mrb[0].mxu0 %v2191
  %v2414 = vpop.f32.mrb[0].mxu0
  %v2415 = vadd.f32 %v2096, %v2414
  %v2416 = vpop.f32.mrb[0].mxu0
  %2417 = vdwg.mxu0
  %v2418 = vld [vmem:[%s3 + $0x28] sm:$0x1]
  %v2419 = vld [vmem:[%s3 + $0x30] sm:$0x1]
  %v2420 = vsel %vm527, %v2260, 0.0
  %2421 = vadd.xlane.f32.xlu0 %v2420
  %v2422 = vpop.xlane.xlu0 %2421
  %v2423 = vsel %vm527, %v2265, 0.0
  %2424 = vadd.xlane.f32.xlu0 %v2423
  %v2425 = vpop.xlane.xlu0 %2424
  %v2426 = vsel %vm527, %v2270, 0.0
  %2427 = vadd.xlane.f32.xlu0 %v2426
  %v2428 = vpop.xlane.xlu0 %2427
  %v2429 = vsel %vm527, %v2275, 0.0
  %2430 = vadd.xlane.f32.xlu0 %v2429
  %v2431 = vpop.xlane.xlu0 %2430
  %v2432 = vsel %vm527, %v2280, 0.0
  %2433 = vadd.xlane.f32.xlu0 %v2432
  %v2434 = vpop.xlane.xlu0 %2433
  %v2435 = vsel %vm527, %v2285, 0.0
  %2436 = vadd.xlane.f32.xlu0 %v2435
  %v2437 = vpop.xlane.xlu0 %2436
  %v2438 = vsel %vm527, %v2290, 0.0
  %2439 = vadd.xlane.f32.xlu0 %v2438
  %v2440 = vpop.xlane.xlu0 %2439
  %v2441 = vsel %vm527, %v2295, 0.0
  %2442 = vadd.xlane.f32.xlu0 %v2441
  %v2443 = vpop.xlane.xlu0 %2442
  %v2444 = vsel %vm527, %v2300, 0.0
  %2445 = vadd.xlane.f32.xlu0 %v2444
  %v2446 = vpop.xlane.xlu0 %2445
  %v2447 = vsel %vm527, %v2305, 0.0
  %2448 = vadd.xlane.f32.xlu0 %v2447
  %v2449 = vpop.xlane.xlu0 %2448
  %v2450 = vsel %vm527, %v2310, 0.0
  %2451 = vadd.xlane.f32.xlu0 %v2450
  %v2452 = vpop.xlane.xlu0 %2451
  %v2453 = vsel %vm527, %v2315, 0.0
  %2454 = vadd.xlane.f32.xlu0 %v2453
  %v2455 = vpop.xlane.xlu0 %2454
  %v2456 = vsel %vm527, %v2320, 0.0
  %2457 = vadd.xlane.f32.xlu0 %v2456
  %v2458 = vpop.xlane.xlu0 %2457
  %v2459 = vsel %vm527, %v2325, 0.0
  %2460 = vadd.xlane.f32.xlu0 %v2459
  %v2461 = vpop.xlane.xlu0 %2460
  %v2462 = vsel %vm527, %v2330, 0.0
  %2463 = vadd.xlane.f32.xlu0 %v2462
  %v2464 = vpop.xlane.xlu0 %2463
  %v2465 = vsel %vm527, %v2335, 0.0
  %2466 = vadd.xlane.f32.xlu0 %v2465
  %v2467 = vpop.xlane.xlu0 %2466
  %v2468 = vsel %vm527, %v2340, 0.0
  %2469 = vadd.xlane.f32.xlu0 %v2468
  %v2470 = vpop.xlane.xlu0 %2469
  %v2471 = vsel %vm527, %v2345, 0.0
  %2472 = vadd.xlane.f32.xlu0 %v2471
  %v2473 = vpop.xlane.xlu0 %2472
  %v2474 = vsel %vm527, %v2350, 0.0
  %2475 = vadd.xlane.f32.xlu0 %v2474
  %v2476 = vpop.xlane.xlu0 %2475
  %v2477 = vsel %vm527, %v2355, 0.0
  %2478 = vadd.xlane.f32.xlu0 %v2477
  %v2479 = vpop.xlane.xlu0 %2478
  %v2480 = vsel %vm527, %v2360, 0.0
  %2481 = vadd.xlane.f32.xlu0 %v2480
  %v2482 = vpop.xlane.xlu0 %2481
  %v2483 = vsel %vm527, %v2365, 0.0
  %2484 = vadd.xlane.f32.xlu0 %v2483
  %v2485 = vpop.xlane.xlu0 %2484
  %v2486 = vsel %vm527, %v2370, 0.0
  %2487 = vadd.xlane.f32.xlu0 %v2486
  %v2488 = vpop.xlane.xlu0 %2487
  %v2489 = vsel %vm527, %v2375, 0.0
  %2490 = vadd.xlane.f32.xlu0 %v2489
  %v2491 = vpop.xlane.xlu0 %2490
  %v2492 = vsel %vm527, %v2380, 0.0
  %2493 = vadd.xlane.f32.xlu0 %v2492
  %v2494 = vpop.xlane.xlu0 %2493
  %v2495 = vsel %vm527, %v2385, 0.0
  %2496 = vadd.xlane.f32.xlu0 %v2495
  %v2497 = vpop.xlane.xlu0 %2496
  %v2498 = vsel %vm527, %v2390, 0.0
  %2499 = vadd.xlane.f32.xlu0 %v2498
  %v2500 = vpop.xlane.xlu0 %2499
  %v2501 = vsel %vm527, %v2395, 0.0
  %2502 = vadd.xlane.f32.xlu0 %v2501
  %v2503 = vpop.xlane.xlu0 %2502
  %v2504 = vsel %vm527, %v2400, 0.0
  %2505 = vadd.xlane.f32.xlu0 %v2504
  %v2506 = vpop.xlane.xlu0 %2505
  %v2507 = vsel %vm527, %v2405, 0.0
  %2508 = vadd.xlane.f32.xlu0 %v2507
  %v2509 = vpop.xlane.xlu0 %2508
  %v2510 = vsel %vm527, %v2410, 0.0
  %2511 = vadd.xlane.f32.xlu0 %v2510
  %v2512 = vpop.xlane.xlu0 %2511
  %v2513 = vsel %vm527, %v2415, 0.0
  %2514 = vadd.xlane.f32.xlu0 %v2513
  %v2515 = vpop.xlane.xlu0 %2514
  %v2516 = vmul.f32 %v2422, %v624
  %v2517 = vmul.f32 %v2425, %v624
  %v2518 = vmul.f32 %v2428, %v624
  %v2519 = vmul.f32 %v2431, %v624
  %v2520 = vmul.f32 %v2434, %v624
  %v2521 = vmul.f32 %v2437, %v624
  %v2522 = vmul.f32 %v2440, %v624
  %v2523 = vmul.f32 %v2443, %v624
  %v2524 = vmul.f32 %v2446, %v624
  %v2525 = vmul.f32 %v2449, %v624
  %v2526 = vmul.f32 %v2452, %v624
  %v2527 = vmul.f32 %v2455, %v624
  %v2528 = vmul.f32 %v2458, %v624
  %v2529 = vmul.f32 %v2461, %v624
  %v2530 = vmul.f32 %v2464, %v624
  %v2531 = vmul.f32 %v2467, %v624
  %v2532 = vmul.f32 %v2470, %v624
  %v2533 = vmul.f32 %v2473, %v624
  %v2534 = vmul.f32 %v2476, %v624
  %v2535 = vmul.f32 %v2479, %v624
  %v2536 = vmul.f32 %v2482, %v624
  %v2537 = vmul.f32 %v2485, %v624
  %v2538 = vmul.f32 %v2488, %v624
  %v2539 = vmul.f32 %v2491, %v624
  %v2540 = vmul.f32 %v2494, %v624
  %v2541 = vmul.f32 %v2497, %v624
  %v2542 = vmul.f32 %v2500, %v624
  %v2543 = vmul.f32 %v2503, %v624
  %v2544 = vmul.f32 %v2506, %v624
  %v2545 = vmul.f32 %v2509, %v624
  %v2546 = vmul.f32 %v2512, %v624
  %v2547 = vmul.f32 %v2515, %v624
  %v2548 = vsub.f32 %v2260, %v2516
  %v2549 = vsub.f32 %v2265, %v2517
  %v2550 = vsub.f32 %v2270, %v2518
  %v2551 = vsub.f32 %v2275, %v2519
  %v2552 = vsub.f32 %v2280, %v2520
  %v2553 = vsub.f32 %v2285, %v2521
  %v2554 = vsub.f32 %v2290, %v2522
  %v2555 = vsub.f32 %v2295, %v2523
  %v2556 = vsub.f32 %v2300, %v2524
  %v2557 = vsub.f32 %v2305, %v2525
  %v2558 = vsub.f32 %v2310, %v2526
  %v2559 = vsub.f32 %v2315, %v2527
  %v2560 = vsub.f32 %v2320, %v2528
  %v2561 = vsub.f32 %v2325, %v2529
  %v2562 = vsub.f32 %v2330, %v2530
  %v2563 = vsub.f32 %v2335, %v2531
  %v2564 = vsub.f32 %v2340, %v2532
  %v2565 = vsub.f32 %v2345, %v2533
  %v2566 = vsub.f32 %v2350, %v2534
  %v2567 = vsub.f32 %v2355, %v2535
  %v2568 = vsub.f32 %v2360, %v2536
  %v2569 = vsub.f32 %v2365, %v2537
  %v2570 = vsub.f32 %v2370, %v2538
  %v2571 = vsub.f32 %v2375, %v2539
  %v2572 = vsub.f32 %v2380, %v2540
  %v2573 = vsub.f32 %v2385, %v2541
  %v2574 = vsub.f32 %v2390, %v2542
  %v2575 = vsub.f32 %v2395, %v2543
  %v2576 = vsub.f32 %v2400, %v2544
  %v2577 = vsub.f32 %v2405, %v2545
  %v2578 = vsub.f32 %v2410, %v2546
  %v2579 = vsub.f32 %v2415, %v2547
  %v2580 = vmul.f32 %v2548, %v2548
  %v2581 = vmul.f32 %v2549, %v2549
  %v2582 = vmul.f32 %v2550, %v2550
  %v2583 = vmul.f32 %v2551, %v2551
  %v2584 = vmul.f32 %v2552, %v2552
  %v2585 = vmul.f32 %v2553, %v2553
  %v2586 = vmul.f32 %v2554, %v2554
  %v2587 = vmul.f32 %v2555, %v2555
  %v2588 = vmul.f32 %v2556, %v2556
  %v2589 = vmul.f32 %v2557, %v2557
  %v2590 = vmul.f32 %v2558, %v2558
  %v2591 = vmul.f32 %v2559, %v2559
  %v2592 = vmul.f32 %v2560, %v2560
  %v2593 = vmul.f32 %v2561, %v2561
  %v2594 = vmul.f32 %v2562, %v2562
  %v2595 = vmul.f32 %v2563, %v2563
  %v2596 = vmul.f32 %v2564, %v2564
  %v2597 = vmul.f32 %v2565, %v2565
  %v2598 = vmul.f32 %v2566, %v2566
  %v2599 = vmul.f32 %v2567, %v2567
  %v2600 = vmul.f32 %v2568, %v2568
  %v2601 = vmul.f32 %v2569, %v2569
  %v2602 = vmul.f32 %v2570, %v2570
  %v2603 = vmul.f32 %v2571, %v2571
  %v2604 = vmul.f32 %v2572, %v2572
  %v2605 = vmul.f32 %v2573, %v2573
  %v2606 = vmul.f32 %v2574, %v2574
  %v2607 = vmul.f32 %v2575, %v2575
  %v2608 = vmul.f32 %v2576, %v2576
  %v2609 = vmul.f32 %v2577, %v2577
  %v2610 = vmul.f32 %v2578, %v2578
  %v2611 = vmul.f32 %v2579, %v2579
  %v2612 = vsel %vm527, %v2580, 0.0
  %2613 = vadd.xlane.f32.xlu0 %v2612
  %v2614 = vpop.xlane.xlu0 %2613
  %v2615 = vsel %vm527, %v2581, 0.0
  %2616 = vadd.xlane.f32.xlu0 %v2615
  %v2617 = vpop.xlane.xlu0 %2616
  %v2618 = vsel %vm527, %v2582, 0.0
  %2619 = vadd.xlane.f32.xlu0 %v2618
  %v2620 = vpop.xlane.xlu0 %2619
  %v2621 = vsel %vm527, %v2583, 0.0
  %2622 = vadd.xlane.f32.xlu0 %v2621
  %v2623 = vpop.xlane.xlu0 %2622
  %v2624 = vsel %vm527, %v2584, 0.0
  %2625 = vadd.xlane.f32.xlu0 %v2624
  %v2626 = vpop.xlane.xlu0 %2625
  %v2627 = vsel %vm527, %v2585, 0.0
  %2628 = vadd.xlane.f32.xlu0 %v2627
  %v2629 = vpop.xlane.xlu0 %2628
  %v2630 = vsel %vm527, %v2586, 0.0
  %2631 = vadd.xlane.f32.xlu0 %v2630
  %v2632 = vpop.xlane.xlu0 %2631
  %v2633 = vsel %vm527, %v2587, 0.0
  %2634 = vadd.xlane.f32.xlu0 %v2633
  %v2635 = vpop.xlane.xlu0 %2634
  %v2636 = vsel %vm527, %v2588, 0.0
  %2637 = vadd.xlane.f32.xlu0 %v2636
  %v2638 = vpop.xlane.xlu0 %2637
  %v2639 = vsel %vm527, %v2589, 0.0
  %2640 = vadd.xlane.f32.xlu0 %v2639
  %v2641 = vpop.xlane.xlu0 %2640
  %v2642 = vsel %vm527, %v2590, 0.0
  %2643 = vadd.xlane.f32.xlu0 %v2642
  %v2644 = vpop.xlane.xlu0 %2643
  %v2645 = vsel %vm527, %v2591, 0.0
  %2646 = vadd.xlane.f32.xlu0 %v2645
  %v2647 = vpop.xlane.xlu0 %2646
  %v2648 = vsel %vm527, %v2592, 0.0
  %2649 = vadd.xlane.f32.xlu0 %v2648
  %v2650 = vpop.xlane.xlu0 %2649
  %v2651 = vsel %vm527, %v2593, 0.0
  %2652 = vadd.xlane.f32.xlu0 %v2651
  %v2653 = vpop.xlane.xlu0 %2652
  %v2654 = vsel %vm527, %v2594, 0.0
  %2655 = vadd.xlane.f32.xlu0 %v2654
  %v2656 = vpop.xlane.xlu0 %2655
  %v2657 = vsel %vm527, %v2595, 0.0
  %2658 = vadd.xlane.f32.xlu0 %v2657
  %v2659 = vpop.xlane.xlu0 %2658
  %v2660 = vsel %vm527, %v2596, 0.0
  %2661 = vadd.xlane.f32.xlu0 %v2660
  %v2662 = vpop.xlane.xlu0 %2661
  %v2663 = vsel %vm527, %v2597, 0.0
  %2664 = vadd.xlane.f32.xlu0 %v2663
  %v2665 = vpop.xlane.xlu0 %2664
  %v2666 = vsel %vm527, %v2598, 0.0
  %2667 = vadd.xlane.f32.xlu0 %v2666
  %v2668 = vpop.xlane.xlu0 %2667
  %v2669 = vsel %vm527, %v2599, 0.0
  %2670 = vadd.xlane.f32.xlu0 %v2669
  %v2671 = vpop.xlane.xlu0 %2670
  %v2672 = vsel %vm527, %v2600, 0.0
  %2673 = vadd.xlane.f32.xlu0 %v2672
  %v2674 = vpop.xlane.xlu0 %2673
  %v2675 = vsel %vm527, %v2601, 0.0
  %2676 = vadd.xlane.f32.xlu0 %v2675
  %v2677 = vpop.xlane.xlu0 %2676
  %v2678 = vsel %vm527, %v2602, 0.0
  %2679 = vadd.xlane.f32.xlu0 %v2678
  %v2680 = vpop.xlane.xlu0 %2679
  %v2681 = vsel %vm527, %v2603, 0.0
  %2682 = vadd.xlane.f32.xlu0 %v2681
  %v2683 = vpop.xlane.xlu0 %2682
  %v2684 = vsel %vm527, %v2604, 0.0
  %2685 = vadd.xlane.f32.xlu0 %v2684
  %v2686 = vpop.xlane.xlu0 %2685
  %v2687 = vsel %vm527, %v2605, 0.0
  %2688 = vadd.xlane.f32.xlu0 %v2687
  %v2689 = vpop.xlane.xlu0 %2688
  %v2690 = vsel %vm527, %v2606, 0.0
  %2691 = vadd.xlane.f32.xlu0 %v2690
  %v2692 = vpop.xlane.xlu0 %2691
  %v2693 = vsel %vm527, %v2607, 0.0
  %2694 = vadd.xlane.f32.xlu0 %v2693
  %v2695 = vpop.xlane.xlu0 %2694
  %v2696 = vsel %vm527, %v2608, 0.0
  %2697 = vadd.xlane.f32.xlu0 %v2696
  %v2698 = vpop.xlane.xlu0 %2697
  %v2699 = vsel %vm527, %v2609, 0.0
  %2700 = vadd.xlane.f32.xlu0 %v2699
  %v2701 = vpop.xlane.xlu0 %2700
  %v2702 = vsel %vm527, %v2610, 0.0
  %2703 = vadd.xlane.f32.xlu0 %v2702
  %v2704 = vpop.xlane.xlu0 %2703
  %v2705 = vsel %vm527, %v2611, 0.0
  %2706 = vadd.xlane.f32.xlu0 %v2705
  %v2707 = vpop.xlane.xlu0 %2706
  %v2708 = vmul.f32 %v2614, %v624
  %v2709 = vmul.f32 %v2617, %v624
  %v2710 = vmul.f32 %v2620, %v624
  %v2711 = vmul.f32 %v2623, %v624
  %v2712 = vmul.f32 %v2626, %v624
  %v2713 = vmul.f32 %v2629, %v624
  %v2714 = vmul.f32 %v2632, %v624
  %v2715 = vmul.f32 %v2635, %v624
  %v2716 = vmul.f32 %v2638, %v624
  %v2717 = vmul.f32 %v2641, %v624
  %v2718 = vmul.f32 %v2644, %v624
  %v2719 = vmul.f32 %v2647, %v624
  %v2720 = vmul.f32 %v2650, %v624
  %v2721 = vmul.f32 %v2653, %v624
  %v2722 = vmul.f32 %v2656, %v624
  %v2723 = vmul.f32 %v2659, %v624
  %v2724 = vmul.f32 %v2662, %v624
  %v2725 = vmul.f32 %v2665, %v624
  %v2726 = vmul.f32 %v2668, %v624
  %v2727 = vmul.f32 %v2671, %v624
  %v2728 = vmul.f32 %v2674, %v624
  %v2729 = vmul.f32 %v2677, %v624
  %v2730 = vmul.f32 %v2680, %v624
  %v2731 = vmul.f32 %v2683, %v624
  %v2732 = vmul.f32 %v2686, %v624
  %v2733 = vmul.f32 %v2689, %v624
  %v2734 = vmul.f32 %v2692, %v624
  %v2735 = vmul.f32 %v2695, %v624
  %v2736 = vmul.f32 %v2698, %v624
  %v2737 = vmul.f32 %v2701, %v624
  %v2738 = vmul.f32 %v2704, %v624
  %v2739 = vmul.f32 %v2707, %v624
  %v2740 = vadd.f32 %v2708, 1e-05
  %v2741 = vadd.f32 %v2709, 1e-05
  %v2742 = vadd.f32 %v2710, 1e-05
  %v2743 = vadd.f32 %v2711, 1e-05
  %v2744 = vadd.f32 %v2712, 1e-05
  %v2745 = vadd.f32 %v2713, 1e-05
  %v2746 = vadd.f32 %v2714, 1e-05
  %v2747 = vadd.f32 %v2715, 1e-05
  %v2748 = vadd.f32 %v2716, 1e-05
  %v2749 = vadd.f32 %v2717, 1e-05
  %v2750 = vadd.f32 %v2718, 1e-05
  %v2751 = vadd.f32 %v2719, 1e-05
  %v2752 = vadd.f32 %v2720, 1e-05
  %v2753 = vadd.f32 %v2721, 1e-05
  %v2754 = vadd.f32 %v2722, 1e-05
  %v2755 = vadd.f32 %v2723, 1e-05
  %v2756 = vadd.f32 %v2724, 1e-05
  %v2757 = vadd.f32 %v2725, 1e-05
  %v2758 = vadd.f32 %v2726, 1e-05
  %v2759 = vadd.f32 %v2727, 1e-05
  %v2760 = vadd.f32 %v2728, 1e-05
  %v2761 = vadd.f32 %v2729, 1e-05
  %v2762 = vadd.f32 %v2730, 1e-05
  %v2763 = vadd.f32 %v2731, 1e-05
  %v2764 = vadd.f32 %v2732, 1e-05
  %v2765 = vadd.f32 %v2733, 1e-05
  %v2766 = vadd.f32 %v2734, 1e-05
  %v2767 = vadd.f32 %v2735, 1e-05
  %v2768 = vadd.f32 %v2736, 1e-05
  %v2769 = vadd.f32 %v2737, 1e-05
  %v2770 = vadd.f32 %v2738, 1e-05
  %v2771 = vadd.f32 %v2739, 1e-05
  %v2772 = vrsqrt.pop %v2740
  %v2773 = vrsqrt.pop %v2741
  %v2774 = vrsqrt.pop %v2742
  %v2775 = vrsqrt.pop %v2743
  %v2776 = vrsqrt.pop %v2744
  %v2777 = vrsqrt.pop %v2745
  %v2778 = vrsqrt.pop %v2746
  %v2779 = vrsqrt.pop %v2747
  %v2780 = vrsqrt.pop %v2748
  %v2781 = vrsqrt.pop %v2749
  %v2782 = vrsqrt.pop %v2750
  %v2783 = vrsqrt.pop %v2751
  %v2784 = vrsqrt.pop %v2752
  %v2785 = vrsqrt.pop %v2753
  %v2786 = vrsqrt.pop %v2754
  %v2787 = vrsqrt.pop %v2755
  %v2788 = vrsqrt.pop %v2756
  %v2789 = vrsqrt.pop %v2757
  %v2790 = vrsqrt.pop %v2758
  %v2791 = vrsqrt.pop %v2759
  %v2792 = vrsqrt.pop %v2760
  %v2793 = vrsqrt.pop %v2761
  %v2794 = vrsqrt.pop %v2762
  %v2795 = vrsqrt.pop %v2763
  %v2796 = vrsqrt.pop %v2764
  %v2797 = vrsqrt.pop %v2765
  %v2798 = vrsqrt.pop %v2766
  %v2799 = vrsqrt.pop %v2767
  %v2800 = vrsqrt.pop %v2768
  %v2801 = vrsqrt.pop %v2769
  %v2802 = vrsqrt.pop %v2770
  %v2803 = vrsqrt.pop %v2771
  %v2804 = vmul.f32 %v2548, %v2772
  %v2805 = vmul.f32 %v2549, %v2773
  %v2806 = vmul.f32 %v2550, %v2774
  %v2807 = vmul.f32 %v2551, %v2775
  %v2808 = vmul.f32 %v2552, %v2776
  %v2809 = vmul.f32 %v2553, %v2777
  %v2810 = vmul.f32 %v2554, %v2778
  %v2811 = vmul.f32 %v2555, %v2779
  %v2812 = vmul.f32 %v2556, %v2780
  %v2813 = vmul.f32 %v2557, %v2781
  %v2814 = vmul.f32 %v2558, %v2782
  %v2815 = vmul.f32 %v2559, %v2783
  %v2816 = vmul.f32 %v2560, %v2784
  %v2817 = vmul.f32 %v2561, %v2785
  %v2818 = vmul.f32 %v2562, %v2786
  %v2819 = vmul.f32 %v2563, %v2787
  %v2820 = vmul.f32 %v2564, %v2788
  %v2821 = vmul.f32 %v2565, %v2789
  %v2822 = vmul.f32 %v2566, %v2790
  %v2823 = vmul.f32 %v2567, %v2791
  %v2824 = vmul.f32 %v2568, %v2792
  %v2825 = vmul.f32 %v2569, %v2793
  %v2826 = vmul.f32 %v2570, %v2794
  %v2827 = vmul.f32 %v2571, %v2795
  %v2828 = vmul.f32 %v2572, %v2796
  %v2829 = vmul.f32 %v2573, %v2797
  %v2830 = vmul.f32 %v2574, %v2798
  %v2831 = vmul.f32 %v2575, %v2799
  %v2832 = vmul.f32 %v2576, %v2800
  %v2833 = vmul.f32 %v2577, %v2801
  %v2834 = vmul.f32 %v2578, %v2802
  %v2835 = vmul.f32 %v2579, %v2803
  %v2836 = vlaneseq
  %v2837 = vshrl.u32 %v2836, 7
  %v2838 = vsub.s32 0, %v2837
  %v2839 = vrot.slane %v2418, %v2838
  %v2840 = vmul.f32 %v2804, %v2839
  %v2841 = vmul.f32 %v2805, %v2839
  %v2842 = vmul.f32 %v2806, %v2839
  %v2843 = vmul.f32 %v2807, %v2839
  %v2844 = vmul.f32 %v2808, %v2839
  %v2845 = vmul.f32 %v2809, %v2839
  %v2846 = vmul.f32 %v2810, %v2839
  %v2847 = vmul.f32 %v2811, %v2839
  %v2848 = vmul.f32 %v2812, %v2839
  %v2849 = vmul.f32 %v2813, %v2839
  %v2850 = vmul.f32 %v2814, %v2839
  %v2851 = vmul.f32 %v2815, %v2839
  %v2852 = vmul.f32 %v2816, %v2839
  %v2853 = vmul.f32 %v2817, %v2839
  %v2854 = vmul.f32 %v2818, %v2839
  %v2855 = vmul.f32 %v2819, %v2839
  %v2856 = vmul.f32 %v2820, %v2839
  %v2857 = vmul.f32 %v2821, %v2839
  %v2858 = vmul.f32 %v2822, %v2839
  %v2859 = vmul.f32 %v2823, %v2839
  %v2860 = vmul.f32 %v2824, %v2839
  %v2861 = vmul.f32 %v2825, %v2839
  %v2862 = vmul.f32 %v2826, %v2839
  %v2863 = vmul.f32 %v2827, %v2839
  %v2864 = vmul.f32 %v2828, %v2839
  %v2865 = vmul.f32 %v2829, %v2839
  %v2866 = vmul.f32 %v2830, %v2839
  %v2867 = vmul.f32 %v2831, %v2839
  %v2868 = vmul.f32 %v2832, %v2839
  %v2869 = vmul.f32 %v2833, %v2839
  %v2870 = vmul.f32 %v2834, %v2839
  %v2871 = vmul.f32 %v2835, %v2839
  %v2872 = vlaneseq
  %v2873 = vshrl.u32 %v2872, 7
  %v2874 = vsub.s32 0, %v2873
  %v2875 = vrot.slane %v2419, %v2874
  %v2876 = vadd.f32 %v2840, %v2875
  %v2877 = vadd.f32 %v2841, %v2875
  %v2878 = vadd.f32 %v2842, %v2875
  %v2879 = vadd.f32 %v2843, %v2875
  %v2880 = vadd.f32 %v2844, %v2875
  %v2881 = vadd.f32 %v2845, %v2875
  %v2882 = vadd.f32 %v2846, %v2875
  %v2883 = vadd.f32 %v2847, %v2875
  %v2884 = vadd.f32 %v2848, %v2875
  %v2885 = vadd.f32 %v2849, %v2875
  %v2886 = vadd.f32 %v2850, %v2875
  %v2887 = vadd.f32 %v2851, %v2875
  %v2888 = vadd.f32 %v2852, %v2875
  %v2889 = vadd.f32 %v2853, %v2875
  %v2890 = vadd.f32 %v2854, %v2875
  %v2891 = vadd.f32 %v2855, %v2875
  %v2892 = vadd.f32 %v2856, %v2875
  %v2893 = vadd.f32 %v2857, %v2875
  %v2894 = vadd.f32 %v2858, %v2875
  %v2895 = vadd.f32 %v2859, %v2875
  %v2896 = vadd.f32 %v2860, %v2875
  %v2897 = vadd.f32 %v2861, %v2875
  %v2898 = vadd.f32 %v2862, %v2875
  %v2899 = vadd.f32 %v2863, %v2875
  %v2900 = vadd.f32 %v2864, %v2875
  %v2901 = vadd.f32 %v2865, %v2875
  %v2902 = vadd.f32 %v2866, %v2875
  %v2903 = vadd.f32 %v2867, %v2875
  %v2904 = vadd.f32 %v2868, %v2875
  %v2905 = vadd.f32 %v2869, %v2875
  %v2906 = vadd.f32 %v2870, %v2875
  %v2907 = vadd.f32 %v2871, %v2875
  %v2908 = vmax.f32 %v2876, 0.0
  %v2909 = vmax.f32 %v2877, 0.0
  %v2910 = vmax.f32 %v2878, 0.0
  %v2911 = vmax.f32 %v2879, 0.0
  %v2912 = vmax.f32 %v2880, 0.0
  %v2913 = vmax.f32 %v2881, 0.0
  %v2914 = vmax.f32 %v2882, 0.0
  %v2915 = vmax.f32 %v2883, 0.0
  %v2916 = vmax.f32 %v2884, 0.0
  %v2917 = vmax.f32 %v2885, 0.0
  %v2918 = vmax.f32 %v2886, 0.0
  %v2919 = vmax.f32 %v2887, 0.0
  %v2920 = vmax.f32 %v2888, 0.0
  %v2921 = vmax.f32 %v2889, 0.0
  %v2922 = vmax.f32 %v2890, 0.0
  %v2923 = vmax.f32 %v2891, 0.0
  %v2924 = vmax.f32 %v2892, 0.0
  %v2925 = vmax.f32 %v2893, 0.0
  %v2926 = vmax.f32 %v2894, 0.0
  %v2927 = vmax.f32 %v2895, 0.0
  %v2928 = vmax.f32 %v2896, 0.0
  %v2929 = vmax.f32 %v2897, 0.0
  %v2930 = vmax.f32 %v2898, 0.0
  %v2931 = vmax.f32 %v2899, 0.0
  %v2932 = vmax.f32 %v2900, 0.0
  %v2933 = vmax.f32 %v2901, 0.0
  %v2934 = vmax.f32 %v2902, 0.0
  %v2935 = vmax.f32 %v2903, 0.0
  %v2936 = vmax.f32 %v2904, 0.0
  %v2937 = vmax.f32 %v2905, 0.0
  %v2938 = vmax.f32 %v2906, 0.0
  %v2939 = vmax.f32 %v2907, 0.0
  %v2940 = vld [vmem:[%s2 + $0x30] sm:$0xff]
  %v2941 = vld [vmem:[%s2 + $0x38] sm:$0xff]
  %v2942 = vld [vmem:[%s4] sm:$0xff]
  %v2943 = vld [vmem:[%s4 + $0x8] sm:$0xff]
  %vm2944 = vcmask 523264
  %v2946 = vsel %vm2944, %v2940, 0
  %v2949 = vsel %vm2944, %v2941, 0
  %2951 = vmatprep.subr.mxu0 0.0
  %2952 = vmatpush1.msra.mxu0 %v2908
  %2953 = vmatprep.subr.mxu0 0.0
  %2954 = vmatpush1.msra.mxu0 %v2909
  %2955 = vmatprep.subr.mxu0 0.0
  %2956 = vmatpush1.msra.mxu0 %v2910
  %2957 = vmatprep.subr.mxu0 0.0
  %2958 = vmatpush1.msra.mxu0 %v2911
  %2959 = vmatprep.subr.mxu0 0.0
  %2960 = vmatpush1.msra.mxu0 %v2912
  %2961 = vmatprep.subr.mxu0 0.0
  %2962 = vmatpush1.msra.mxu0 %v2913
  %2963 = vmatprep.subr.mxu0 0.0
  %2964 = vmatpush1.msra.mxu0 %v2914
  %2965 = vmatprep.subr.mxu0 0.0
  %2966 = vmatpush1.msra.mxu0 %v2915
  %2967 = vmatprep.subr.mxu0 0.0
  %2968 = vmatpush1.msra.mxu0 0.0
  %2969 = vmatprep.subr.mxu0 0.0
  %2970 = vmatpush1.msra.mxu0 0.0
  %2971 = vmatprep.subr.mxu0 0.0
  %2972 = vmatpush1.msra.mxu0 0.0
  %2973 = vmatprep.subr.mxu0 0.0
  %2974 = vmatpush1.msra.mxu0 0.0
  %2975 = vmatprep.subr.mxu0 0.0
  %2976 = vmatpush1.msra.mxu0 0.0
  %2977 = vmatprep.subr.mxu0 0.0
  %2978 = vmatpush1.msra.mxu0 0.0
  %2979 = vmatprep.subr.mxu0 0.0
  %2980 = vmatpush1.msra.mxu0 0.0
  %2981 = vmatprep.subr.mxu0 0.0
  %2982 = vmatpush1.msra.mxu0 0.0
  %2983 = vmatprep.subr.mxu0 0.0
  %2984 = vmatpush1.msra.mxu0 0.0
  %2985 = vmatprep.subr.mxu0 0.0
  %2986 = vmatpush1.msra.mxu0 0.0
  %2987 = vmatprep.subr.mxu0 0.0
  %2988 = vmatpush1.msra.mxu0 0.0
  %2989 = vmatprep.subr.mxu0 0.0
  %2990 = vmatpush1.msra.mxu0 0.0
  %2991 = vmatprep.subr.mxu0 0.0
  %2992 = vmatpush1.msra.mxu0 0.0
  %2993 = vmatprep.subr.mxu0 0.0
  %2994 = vmatpush1.msra.mxu0 0.0
  %2995 = vmatprep.subr.mxu0 0.0
  %2996 = vmatpush1.msra.mxu0 0.0
  %2997 = vmatprep.subr.mxu0 0.0
  %2998 = vmatpush1.msra.mxu0 0.0
  %2999 = vmatprep.subr.mxu0 0.0
  %3000 = vmatpush1.msra.mxu0 0.0
  %3001 = vmatprep.subr.mxu0 0.0
  %3002 = vmatpush1.msra.mxu0 0.0
  %3003 = vmatprep.subr.mxu0 0.0
  %3004 = vmatpush1.msra.mxu0 0.0
  %3005 = vmatprep.subr.mxu0 0.0
  %3006 = vmatpush1.msra.mxu0 0.0
  %3007 = vmatprep.subr.mxu0 0.0
  %3008 = vmatpush1.msra.mxu0 0.0
  %3009 = vmatprep.subr.mxu0 0.0
  %3010 = vmatpush1.msra.mxu0 0.0
  %3011 = vmatprep.subr.mxu0 0.0
  %3012 = vmatpush1.msra.mxu0 0.0
  %3013 = vmatprep.subr.mxu0 0.0
  %3014 = vmatpush1.msra.mxu0 0.0
  %3015 = vmatprep.mubr.f32.mxu0 0.0
  %3016 = vmatmul.mubr.f32.gmra.mrb[0].mxu0 %v2946
  %v3017 = vpop.f32.mrb[0].mxu0
  %v3018 = vadd.f32 %v2942, %v3017
  %v3019 = vpop.f32.mrb[0].mxu0
  %3020 = vmatprep.mubr.f32.mxu0 0.0
  %3021 = vmatmul.mubr.f32.gmra.mrb[0].mxu0 %v2949
  %v3022 = vpop.f32.mrb[0].mxu0
  %v3023 = vadd.f32 %v2943, %v3022
  %v3024 = vpop.f32.mrb[0].mxu0
  %3025 = vdwg.mxu0
  %3026 = vmatprep.subr.mxu0 0.0
  %3027 = vmatpush1.msra.mxu0 %v2916
  %3028 = vmatprep.subr.mxu0 0.0
  %3029 = vmatpush1.msra.mxu0 %v2917
  %3030 = vmatprep.subr.mxu0 0.0
  %3031 = vmatpush1.msra.mxu0 %v2918
  %3032 = vmatprep.subr.mxu0 0.0
  %3033 = vmatpush1.msra.mxu0 %v2919
  %3034 = vmatprep.subr.mxu0 0.0
  %3035 = vmatpush1.msra.mxu0 %v2920
  %3036 = vmatprep.subr.mxu0 0.0
  %3037 = vmatpush1.msra.mxu0 %v2921
  %3038 = vmatprep.subr.mxu0 0.0
  %3039 = vmatpush1.msra.mxu0 %v2922
  %3040 = vmatprep.subr.mxu0 0.0
  %3041 = vmatpush1.msra.mxu0 %v2923
  %3042 = vmatprep.subr.mxu0 0.0
  %3043 = vmatpush1.msra.mxu0 0.0
  %3044 = vmatprep.subr.mxu0 0.0
  %3045 = vmatpush1.msra.mxu0 0.0
  %3046 = vmatprep.subr.mxu0 0.0
  %3047 = vmatpush1.msra.mxu0 0.0
  %3048 = vmatprep.subr.mxu0 0.0
  %3049 = vmatpush1.msra.mxu0 0.0
  %3050 = vmatprep.subr.mxu0 0.0
  %3051 = vmatpush1.msra.mxu0 0.0
  %3052 = vmatprep.subr.mxu0 0.0
  %3053 = vmatpush1.msra.mxu0 0.0
  %3054 = vmatprep.subr.mxu0 0.0
  %3055 = vmatpush1.msra.mxu0 0.0
  %3056 = vmatprep.subr.mxu0 0.0
  %3057 = vmatpush1.msra.mxu0 0.0
  %3058 = vmatprep.subr.mxu0 0.0
  %3059 = vmatpush1.msra.mxu0 0.0
  %3060 = vmatprep.subr.mxu0 0.0
  %3061 = vmatpush1.msra.mxu0 0.0
  %3062 = vmatprep.subr.mxu0 0.0
  %3063 = vmatpush1.msra.mxu0 0.0
  %3064 = vmatprep.subr.mxu0 0.0
  %3065 = vmatpush1.msra.mxu0 0.0
  %3066 = vmatprep.subr.mxu0 0.0
  %3067 = vmatpush1.msra.mxu0 0.0
  %3068 = vmatprep.subr.mxu0 0.0
  %3069 = vmatpush1.msra.mxu0 0.0
  %3070 = vmatprep.subr.mxu0 0.0
  %3071 = vmatpush1.msra.mxu0 0.0
  %3072 = vmatprep.subr.mxu0 0.0
  %3073 = vmatpush1.msra.mxu0 0.0
  %3074 = vmatprep.subr.mxu0 0.0
  %3075 = vmatpush1.msra.mxu0 0.0
  %3076 = vmatprep.subr.mxu0 0.0
  %3077 = vmatpush1.msra.mxu0 0.0
  %3078 = vmatprep.subr.mxu0 0.0
  %3079 = vmatpush1.msra.mxu0 0.0
  %3080 = vmatprep.subr.mxu0 0.0
  %3081 = vmatpush1.msra.mxu0 0.0
  %3082 = vmatprep.subr.mxu0 0.0
  %3083 = vmatpush1.msra.mxu0 0.0
  %3084 = vmatprep.subr.mxu0 0.0
  %3085 = vmatpush1.msra.mxu0 0.0
  %3086 = vmatprep.subr.mxu0 0.0
  %3087 = vmatpush1.msra.mxu0 0.0
  %3088 = vmatprep.subr.mxu0 0.0
  %3089 = vmatpush1.msra.mxu0 0.0
  %3090 = vmatprep.mubr.f32.mxu0 0.0
  %3091 = vmatmul.mubr.f32.gmra.mrb[0].mxu0 %v2946
  %v3092 = vpop.f32.mrb[0].mxu0
  %v3093 = vadd.f32 %v2942, %v3092
  %v3094 = vpop.f32.mrb[0].mxu0
  %3095 = vmatprep.mubr.f32.mxu0 0.0
  %3096 = vmatmul.mubr.f32.gmra.mrb[0].mxu0 %v2949
  %v3097 = vpop.f32.mrb[0].mxu0
  %v3098 = vadd.f32 %v2943, %v3097
  %v3099 = vpop.f32.mrb[0].mxu0
  %3100 = vdwg.mxu0
  %3101 = vmatprep.subr.mxu0 0.0
  %3102 = vmatpush1.msra.mxu0 %v2924
  %3103 = vmatprep.subr.mxu0 0.0
  %3104 = vmatpush1.msra.mxu0 %v2925
  %3105 = vmatprep.subr.mxu0 0.0
  %3106 = vmatpush1.msra.mxu0 %v2926
  %3107 = vmatprep.subr.mxu0 0.0
  %3108 = vmatpush1.msra.mxu0 %v2927
  %3109 = vmatprep.subr.mxu0 0.0
  %3110 = vmatpush1.msra.mxu0 %v2928
  %3111 = vmatprep.subr.mxu0 0.0
  %3112 = vmatpush1.msra.mxu0 %v2929
  %3113 = vmatprep.subr.mxu0 0.0
  %3114 = vmatpush1.msra.mxu0 %v2930
  %3115 = vmatprep.subr.mxu0 0.0
  %3116 = vmatpush1.msra.mxu0 %v2931
  %3117 = vmatprep.subr.mxu0 0.0
  %3118 = vmatpush1.msra.mxu0 0.0
  %3119 = vmatprep.subr.mxu0 0.0
  %3120 = vmatpush1.msra.mxu0 0.0
  %3121 = vmatprep.subr.mxu0 0.0
  %3122 = vmatpush1.msra.mxu0 0.0
  %3123 = vmatprep.subr.mxu0 0.0
  %3124 = vmatpush1.msra.mxu0 0.0
  %3125 = vmatprep.subr.mxu0 0.0
  %3126 = vmatpush1.msra.mxu0 0.0
  %3127 = vmatprep.subr.mxu0 0.0
  %3128 = vmatpush1.msra.mxu0 0.0
  %3129 = vmatprep.subr.mxu0 0.0
  %3130 = vmatpush1.msra.mxu0 0.0
  %3131 = vmatprep.subr.mxu0 0.0
  %3132 = vmatpush1.msra.mxu0 0.0
  %3133 = vmatprep.subr.mxu0 0.0
  %3134 = vmatpush1.msra.mxu0 0.0
  %3135 = vmatprep.subr.mxu0 0.0
  %3136 = vmatpush1.msra.mxu0 0.0
  %3137 = vmatprep.subr.mxu0 0.0
  %3138 = vmatpush1.msra.mxu0 0.0
  %3139 = vmatprep.subr.mxu0 0.0
  %3140 = vmatpush1.msra.mxu0 0.0
  %3141 = vmatprep.subr.mxu0 0.0
  %3142 = vmatpush1.msra.mxu0 0.0
  %3143 = vmatprep.subr.mxu0 0.0
  %3144 = vmatpush1.msra.mxu0 0.0
  %3145 = vmatprep.subr.mxu0 0.0
  %3146 = vmatpush1.msra.mxu0 0.0
  %3147 = vmatprep.subr.mxu0 0.0
  %3148 = vmatpush1.msra.mxu0 0.0
  %3149 = vmatprep.subr.mxu0 0.0
  %3150 = vmatpush1.msra.mxu0 0.0
  %3151 = vmatprep.subr.mxu0 0.0
  %3152 = vmatpush1.msra.mxu0 0.0
  %3153 = vmatprep.subr.mxu0 0.0
  %3154 = vmatpush1.msra.mxu0 0.0
  %3155 = vmatprep.subr.mxu0 0.0
  %3156 = vmatpush1.msra.mxu0 0.0
  %3157 = vmatprep.subr.mxu0 0.0
  %3158 = vmatpush1.msra.mxu0 0.0
  %3159 = vmatprep.subr.mxu0 0.0
  %3160 = vmatpush1.msra.mxu0 0.0
  %3161 = vmatprep.subr.mxu0 0.0
  %3162 = vmatpush1.msra.mxu0 0.0
  %3163 = vmatprep.subr.mxu0 0.0
  %3164 = vmatpush1.msra.mxu0 0.0
  %3165 = vmatprep.mubr.f32.mxu0 0.0
  %3166 = vmatmul.mubr.f32.gmra.mrb[0].mxu0 %v2946
  %v3167 = vpop.f32.mrb[0].mxu0
  %v3168 = vadd.f32 %v2942, %v3167
  %v3169 = vpop.f32.mrb[0].mxu0
  %3170 = vmatprep.mubr.f32.mxu0 0.0
  %3171 = vmatmul.mubr.f32.gmra.mrb[0].mxu0 %v2949
  %v3172 = vpop.f32.mrb[0].mxu0
  %v3173 = vadd.f32 %v2943, %v3172
  %v3174 = vpop.f32.mrb[0].mxu0
  %3175 = vdwg.mxu0
  %3176 = vmatprep.subr.mxu0 0.0
  %3177 = vmatpush1.msra.mxu0 %v2932
  %3178 = vmatprep.subr.mxu0 0.0
  %3179 = vmatpush1.msra.mxu0 %v2933
  %3180 = vmatprep.subr.mxu0 0.0
  %3181 = vmatpush1.msra.mxu0 %v2934
  %3182 = vmatprep.subr.mxu0 0.0
  %3183 = vmatpush1.msra.mxu0 %v2935
  %3184 = vmatprep.subr.mxu0 0.0
  %3185 = vmatpush1.msra.mxu0 %v2936
  %3186 = vmatprep.subr.mxu0 0.0
  %3187 = vmatpush1.msra.mxu0 %v2937
  %3188 = vmatprep.subr.mxu0 0.0
  %3189 = vmatpush1.msra.mxu0 %v2938
  %3190 = vmatprep.subr.mxu0 0.0
  %3191 = vmatpush1.msra.mxu0 %v2939
  %3192 = vmatprep.subr.mxu0 0.0
  %3193 = vmatpush1.msra.mxu0 0.0
  %3194 = vmatprep.subr.mxu0 0.0
  %3195 = vmatpush1.msra.mxu0 0.0
  %3196 = vmatprep.subr.mxu0 0.0
  %3197 = vmatpush1.msra.mxu0 0.0
  %3198 = vmatprep.subr.mxu0 0.0
  %3199 = vmatpush1.msra.mxu0 0.0
  %3200 = vmatprep.subr.mxu0 0.0
  %3201 = vmatpush1.msra.mxu0 0.0
  %3202 = vmatprep.subr.mxu0 0.0
  %3203 = vmatpush1.msra.mxu0 0.0
  %3204 = vmatprep.subr.mxu0 0.0
  %3205 = vmatpush1.msra.mxu0 0.0
  %3206 = vmatprep.subr.mxu0 0.0
  %3207 = vmatpush1.msra.mxu0 0.0
  %3208 = vmatprep.subr.mxu0 0.0
  %3209 = vmatpush1.msra.mxu0 0.0
  %3210 = vmatprep.subr.mxu0 0.0
  %3211 = vmatpush1.msra.mxu0 0.0
  %3212 = vmatprep.subr.mxu0 0.0
  %3213 = vmatpush1.msra.mxu0 0.0
  %3214 = vmatprep.subr.mxu0 0.0
  %3215 = vmatpush1.msra.mxu0 0.0
  %3216 = vmatprep.subr.mxu0 0.0
  %3217 = vmatpush1.msra.mxu0 0.0
  %3218 = vmatprep.subr.mxu0 0.0
  %3219 = vmatpush1.msra.mxu0 0.0
  %3220 = vmatprep.subr.mxu0 0.0
  %3221 = vmatpush1.msra.mxu0 0.0
  %3222 = vmatprep.subr.mxu0 0.0
  %3223 = vmatpush1.msra.mxu0 0.0
  %3224 = vmatprep.subr.mxu0 0.0
  %3225 = vmatpush1.msra.mxu0 0.0
  %3226 = vmatprep.subr.mxu0 0.0
  %3227 = vmatpush1.msra.mxu0 0.0
  %3228 = vmatprep.subr.mxu0 0.0
  %3229 = vmatpush1.msra.mxu0 0.0
  %3230 = vmatprep.subr.mxu0 0.0
  %3231 = vmatpush1.msra.mxu0 0.0
  %3232 = vmatprep.subr.mxu0 0.0
  %3233 = vmatpush1.msra.mxu0 0.0
  %3234 = vmatprep.subr.mxu0 0.0
  %3235 = vmatpush1.msra.mxu0 0.0
  %3236 = vmatprep.subr.mxu0 0.0
  %3237 = vmatpush1.msra.mxu0 0.0
  %3238 = vmatprep.subr.mxu0 0.0
  %3239 = vmatpush1.msra.mxu0 0.0
  %3240 = vmatprep.mubr.f32.mxu0 0.0
  %3241 = vmatmul.mubr.f32.gmra.mrb[0].mxu0 %v2946
  %v3242 = vpop.f32.mrb[0].mxu0
  %v3243 = vadd.f32 %v2942, %v3242
  %v3244 = vpop.f32.mrb[0].mxu0
  %3245 = vmatprep.mubr.f32.mxu0 0.0
  %3246 = vmatmul.mubr.f32.gmra.mrb[0].mxu0 %v2949
  %v3247 = vpop.f32.mrb[0].mxu0
  %v3248 = vadd.f32 %v2943, %v3247
  %v3249 = vpop.f32.mrb[0].mxu0
  %3250 = vdwg.mxu0
  %v3251 = vld [vmem:[%s4 + $0x10] sm:$0xff]
  %v3252 = vld [vmem:[%s4 + $0x18] sm:$0xff]
  %v3253 = vld [vmem:[%s4 + $0x20] sm:$0xff]
  %v3254 = vld [vmem:[%s4 + $0x28] sm:$0xff]
  %v3255 = vsel %vm527, %v3018, 0.0
  %v3256 = vsel %vm527, %v3023, 0.0
  %v3257 = vadd.f32 %v3255, %v3256
  %v3258 = vrot.slane %v3257, 4
  %v3259 = vadd.f32 %v3257, %v3258
  %v3260 = vrot.slane %v3259, 2
  %v3261 = vadd.f32 %v3259, %v3260
  %v3262 = vrot.slane %v3261, 1
  %v3263 = vadd.f32 %v3261, %v3262
  %v3264 = vsel %vm527, %v3093, 0.0
  %v3265 = vsel %vm527, %v3098, 0.0
  %v3266 = vadd.f32 %v3264, %v3265
  %v3267 = vrot.slane %v3266, 4
  %v3268 = vadd.f32 %v3266, %v3267
  %v3269 = vrot.slane %v3268, 2
  %v3270 = vadd.f32 %v3268, %v3269
  %v3271 = vrot.slane %v3270, 1
  %v3272 = vadd.f32 %v3270, %v3271
  %v3273 = vsel %vm527, %v3168, 0.0
  %v3274 = vsel %vm527, %v3173, 0.0
  %v3275 = vadd.f32 %v3273, %v3274
  %v3276 = vrot.slane %v3275, 4
  %v3277 = vadd.f32 %v3275, %v3276
  %v3278 = vrot.slane %v3277, 2
  %v3279 = vadd.f32 %v3277, %v3278
  %v3280 = vrot.slane %v3279, 1
  %v3281 = vadd.f32 %v3279, %v3280
  %v3282 = vsel %vm527, %v3243, 0.0
  %v3283 = vsel %vm527, %v3248, 0.0
  %v3284 = vadd.f32 %v3282, %v3283
  %v3285 = vrot.slane %v3284, 4
  %v3286 = vadd.f32 %v3284, %v3285
  %v3287 = vrot.slane %v3286, 2
  %v3288 = vadd.f32 %v3286, %v3287
  %v3289 = vrot.slane %v3288, 1
  %v3290 = vadd.f32 %v3288, %v3289
  %v3291 = vrcp.pop 16.0
  %v3292 = vmul.f32 %v3263, %v3291
  %v3293 = vmul.f32 %v3272, %v3291
  %v3294 = vmul.f32 %v3281, %v3291
  %v3295 = vmul.f32 %v3290, %v3291
  %v3296 = vsub.f32 %v3018, %v3292
  %v3297 = vsub.f32 %v3023, %v3292
  %v3298 = vsub.f32 %v3093, %v3293
  %v3299 = vsub.f32 %v3098, %v3293
  %v3300 = vsub.f32 %v3168, %v3294
  %v3301 = vsub.f32 %v3173, %v3294
  %v3302 = vsub.f32 %v3243, %v3295
  %v3303 = vsub.f32 %v3248, %v3295
  %v3304 = vmul.f32 %v3296, %v3296
  %v3305 = vmul.f32 %v3297, %v3297
  %v3306 = vmul.f32 %v3298, %v3298
  %v3307 = vmul.f32 %v3299, %v3299
  %v3308 = vmul.f32 %v3300, %v3300
  %v3309 = vmul.f32 %v3301, %v3301
  %v3310 = vmul.f32 %v3302, %v3302
  %v3311 = vmul.f32 %v3303, %v3303
  %v3312 = vsel %vm527, %v3304, 0.0
  %v3313 = vsel %vm527, %v3305, 0.0
  %v3314 = vadd.f32 %v3312, %v3313
  %v3315 = vrot.slane %v3314, 4
  %v3316 = vadd.f32 %v3314, %v3315
  %v3317 = vrot.slane %v3316, 2
  %v3318 = vadd.f32 %v3316, %v3317
  %v3319 = vrot.slane %v3318, 1
  %v3320 = vadd.f32 %v3318, %v3319
  %v3321 = vsel %vm527, %v3306, 0.0
  %v3322 = vsel %vm527, %v3307, 0.0
  %v3323 = vadd.f32 %v3321, %v3322
  %v3324 = vrot.slane %v3323, 4
  %v3325 = vadd.f32 %v3323, %v3324
  %v3326 = vrot.slane %v3325, 2
  %v3327 = vadd.f32 %v3325, %v3326
  %v3328 = vrot.slane %v3327, 1
  %v3329 = vadd.f32 %v3327, %v3328
  %v3330 = vsel %vm527, %v3308, 0.0
  %v3331 = vsel %vm527, %v3309, 0.0
  %v3332 = vadd.f32 %v3330, %v3331
  %v3333 = vrot.slane %v3332, 4
  %v3334 = vadd.f32 %v3332, %v3333
  %v3335 = vrot.slane %v3334, 2
  %v3336 = vadd.f32 %v3334, %v3335
  %v3337 = vrot.slane %v3336, 1
  %v3338 = vadd.f32 %v3336, %v3337
  %v3339 = vsel %vm527, %v3310, 0.0
  %v3340 = vsel %vm527, %v3311, 0.0
  %v3341 = vadd.f32 %v3339, %v3340
  %v3342 = vrot.slane %v3341, 4
  %v3343 = vadd.f32 %v3341, %v3342
  %v3344 = vrot.slane %v3343, 2
  %v3345 = vadd.f32 %v3343, %v3344
  %v3346 = vrot.slane %v3345, 1
  %v3347 = vadd.f32 %v3345, %v3346
  %v3348 = vmul.f32 %v3320, %v3291
  %v3349 = vmul.f32 %v3329, %v3291
  %v3350 = vmul.f32 %v3338, %v3291
  %v3351 = vmul.f32 %v3347, %v3291
  %v3352 = vadd.f32 %v3348, 1e-05
  %v3353 = vadd.f32 %v3349, 1e-05
  %v3354 = vadd.f32 %v3350, 1e-05
  %v3355 = vadd.f32 %v3351, 1e-05
  %v3356 = vrsqrt.pop %v3352
  %v3357 = vrsqrt.pop %v3353
  %v3358 = vrsqrt.pop %v3354
  %v3359 = vrsqrt.pop %v3355
  %v3360 = vmul.f32 %v3296, %v3356
  %v3361 = vmul.f32 %v3297, %v3356
  %v3362 = vmul.f32 %v3298, %v3357
  %v3363 = vmul.f32 %v3299, %v3357
  %v3364 = vmul.f32 %v3300, %v3358
  %v3365 = vmul.f32 %v3301, %v3358
  %v3366 = vmul.f32 %v3302, %v3359
  %v3367 = vmul.f32 %v3303, %v3359
  %v3368 = vmul.f32 %v3360, %v3251
  %v3369 = vmul.f32 %v3361, %v3252
  %v3370 = vmul.f32 %v3362, %v3251
  %v3371 = vmul.f32 %v3363, %v3252
  %v3372 = vmul.f32 %v3364, %v3251
  %v3373 = vmul.f32 %v3365, %v3252
  %v3374 = vmul.f32 %v3366, %v3251
  %v3375 = vmul.f32 %v3367, %v3252
  %v3376 = vadd.f32 %v3368, %v3253
  %v3377 = vadd.f32 %v3369, %v3254
  %v3378 = vadd.f32 %v3370, %v3253
  %v3379 = vadd.f32 %v3371, %v3254
  %v3380 = vadd.f32 %v3372, %v3253
  %v3381 = vadd.f32 %v3373, %v3254
  %v3382 = vadd.f32 %v3374, %v3253
  %v3383 = vadd.f32 %v3375, %v3254
  %v3384 = vmax.f32 %v3376, 0.0
  %v3385 = vmax.f32 %v3377, 0.0
  %v3386 = vmax.f32 %v3378, 0.0
  %v3387 = vmax.f32 %v3379, 0.0
  %v3388 = vmax.f32 %v3380, 0.0
  %v3389 = vmax.f32 %v3381, 0.0
  %v3390 = vmax.f32 %v3382, 0.0
  %v3391 = vmax.f32 %v3383, 0.0
  %v3392 = vld [vmem:[%s2 + $0x20] sm:$0xff]
  %v3393 = vld [vmem:[%s3 + $0x38] sm:$0x1]
  %v3394 = vlaneseq
  %v3395 = vshrl.u32 %v3394, 7
  %v3396 = vsub.s32 0, %v3395
  %v3397 = vrot.slane %v3393, %v3396
  %v3399 = vsel %vm527, %v3384, 0
  %v3402 = vsel %vm527, %v3385, 0
  %v3405 = vsel %vm527, %v3386, 0
  %v3408 = vsel %vm527, %v3387, 0
  %v3411 = vsel %vm527, %v3388, 0
  %v3414 = vsel %vm527, %v3389, 0
  %v3417 = vsel %vm527, %v3390, 0
  %v3420 = vsel %vm527, %v3391, 0
  %3422 = vmatprep.subr.mxu0 0.0
  %3423 = vmatpush1.msra.mxu0 %v3392
  %3424 = vmatprep.subr.mxu0 0.0
  %3425 = vmatpush1.msra.mxu0 0.0
  %3426 = vmatprep.subr.mxu0 0.0
  %3427 = vmatpush1.msra.mxu0 0.0
  %3428 = vmatprep.subr.mxu0 0.0
  %3429 = vmatpush1.msra.mxu0 0.0
  %3430 = vmatprep.subr.mxu0 0.0
  %3431 = vmatpush1.msra.mxu0 0.0
  %3432 = vmatprep.subr.mxu0 0.0
  %3433 = vmatpush1.msra.mxu0 0.0
  %3434 = vmatprep.subr.mxu0 0.0
  %3435 = vmatpush1.msra.mxu0 0.0
  %3436 = vmatprep.subr.mxu0 0.0
  %3437 = vmatpush1.msra.mxu0 0.0
  %3438 = vmatprep.subr.mxu0 0.0
  %3439 = vmatpush1.msra.mxu0 0.0
  %3440 = vmatprep.subr.mxu0 0.0
  %3441 = vmatpush1.msra.mxu0 0.0
  %3442 = vmatprep.subr.mxu0 0.0
  %3443 = vmatpush1.msra.mxu0 0.0
  %3444 = vmatprep.subr.mxu0 0.0
  %3445 = vmatpush1.msra.mxu0 0.0
  %3446 = vmatprep.subr.mxu0 0.0
  %3447 = vmatpush1.msra.mxu0 0.0
  %3448 = vmatprep.subr.mxu0 0.0
  %3449 = vmatpush1.msra.mxu0 0.0
  %3450 = vmatprep.subr.mxu0 0.0
  %3451 = vmatpush1.msra.mxu0 0.0
  %3452 = vmatprep.subr.mxu0 0.0
  %3453 = vmatpush1.msra.mxu0 0.0
  %3454 = vmatprep.subr.mxu0 0.0
  %3455 = vmatpush1.msra.mxu0 0.0
  %3456 = vmatprep.subr.mxu0 0.0
  %3457 = vmatpush1.msra.mxu0 0.0
  %3458 = vmatprep.subr.mxu0 0.0
  %3459 = vmatpush1.msra.mxu0 0.0
  %3460 = vmatprep.subr.mxu0 0.0
  %3461 = vmatpush1.msra.mxu0 0.0
  %3462 = vmatprep.subr.mxu0 0.0
  %3463 = vmatpush1.msra.mxu0 0.0
  %3464 = vmatprep.subr.mxu0 0.0
  %3465 = vmatpush1.msra.mxu0 0.0
  %3466 = vmatprep.subr.mxu0 0.0
  %3467 = vmatpush1.msra.mxu0 0.0
  %3468 = vmatprep.subr.mxu0 0.0
  %3469 = vmatpush1.msra.mxu0 0.0
  %3470 = vmatprep.subr.mxu0 0.0
  %3471 = vmatpush1.msra.mxu0 0.0
  %3472 = vmatprep.subr.mxu0 0.0
  %3473 = vmatpush1.msra.mxu0 0.0
  %3474 = vmatprep.subr.mxu0 0.0
  %3475 = vmatpush1.msra.mxu0 0.0
  %3476 = vmatprep.subr.mxu0 0.0
  %3477 = vmatpush1.msra.mxu0 0.0
  %3478 = vmatprep.subr.mxu0 0.0
  %3479 = vmatpush1.msra.mxu0 0.0
  %3480 = vmatprep.subr.mxu0 0.0
  %3481 = vmatpush1.msra.mxu0 0.0
  %3482 = vmatprep.subr.mxu0 0.0
  %3483 = vmatpush1.msra.mxu0 0.0
  %3484 = vmatprep.subr.mxu0 0.0
  %3485 = vmatpush1.msra.mxu0 0.0
  %3486 = vmatprep.mubr.f32.mxu0 0.0
  %3487 = vmatmul.mubr.f32.gmra.mrb[0].mxu0 %v3399
  %v3488 = vpop.f32.mrb[0].mxu0
  %v3489 = vadd.f32 %v3397, %v3488
  %v3490 = vpop.f32.mrb[0].mxu0
  %3491 = vmatprep.mubr.f32.mxu0 0.0
  %3492 = vmatmul.mubr.f32.gmra.mrb[0].mxu0 %v3402
  %v3493 = vpop.f32.mrb[0].mxu0
  %v3494 = vadd.f32 %v3397, %v3493
  %v3495 = vpop.f32.mrb[0].mxu0
  %3496 = vmatprep.mubr.f32.mxu0 0.0
  %3497 = vmatmul.mubr.f32.gmra.mrb[0].mxu0 %v3405
  %v3498 = vpop.f32.mrb[0].mxu0
  %v3499 = vadd.f32 %v3397, %v3498
  %v3500 = vpop.f32.mrb[0].mxu0
  %3501 = vmatprep.mubr.f32.mxu0 0.0
  %3502 = vmatmul.mubr.f32.gmra.mrb[0].mxu0 %v3408
  %v3503 = vpop.f32.mrb[0].mxu0
  %v3504 = vadd.f32 %v3397, %v3503
  %v3505 = vpop.f32.mrb[0].mxu0
  %3506 = vmatprep.mubr.f32.mxu0 0.0
  %3507 = vmatmul.mubr.f32.gmra.mrb[0].mxu0 %v3411
  %v3508 = vpop.f32.mrb[0].mxu0
  %v3509 = vadd.f32 %v3397, %v3508
  %v3510 = vpop.f32.mrb[0].mxu0
  %3511 = vmatprep.mubr.f32.mxu0 0.0
  %3512 = vmatmul.mubr.f32.gmra.mrb[0].mxu0 %v3414
  %v3513 = vpop.f32.mrb[0].mxu0
  %v3514 = vadd.f32 %v3397, %v3513
  %v3515 = vpop.f32.mrb[0].mxu0
  %3516 = vmatprep.mubr.f32.mxu0 0.0
  %3517 = vmatmul.mubr.f32.gmra.mrb[0].mxu0 %v3417
  %v3518 = vpop.f32.mrb[0].mxu0
  %v3519 = vadd.f32 %v3397, %v3518
  %v3520 = vpop.f32.mrb[0].mxu0
  %3521 = vmatprep.mubr.f32.mxu0 0.0
  %3522 = vmatmul.mubr.f32.gmra.mrb[0].mxu0 %v3420
  %v3523 = vpop.f32.mrb[0].mxu0
  %v3524 = vadd.f32 %v3397, %v3523
  %v3525 = vpop.f32.mrb[0].mxu0
  %3526 = vdwg.mxu0
  %v3527 = vld [vmem:[%s3 + $0x40] sm:$0x1]
  %v3528 = vld [vmem:[%s3 + $0x48] sm:$0x1]
  %vm3529 = vcmask 15360
  %v3530 = vsel %vm3529, %v3489, 0.0
  %3531 = vadd.xlane.f32.xlu0 %v3530
  %v3532 = vpop.xlane.xlu0 %3531
  %v3533 = vsel %vm3529, %v3494, 0.0
  %3534 = vadd.xlane.f32.xlu0 %v3533
  %v3535 = vpop.xlane.xlu0 %3534
  %v3536 = vsel %vm3529, %v3499, 0.0
  %3537 = vadd.xlane.f32.xlu0 %v3536
  %v3538 = vpop.xlane.xlu0 %3537
  %v3539 = vsel %vm3529, %v3504, 0.0
  %3540 = vadd.xlane.f32.xlu0 %v3539
  %v3541 = vpop.xlane.xlu0 %3540
  %v3542 = vsel %vm3529, %v3509, 0.0
  %3543 = vadd.xlane.f32.xlu0 %v3542
  %v3544 = vpop.xlane.xlu0 %3543
  %v3545 = vsel %vm3529, %v3514, 0.0
  %3546 = vadd.xlane.f32.xlu0 %v3545
  %v3547 = vpop.xlane.xlu0 %3546
  %v3548 = vsel %vm3529, %v3519, 0.0
  %3549 = vadd.xlane.f32.xlu0 %v3548
  %v3550 = vpop.xlane.xlu0 %3549
  %v3551 = vsel %vm3529, %v3524, 0.0
  %3552 = vadd.xlane.f32.xlu0 %v3551
  %v3553 = vpop.xlane.xlu0 %3552
  %v3554 = vrcp.pop 2.0
  %v3555 = vmul.f32 %v3532, %v3554
  %v3556 = vmul.f32 %v3535, %v3554
  %v3557 = vmul.f32 %v3538, %v3554
  %v3558 = vmul.f32 %v3541, %v3554
  %v3559 = vmul.f32 %v3544, %v3554
  %v3560 = vmul.f32 %v3547, %v3554
  %v3561 = vmul.f32 %v3550, %v3554
  %v3562 = vmul.f32 %v3553, %v3554
  %v3563 = vsub.f32 %v3489, %v3555
  %v3564 = vsub.f32 %v3494, %v3556
  %v3565 = vsub.f32 %v3499, %v3557
  %v3566 = vsub.f32 %v3504, %v3558
  %v3567 = vsub.f32 %v3509, %v3559
  %v3568 = vsub.f32 %v3514, %v3560
  %v3569 = vsub.f32 %v3519, %v3561
  %v3570 = vsub.f32 %v3524, %v3562
  %v3571 = vmul.f32 %v3563, %v3563
  %v3572 = vmul.f32 %v3564, %v3564
  %v3573 = vmul.f32 %v3565, %v3565
  %v3574 = vmul.f32 %v3566, %v3566
  %v3575 = vmul.f32 %v3567, %v3567
  %v3576 = vmul.f32 %v3568, %v3568
  %v3577 = vmul.f32 %v3569, %v3569
  %v3578 = vmul.f32 %v3570, %v3570
  %v3579 = vsel %vm3529, %v3571, 0.0
  %3580 = vadd.xlane.f32.xlu0 %v3579
  %v3581 = vpop.xlane.xlu0 %3580
  %v3582 = vsel %vm3529, %v3572, 0.0
  %3583 = vadd.xlane.f32.xlu0 %v3582
  %v3584 = vpop.xlane.xlu0 %3583
  %v3585 = vsel %vm3529, %v3573, 0.0
  %3586 = vadd.xlane.f32.xlu0 %v3585
  %v3587 = vpop.xlane.xlu0 %3586
  %v3588 = vsel %vm3529, %v3574, 0.0
  %3589 = vadd.xlane.f32.xlu0 %v3588
  %v3590 = vpop.xlane.xlu0 %3589
  %v3591 = vsel %vm3529, %v3575, 0.0
  %3592 = vadd.xlane.f32.xlu0 %v3591
  %v3593 = vpop.xlane.xlu0 %3592
  %v3594 = vsel %vm3529, %v3576, 0.0
  %3595 = vadd.xlane.f32.xlu0 %v3594
  %v3596 = vpop.xlane.xlu0 %3595
  %v3597 = vsel %vm3529, %v3577, 0.0
  %3598 = vadd.xlane.f32.xlu0 %v3597
  %v3599 = vpop.xlane.xlu0 %3598
  %v3600 = vsel %vm3529, %v3578, 0.0
  %3601 = vadd.xlane.f32.xlu0 %v3600
  %v3602 = vpop.xlane.xlu0 %3601
  %v3603 = vmul.f32 %v3581, %v3554
  %v3604 = vmul.f32 %v3584, %v3554
  %v3605 = vmul.f32 %v3587, %v3554
  %v3606 = vmul.f32 %v3590, %v3554
  %v3607 = vmul.f32 %v3593, %v3554
  %v3608 = vmul.f32 %v3596, %v3554
  %v3609 = vmul.f32 %v3599, %v3554
  %v3610 = vmul.f32 %v3602, %v3554
  %v3611 = vadd.f32 %v3603, 1e-05
  %v3612 = vadd.f32 %v3604, 1e-05
  %v3613 = vadd.f32 %v3605, 1e-05
  %v3614 = vadd.f32 %v3606, 1e-05
  %v3615 = vadd.f32 %v3607, 1e-05
  %v3616 = vadd.f32 %v3608, 1e-05
  %v3617 = vadd.f32 %v3609, 1e-05
  %v3618 = vadd.f32 %v3610, 1e-05
  %v3619 = vrsqrt.pop %v3611
  %v3620 = vrsqrt.pop %v3612
  %v3621 = vrsqrt.pop %v3613
  %v3622 = vrsqrt.pop %v3614
  %v3623 = vrsqrt.pop %v3615
  %v3624 = vrsqrt.pop %v3616
  %v3625 = vrsqrt.pop %v3617
  %v3626 = vrsqrt.pop %v3618
  %v3627 = vmul.f32 %v3563, %v3619
  %v3628 = vmul.f32 %v3564, %v3620
  %v3629 = vmul.f32 %v3565, %v3621
  %v3630 = vmul.f32 %v3566, %v3622
  %v3631 = vmul.f32 %v3567, %v3623
  %v3632 = vmul.f32 %v3568, %v3624
  %v3633 = vmul.f32 %v3569, %v3625
  %v3634 = vmul.f32 %v3570, %v3626
  %v3635 = vlaneseq
  %v3636 = vshrl.u32 %v3635, 7
  %v3637 = vsub.s32 0, %v3636
  %v3638 = vrot.slane %v3527, %v3637
  %v3639 = vmul.f32 %v3627, %v3638
  %v3640 = vmul.f32 %v3628, %v3638
  %v3641 = vmul.f32 %v3629, %v3638
  %v3642 = vmul.f32 %v3630, %v3638
  %v3643 = vmul.f32 %v3631, %v3638
  %v3644 = vmul.f32 %v3632, %v3638
  %v3645 = vmul.f32 %v3633, %v3638
  %v3646 = vmul.f32 %v3634, %v3638
  %v3647 = vlaneseq
  %v3648 = vshrl.u32 %v3647, 7
  %v3649 = vsub.s32 0, %v3648
  %v3650 = vrot.slane %v3528, %v3649
  %v3651 = vadd.f32 %v3639, %v3650
  %v3652 = vadd.f32 %v3640, %v3650
  %v3653 = vadd.f32 %v3641, %v3650
  %v3654 = vadd.f32 %v3642, %v3650
  %v3655 = vadd.f32 %v3643, %v3650
  %v3656 = vadd.f32 %v3644, %v3650
  %v3657 = vadd.f32 %v3645, %v3650
  %v3658 = vadd.f32 %v3646, %v3650
  %v3659 = vmax.f32 %v3651, 0.0
  %v3660 = vmax.f32 %v3652, 0.0
  %v3661 = vmax.f32 %v3653, 0.0
  %v3662 = vmax.f32 %v3654, 0.0
  %v3663 = vmax.f32 %v3655, 0.0
  %v3664 = vmax.f32 %v3656, 0.0
  %v3665 = vmax.f32 %v3657, 0.0
  %v3666 = vmax.f32 %v3658, 0.0
  %v3667 = vld [vmem:[%s2 + $0x40] sm:$0xf]
  %v3668 = vld [vmem:[%s4 + $0x30] sm:$0xf]
  %vm3669 = vcmask 130048
  %v3671 = vsel %vm3669, %v3667, 0
  %3673 = vmatprep.subr.mxu0 0.0
  %3674 = vmatpush1.msra.mxu0 %v3659
  %3675 = vmatprep.subr.mxu0 0.0
  %3676 = vmatpush1.msra.mxu0 %v3660
  %3677 = vmatprep.subr.mxu0 0.0
  %3678 = vmatpush1.msra.mxu0 0.0
  %3679 = vmatprep.subr.mxu0 0.0
  %3680 = vmatpush1.msra.mxu0 0.0
  %3681 = vmatprep.subr.mxu0 0.0
  %3682 = vmatpush1.msra.mxu0 0.0
  %3683 = vmatprep.subr.mxu0 0.0
  %3684 = vmatpush1.msra.mxu0 0.0
  %3685 = vmatprep.subr.mxu0 0.0
  %3686 = vmatpush1.msra.mxu0 0.0
  %3687 = vmatprep.subr.mxu0 0.0
  %3688 = vmatpush1.msra.mxu0 0.0
  %3689 = vmatprep.subr.mxu0 0.0
  %3690 = vmatpush1.msra.mxu0 0.0
  %3691 = vmatprep.subr.mxu0 0.0
  %3692 = vmatpush1.msra.mxu0 0.0
  %3693 = vmatprep.subr.mxu0 0.0
  %3694 = vmatpush1.msra.mxu0 0.0
  %3695 = vmatprep.subr.mxu0 0.0
  %3696 = vmatpush1.msra.mxu0 0.0
  %3697 = vmatprep.subr.mxu0 0.0
  %3698 = vmatpush1.msra.mxu0 0.0
  %3699 = vmatprep.subr.mxu0 0.0
  %3700 = vmatpush1.msra.mxu0 0.0
  %3701 = vmatprep.subr.mxu0 0.0
  %3702 = vmatpush1.msra.mxu0 0.0
  %3703 = vmatprep.subr.mxu0 0.0
  %3704 = vmatpush1.msra.mxu0 0.0
  %3705 = vmatprep.subr.mxu0 0.0
  %3706 = vmatpush1.msra.mxu0 0.0
  %3707 = vmatprep.subr.mxu0 0.0
  %3708 = vmatpush1.msra.mxu0 0.0
  %3709 = vmatprep.subr.mxu0 0.0
  %3710 = vmatpush1.msra.mxu0 0.0
  %3711 = vmatprep.subr.mxu0 0.0
  %3712 = vmatpush1.msra.mxu0 0.0
  %3713 = vmatprep.subr.mxu0 0.0
  %3714 = vmatpush1.msra.mxu0 0.0
  %3715 = vmatprep.subr.mxu0 0.0
  %3716 = vmatpush1.msra.mxu0 0.0
  %3717 = vmatprep.subr.mxu0 0.0
  %3718 = vmatpush1.msra.mxu0 0.0
  %3719 = vmatprep.subr.mxu0 0.0
  %3720 = vmatpush1.msra.mxu0 0.0
  %3721 = vmatprep.subr.mxu0 0.0
  %3722 = vmatpush1.msra.mxu0 0.0
  %3723 = vmatprep.subr.mxu0 0.0
  %3724 = vmatpush1.msra.mxu0 0.0
  %3725 = vmatprep.subr.mxu0 0.0
  %3726 = vmatpush1.msra.mxu0 0.0
  %3727 = vmatprep.subr.mxu0 0.0
  %3728 = vmatpush1.msra.mxu0 0.0
  %3729 = vmatprep.subr.mxu0 0.0
  %3730 = vmatpush1.msra.mxu0 0.0
  %3731 = vmatprep.subr.mxu0 0.0
  %3732 = vmatpush1.msra.mxu0 0.0
  %3733 = vmatprep.subr.mxu0 0.0
  %3734 = vmatpush1.msra.mxu0 0.0
  %3735 = vmatprep.subr.mxu0 0.0
  %3736 = vmatpush1.msra.mxu0 0.0
  %3737 = vmatprep.mubr.f32.mxu0 0.0
  %3738 = vmatmul.mubr.f32.gmra.mrb[0].mxu0 %v3671
  %v3739 = vpop.f32.mrb[0].mxu0
  %v3740 = vadd.f32 %v3668, %v3739
  %v3741 = vpop.f32.mrb[0].mxu0
  %3742 = vdwg.mxu0
  %3743 = vmatprep.subr.mxu0 0.0
  %3744 = vmatpush1.msra.mxu0 %v3661
  %3745 = vmatprep.subr.mxu0 0.0
  %3746 = vmatpush1.msra.mxu0 %v3662
  %3747 = vmatprep.subr.mxu0 0.0
  %3748 = vmatpush1.msra.mxu0 0.0
  %3749 = vmatprep.subr.mxu0 0.0
  %3750 = vmatpush1.msra.mxu0 0.0
  %3751 = vmatprep.subr.mxu0 0.0
  %3752 = vmatpush1.msra.mxu0 0.0
  %3753 = vmatprep.subr.mxu0 0.0
  %3754 = vmatpush1.msra.mxu0 0.0
  %3755 = vmatprep.subr.mxu0 0.0
  %3756 = vmatpush1.msra.mxu0 0.0
  %3757 = vmatprep.subr.mxu0 0.0
  %3758 = vmatpush1.msra.mxu0 0.0
  %3759 = vmatprep.subr.mxu0 0.0
  %3760 = vmatpush1.msra.mxu0 0.0
  %3761 = vmatprep.subr.mxu0 0.0
  %3762 = vmatpush1.msra.mxu0 0.0
  %3763 = vmatprep.subr.mxu0 0.0
  %3764 = vmatpush1.msra.mxu0 0.0
  %3765 = vmatprep.subr.mxu0 0.0
  %3766 = vmatpush1.msra.mxu0 0.0
  %3767 = vmatprep.subr.mxu0 0.0
  %3768 = vmatpush1.msra.mxu0 0.0
  %3769 = vmatprep.subr.mxu0 0.0
  %3770 = vmatpush1.msra.mxu0 0.0
  %3771 = vmatprep.subr.mxu0 0.0
  %3772 = vmatpush1.msra.mxu0 0.0
  %3773 = vmatprep.subr.mxu0 0.0
  %3774 = vmatpush1.msra.mxu0 0.0
  %3775 = vmatprep.subr.mxu0 0.0
  %3776 = vmatpush1.msra.mxu0 0.0
  %3777 = vmatprep.subr.mxu0 0.0
  %3778 = vmatpush1.msra.mxu0 0.0
  %3779 = vmatprep.subr.mxu0 0.0
  %3780 = vmatpush1.msra.mxu0 0.0
  %3781 = vmatprep.subr.mxu0 0.0
  %3782 = vmatpush1.msra.mxu0 0.0
  %3783 = vmatprep.subr.mxu0 0.0
  %3784 = vmatpush1.msra.mxu0 0.0
  %3785 = vmatprep.subr.mxu0 0.0
  %3786 = vmatpush1.msra.mxu0 0.0
  %3787 = vmatprep.subr.mxu0 0.0
  %3788 = vmatpush1.msra.mxu0 0.0
  %3789 = vmatprep.subr.mxu0 0.0
  %3790 = vmatpush1.msra.mxu0 0.0
  %3791 = vmatprep.subr.mxu0 0.0
  %3792 = vmatpush1.msra.mxu0 0.0
  %3793 = vmatprep.subr.mxu0 0.0
  %3794 = vmatpush1.msra.mxu0 0.0
  %3795 = vmatprep.subr.mxu0 0.0
  %3796 = vmatpush1.msra.mxu0 0.0
  %3797 = vmatprep.subr.mxu0 0.0
  %3798 = vmatpush1.msra.mxu0 0.0
  %3799 = vmatprep.subr.mxu0 0.0
  %3800 = vmatpush1.msra.mxu0 0.0
  %3801 = vmatprep.subr.mxu0 0.0
  %3802 = vmatpush1.msra.mxu0 0.0
  %3803 = vmatprep.subr.mxu0 0.0
  %3804 = vmatpush1.msra.mxu0 0.0
  %3805 = vmatprep.subr.mxu0 0.0
  %3806 = vmatpush1.msra.mxu0 0.0
  %3807 = vmatprep.mubr.f32.mxu0 0.0
  %3808 = vmatmul.mubr.f32.gmra.mrb[0].mxu0 %v3671
  %v3809 = vpop.f32.mrb[0].mxu0
  %v3810 = vadd.f32 %v3668, %v3809
  %v3811 = vpop.f32.mrb[0].mxu0
  %3812 = vdwg.mxu0
  %3813 = vmatprep.subr.mxu0 0.0
  %3814 = vmatpush1.msra.mxu0 %v3663
  %3815 = vmatprep.subr.mxu0 0.0
  %3816 = vmatpush1.msra.mxu0 %v3664
  %3817 = vmatprep.subr.mxu0 0.0
  %3818 = vmatpush1.msra.mxu0 0.0
  %3819 = vmatprep.subr.mxu0 0.0
  %3820 = vmatpush1.msra.mxu0 0.0
  %3821 = vmatprep.subr.mxu0 0.0
  %3822 = vmatpush1.msra.mxu0 0.0
  %3823 = vmatprep.subr.mxu0 0.0
  %3824 = vmatpush1.msra.mxu0 0.0
  %3825 = vmatprep.subr.mxu0 0.0
  %3826 = vmatpush1.msra.mxu0 0.0
  %3827 = vmatprep.subr.mxu0 0.0
  %3828 = vmatpush1.msra.mxu0 0.0
  %3829 = vmatprep.subr.mxu0 0.0
  %3830 = vmatpush1.msra.mxu0 0.0
  %3831 = vmatprep.subr.mxu0 0.0
  %3832 = vmatpush1.msra.mxu0 0.0
  %3833 = vmatprep.subr.mxu0 0.0
  %3834 = vmatpush1.msra.mxu0 0.0
  %3835 = vmatprep.subr.mxu0 0.0
  %3836 = vmatpush1.msra.mxu0 0.0
  %3837 = vmatprep.subr.mxu0 0.0
  %3838 = vmatpush1.msra.mxu0 0.0
  %3839 = vmatprep.subr.mxu0 0.0
  %3840 = vmatpush1.msra.mxu0 0.0
  %3841 = vmatprep.subr.mxu0 0.0
  %3842 = vmatpush1.msra.mxu0 0.0
  %3843 = vmatprep.subr.mxu0 0.0
  %3844 = vmatpush1.msra.mxu0 0.0
  %3845 = vmatprep.subr.mxu0 0.0
  %3846 = vmatpush1.msra.mxu0 0.0
  %3847 = vmatprep.subr.mxu0 0.0
  %3848 = vmatpush1.msra.mxu0 0.0
  %3849 = vmatprep.subr.mxu0 0.0
  %3850 = vmatpush1.msra.mxu0 0.0
  %3851 = vmatprep.subr.mxu0 0.0
  %3852 = vmatpush1.msra.mxu0 0.0
  %3853 = vmatprep.subr.mxu0 0.0
  %3854 = vmatpush1.msra.mxu0 0.0
  %3855 = vmatprep.subr.mxu0 0.0
  %3856 = vmatpush1.msra.mxu0 0.0
  %3857 = vmatprep.subr.mxu0 0.0
  %3858 = vmatpush1.msra.mxu0 0.0
  %3859 = vmatprep.subr.mxu0 0.0
  %3860 = vmatpush1.msra.mxu0 0.0
  %3861 = vmatprep.subr.mxu0 0.0
  %3862 = vmatpush1.msra.mxu0 0.0
  %3863 = vmatprep.subr.mxu0 0.0
  %3864 = vmatpush1.msra.mxu0 0.0
  %3865 = vmatprep.subr.mxu0 0.0
  %3866 = vmatpush1.msra.mxu0 0.0
  %3867 = vmatprep.subr.mxu0 0.0
  %3868 = vmatpush1.msra.mxu0 0.0
  %3869 = vmatprep.subr.mxu0 0.0
  %3870 = vmatpush1.msra.mxu0 0.0
  %3871 = vmatprep.subr.mxu0 0.0
  %3872 = vmatpush1.msra.mxu0 0.0
  %3873 = vmatprep.subr.mxu0 0.0
  %3874 = vmatpush1.msra.mxu0 0.0
  %3875 = vmatprep.subr.mxu0 0.0
  %3876 = vmatpush1.msra.mxu0 0.0
  %3877 = vmatprep.mubr.f32.mxu0 0.0
  %3878 = vmatmul.mubr.f32.gmra.mrb[0].mxu0 %v3671
  %v3879 = vpop.f32.mrb[0].mxu0
  %v3880 = vadd.f32 %v3668, %v3879
  %v3881 = vpop.f32.mrb[0].mxu0
  %3882 = vdwg.mxu0
  %3883 = vmatprep.subr.mxu0 0.0
  %3884 = vmatpush1.msra.mxu0 %v3665
  %3885 = vmatprep.subr.mxu0 0.0
  %3886 = vmatpush1.msra.mxu0 %v3666
  %3887 = vmatprep.subr.mxu0 0.0
  %3888 = vmatpush1.msra.mxu0 0.0
  %3889 = vmatprep.subr.mxu0 0.0
  %3890 = vmatpush1.msra.mxu0 0.0
  %3891 = vmatprep.subr.mxu0 0.0
  %3892 = vmatpush1.msra.mxu0 0.0
  %3893 = vmatprep.subr.mxu0 0.0
  %3894 = vmatpush1.msra.mxu0 0.0
  %3895 = vmatprep.subr.mxu0 0.0
  %3896 = vmatpush1.msra.mxu0 0.0
  %3897 = vmatprep.subr.mxu0 0.0
  %3898 = vmatpush1.msra.mxu0 0.0
  %3899 = vmatprep.subr.mxu0 0.0
  %3900 = vmatpush1.msra.mxu0 0.0
  %3901 = vmatprep.subr.mxu0 0.0
  %3902 = vmatpush1.msra.mxu0 0.0
  %3903 = vmatprep.subr.mxu0 0.0
  %3904 = vmatpush1.msra.mxu0 0.0
  %3905 = vmatprep.subr.mxu0 0.0
  %3906 = vmatpush1.msra.mxu0 0.0
  %3907 = vmatprep.subr.mxu0 0.0
  %3908 = vmatpush1.msra.mxu0 0.0
  %3909 = vmatprep.subr.mxu0 0.0
  %3910 = vmatpush1.msra.mxu0 0.0
  %3911 = vmatprep.subr.mxu0 0.0
  %3912 = vmatpush1.msra.mxu0 0.0
  %3913 = vmatprep.subr.mxu0 0.0
  %3914 = vmatpush1.msra.mxu0 0.0
  %3915 = vmatprep.subr.mxu0 0.0
  %3916 = vmatpush1.msra.mxu0 0.0
  %3917 = vmatprep.subr.mxu0 0.0
  %3918 = vmatpush1.msra.mxu0 0.0
  %3919 = vmatprep.subr.mxu0 0.0
  %3920 = vmatpush1.msra.mxu0 0.0
  %3921 = vmatprep.subr.mxu0 0.0
  %3922 = vmatpush1.msra.mxu0 0.0
  %3923 = vmatprep.subr.mxu0 0.0
  %3924 = vmatpush1.msra.mxu0 0.0
  %3925 = vmatprep.subr.mxu0 0.0
  %3926 = vmatpush1.msra.mxu0 0.0
  %3927 = vmatprep.subr.mxu0 0.0
  %3928 = vmatpush1.msra.mxu0 0.0
  %3929 = vmatprep.subr.mxu0 0.0
  %3930 = vmatpush1.msra.mxu0 0.0
  %3931 = vmatprep.subr.mxu0 0.0
  %3932 = vmatpush1.msra.mxu0 0.0
  %3933 = vmatprep.subr.mxu0 0.0
  %3934 = vmatpush1.msra.mxu0 0.0
  %3935 = vmatprep.subr.mxu0 0.0
  %3936 = vmatpush1.msra.mxu0 0.0
  %3937 = vmatprep.subr.mxu0 0.0
  %3938 = vmatpush1.msra.mxu0 0.0
  %3939 = vmatprep.subr.mxu0 0.0
  %3940 = vmatpush1.msra.mxu0 0.0
  %3941 = vmatprep.subr.mxu0 0.0
  %3942 = vmatpush1.msra.mxu0 0.0
  %3943 = vmatprep.subr.mxu0 0.0
  %3944 = vmatpush1.msra.mxu0 0.0
  %3945 = vmatprep.subr.mxu0 0.0
  %3946 = vmatpush1.msra.mxu0 0.0
  %3947 = vmatprep.mubr.f32.mxu0 0.0
  %3948 = vmatmul.mubr.f32.gmra.mrb[0].mxu0 %v3671
  %v3949 = vpop.f32.mrb[0].mxu0
  %v3950 = vadd.f32 %v3668, %v3949
  %v3951 = vpop.f32.mrb[0].mxu0
  %3952 = vdwg.mxu0
  %v3953 = vld [vmem:[%s4 + $0x38] sm:$0xf]
  %v3954 = vld [vmem:[%s4 + $0x40] sm:$0xf]
  %vm3955 = vcmask 11264
  %v3956 = vsel %vm3955, %v3740, 0.0
  %v3957 = vrot.slane %v3956, 4
  %v3958 = vadd.f32 %v3956, %v3957
  %v3959 = vrot.slane %v3958, 2
  %v3960 = vadd.f32 %v3958, %v3959
  %v3961 = vrot.slane %v3960, 1
  %v3962 = vadd.f32 %v3960, %v3961
  %v3963 = vsel %vm3955, %v3810, 0.0
  %v3964 = vrot.slane %v3963, 4
  %v3965 = vadd.f32 %v3963, %v3964
  %v3966 = vrot.slane %v3965, 2
  %v3967 = vadd.f32 %v3965, %v3966
  %v3968 = vrot.slane %v3967, 1
  %v3969 = vadd.f32 %v3967, %v3968
  %v3970 = vsel %vm3955, %v3880, 0.0
  %v3971 = vrot.slane %v3970, 4
  %v3972 = vadd.f32 %v3970, %v3971
  %v3973 = vrot.slane %v3972, 2
  %v3974 = vadd.f32 %v3972, %v3973
  %v3975 = vrot.slane %v3974, 1
  %v3976 = vadd.f32 %v3974, %v3975
  %v3977 = vsel %vm3955, %v3950, 0.0
  %v3978 = vrot.slane %v3977, 4
  %v3979 = vadd.f32 %v3977, %v3978
  %v3980 = vrot.slane %v3979, 2
  %v3981 = vadd.f32 %v3979, %v3980
  %v3982 = vrot.slane %v3981, 1
  %v3983 = vadd.f32 %v3981, %v3982
  %v3984 = vrcp.pop 4.0
  %v3985 = vmul.f32 %v3962, %v3984
  %v3986 = vmul.f32 %v3969, %v3984
  %v3987 = vmul.f32 %v3976, %v3984
  %v3988 = vmul.f32 %v3983, %v3984
  %v3989 = vsub.f32 %v3740, %v3985
  %v3990 = vsub.f32 %v3810, %v3986
  %v3991 = vsub.f32 %v3880, %v3987
  %v3992 = vsub.f32 %v3950, %v3988
  %v3993 = vmul.f32 %v3989, %v3989
  %v3994 = vmul.f32 %v3990, %v3990
  %v3995 = vmul.f32 %v3991, %v3991
  %v3996 = vmul.f32 %v3992, %v3992
  %v3997 = vsel %vm3955, %v3993, 0.0
  %v3998 = vrot.slane %v3997, 4
  %v3999 = vadd.f32 %v3997, %v3998
  %v4000 = vrot.slane %v3999, 2
  %v4001 = vadd.f32 %v3999, %v4000
  %v4002 = vrot.slane %v4001, 1
  %v4003 = vadd.f32 %v4001, %v4002
  %v4004 = vsel %vm3955, %v3994, 0.0
  %v4005 = vrot.slane %v4004, 4
  %v4006 = vadd.f32 %v4004, %v4005
  %v4007 = vrot.slane %v4006, 2
  %v4008 = vadd.f32 %v4006, %v4007
  %v4009 = vrot.slane %v4008, 1
  %v4010 = vadd.f32 %v4008, %v4009
  %v4011 = vsel %vm3955, %v3995, 0.0
  %v4012 = vrot.slane %v4011, 4
  %v4013 = vadd.f32 %v4011, %v4012
  %v4014 = vrot.slane %v4013, 2
  %v4015 = vadd.f32 %v4013, %v4014
  %v4016 = vrot.slane %v4015, 1
  %v4017 = vadd.f32 %v4015, %v4016
  %v4018 = vsel %vm3955, %v3996, 0.0
  %v4019 = vrot.slane %v4018, 4
  %v4020 = vadd.f32 %v4018, %v4019
  %v4021 = vrot.slane %v4020, 2
  %v4022 = vadd.f32 %v4020, %v4021
  %v4023 = vrot.slane %v4022, 1
  %v4024 = vadd.f32 %v4022, %v4023
  %v4025 = vmul.f32 %v4003, %v3984
  %v4026 = vmul.f32 %v4010, %v3984
  %v4027 = vmul.f32 %v4017, %v3984
  %v4028 = vmul.f32 %v4024, %v3984
  %v4029 = vadd.f32 %v4025, 1e-05
  %v4030 = vadd.f32 %v4026, 1e-05
  %v4031 = vadd.f32 %v4027, 1e-05
  %v4032 = vadd.f32 %v4028, 1e-05
  %v4033 = vrsqrt.pop %v4029
  %v4034 = vrsqrt.pop %v4030
  %v4035 = vrsqrt.pop %v4031
  %v4036 = vrsqrt.pop %v4032
  %v4037 = vmul.f32 %v3989, %v4033
  %v4038 = vmul.f32 %v3990, %v4034
  %v4039 = vmul.f32 %v3991, %v4035
  %v4040 = vmul.f32 %v3992, %v4036
  %v4041 = vmul.f32 %v4037, %v3953
  %v4042 = vmul.f32 %v4038, %v3953
  %v4043 = vmul.f32 %v4039, %v3953
  %v4044 = vmul.f32 %v4040, %v3953
  %v4045 = vadd.f32 %v4041, %v3954
  %v4046 = vadd.f32 %v4042, %v3954
  %v4047 = vadd.f32 %v4043, %v3954
  %v4048 = vadd.f32 %v4044, %v3954
  %v4049 = vmax.f32 %v4045, 0.0
  %v4050 = vmax.f32 %v4046, 0.0
  %v4051 = vmax.f32 %v4047, 0.0
  %v4052 = vmax.f32 %v4048, 0.0
  %v4053 = vld [vmem:[%s2 + $0x28] sm:$0x3]
  %v4054 = vld [vmem:[%s3 + $0x50] sm:$0x1]
  %v4055 = vlaneseq
  %v4056 = vshrl.u32 %v4055, 7
  %v4057 = vsub.s32 0, %v4056
  %v4058 = vrot.slane %v4054, %v4057
  %v4060 = vsel %vm3529, %v4049, 0
  %vm4062 = vcmask 1041408
  %v4064 = vsel %vm4062, %v4053, 0
  %4066 = vmatprep.subr.mxu0 0.0
  %4067 = vmatpush1.msra.mxu0 %v4064
  %4068 = vmatprep.subr.mxu0 0.0
  %4069 = vmatpush1.msra.mxu0 0.0
  %4070 = vmatprep.subr.mxu0 0.0
  %4071 = vmatpush1.msra.mxu0 0.0
  %4072 = vmatprep.subr.mxu0 0.0
  %4073 = vmatpush1.msra.mxu0 0.0
  %4074 = vmatprep.subr.mxu0 0.0
  %4075 = vmatpush1.msra.mxu0 0.0
  %4076 = vmatprep.subr.mxu0 0.0
  %4077 = vmatpush1.msra.mxu0 0.0
  %4078 = vmatprep.subr.mxu0 0.0
  %4079 = vmatpush1.msra.mxu0 0.0
  %4080 = vmatprep.subr.mxu0 0.0
  %4081 = vmatpush1.msra.mxu0 0.0
  %4082 = vmatprep.subr.mxu0 0.0
  %4083 = vmatpush1.msra.mxu0 0.0
  %4084 = vmatprep.subr.mxu0 0.0
  %4085 = vmatpush1.msra.mxu0 0.0
  %4086 = vmatprep.subr.mxu0 0.0
  %4087 = vmatpush1.msra.mxu0 0.0
  %4088 = vmatprep.subr.mxu0 0.0
  %4089 = vmatpush1.msra.mxu0 0.0
  %4090 = vmatprep.subr.mxu0 0.0
  %4091 = vmatpush1.msra.mxu0 0.0
  %4092 = vmatprep.subr.mxu0 0.0
  %4093 = vmatpush1.msra.mxu0 0.0
  %4094 = vmatprep.subr.mxu0 0.0
  %4095 = vmatpush1.msra.mxu0 0.0
  %4096 = vmatprep.subr.mxu0 0.0
  %4097 = vmatpush1.msra.mxu0 0.0
  %4098 = vmatprep.subr.mxu0 0.0
  %4099 = vmatpush1.msra.mxu0 0.0
  %4100 = vmatprep.subr.mxu0 0.0
  %4101 = vmatpush1.msra.mxu0 0.0
  %4102 = vmatprep.subr.mxu0 0.0
  %4103 = vmatpush1.msra.mxu0 0.0
  %4104 = vmatprep.subr.mxu0 0.0
  %4105 = vmatpush1.msra.mxu0 0.0
  %4106 = vmatprep.subr.mxu0 0.0
  %4107 = vmatpush1.msra.mxu0 0.0
  %4108 = vmatprep.subr.mxu0 0.0
  %4109 = vmatpush1.msra.mxu0 0.0
  %4110 = vmatprep.subr.mxu0 0.0
  %4111 = vmatpush1.msra.mxu0 0.0
  %4112 = vmatprep.subr.mxu0 0.0
  %4113 = vmatpush1.msra.mxu0 0.0
  %4114 = vmatprep.subr.mxu0 0.0
  %4115 = vmatpush1.msra.mxu0 0.0
  %4116 = vmatprep.subr.mxu0 0.0
  %4117 = vmatpush1.msra.mxu0 0.0
  %4118 = vmatprep.subr.mxu0 0.0
  %4119 = vmatpush1.msra.mxu0 0.0
  %4120 = vmatprep.subr.mxu0 0.0
  %4121 = vmatpush1.msra.mxu0 0.0
  %4122 = vmatprep.subr.mxu0 0.0
  %4123 = vmatpush1.msra.mxu0 0.0
  %4124 = vmatprep.subr.mxu0 0.0
  %4125 = vmatpush1.msra.mxu0 0.0
  %4126 = vmatprep.subr.mxu0 0.0
  %4127 = vmatpush1.msra.mxu0 0.0
  %4128 = vmatprep.subr.mxu0 0.0
  %4129 = vmatpush1.msra.mxu0 0.0
  %4130 = vmatprep.mubr.f32.mxu0 0.0
  %4131 = vmatmul.mubr.f32.gmra.mrb[0].mxu0 %v4060
  %v4132 = vpop.f32.mrb[0].mxu0
  %v4133 = vadd.f32 %v4058, %v4132
  %v4134 = vpop.f32.mrb[0].mxu0
  %4135 = vdwg.mxu0
  %v4137 = vsel %vm3529, %v4050, 0
  %4139 = vmatprep.subr.mxu0 0.0
  %4140 = vmatpush1.msra.mxu0 %v4064
  %4141 = vmatprep.subr.mxu0 0.0
  %4142 = vmatpush1.msra.mxu0 0.0
  %4143 = vmatprep.subr.mxu0 0.0
  %4144 = vmatpush1.msra.mxu0 0.0
  %4145 = vmatprep.subr.mxu0 0.0
  %4146 = vmatpush1.msra.mxu0 0.0
  %4147 = vmatprep.subr.mxu0 0.0
  %4148 = vmatpush1.msra.mxu0 0.0
  %4149 = vmatprep.subr.mxu0 0.0
  %4150 = vmatpush1.msra.mxu0 0.0
  %4151 = vmatprep.subr.mxu0 0.0
  %4152 = vmatpush1.msra.mxu0 0.0
  %4153 = vmatprep.subr.mxu0 0.0
  %4154 = vmatpush1.msra.mxu0 0.0
  %4155 = vmatprep.subr.mxu0 0.0
  %4156 = vmatpush1.msra.mxu0 0.0
  %4157 = vmatprep.subr.mxu0 0.0
  %4158 = vmatpush1.msra.mxu0 0.0
  %4159 = vmatprep.subr.mxu0 0.0
  %4160 = vmatpush1.msra.mxu0 0.0
  %4161 = vmatprep.subr.mxu0 0.0
  %4162 = vmatpush1.msra.mxu0 0.0
  %4163 = vmatprep.subr.mxu0 0.0
  %4164 = vmatpush1.msra.mxu0 0.0
  %4165 = vmatprep.subr.mxu0 0.0
  %4166 = vmatpush1.msra.mxu0 0.0
  %4167 = vmatprep.subr.mxu0 0.0
  %4168 = vmatpush1.msra.mxu0 0.0
  %4169 = vmatprep.subr.mxu0 0.0
  %4170 = vmatpush1.msra.mxu0 0.0
  %4171 = vmatprep.subr.mxu0 0.0
  %4172 = vmatpush1.msra.mxu0 0.0
  %4173 = vmatprep.subr.mxu0 0.0
  %4174 = vmatpush1.msra.mxu0 0.0
  %4175 = vmatprep.subr.mxu0 0.0
  %4176 = vmatpush1.msra.mxu0 0.0
  %4177 = vmatprep.subr.mxu0 0.0
  %4178 = vmatpush1.msra.mxu0 0.0
  %4179 = vmatprep.subr.mxu0 0.0
  %4180 = vmatpush1.msra.mxu0 0.0
  %4181 = vmatprep.subr.mxu0 0.0
  %4182 = vmatpush1.msra.mxu0 0.0
  %4183 = vmatprep.subr.mxu0 0.0
  %4184 = vmatpush1.msra.mxu0 0.0
  %4185 = vmatprep.subr.mxu0 0.0
  %4186 = vmatpush1.msra.mxu0 0.0
  %4187 = vmatprep.subr.mxu0 0.0
  %4188 = vmatpush1.msra.mxu0 0.0
  %4189 = vmatprep.subr.mxu0 0.0
  %4190 = vmatpush1.msra.mxu0 0.0
  %4191 = vmatprep.subr.mxu0 0.0
  %4192 = vmatpush1.msra.mxu0 0.0
  %4193 = vmatprep.subr.mxu0 0.0
  %4194 = vmatpush1.msra.mxu0 0.0
  %4195 = vmatprep.subr.mxu0 0.0
  %4196 = vmatpush1.msra.mxu0 0.0
  %4197 = vmatprep.subr.mxu0 0.0
  %4198 = vmatpush1.msra.mxu0 0.0
  %4199 = vmatprep.subr.mxu0 0.0
  %4200 = vmatpush1.msra.mxu0 0.0
  %4201 = vmatprep.subr.mxu0 0.0
  %4202 = vmatpush1.msra.mxu0 0.0
  %4203 = vmatprep.mubr.f32.mxu0 0.0
  %4204 = vmatmul.mubr.f32.gmra.mrb[0].mxu0 %v4137
  %v4205 = vpop.f32.mrb[0].mxu0
  %v4206 = vadd.f32 %v4058, %v4205
  %v4207 = vpop.f32.mrb[0].mxu0
  %4208 = vdwg.mxu0
  %v4210 = vsel %vm3529, %v4051, 0
  %4212 = vmatprep.subr.mxu0 0.0
  %4213 = vmatpush1.msra.mxu0 %v4064
  %4214 = vmatprep.subr.mxu0 0.0
  %4215 = vmatpush1.msra.mxu0 0.0
  %4216 = vmatprep.subr.mxu0 0.0
  %4217 = vmatpush1.msra.mxu0 0.0
  %4218 = vmatprep.subr.mxu0 0.0
  %4219 = vmatpush1.msra.mxu0 0.0
  %4220 = vmatprep.subr.mxu0 0.0
  %4221 = vmatpush1.msra.mxu0 0.0
  %4222 = vmatprep.subr.mxu0 0.0
  %4223 = vmatpush1.msra.mxu0 0.0
  %4224 = vmatprep.subr.mxu0 0.0
  %4225 = vmatpush1.msra.mxu0 0.0
  %4226 = vmatprep.subr.mxu0 0.0
  %4227 = vmatpush1.msra.mxu0 0.0
  %4228 = vmatprep.subr.mxu0 0.0
  %4229 = vmatpush1.msra.mxu0 0.0
  %4230 = vmatprep.subr.mxu0 0.0
  %4231 = vmatpush1.msra.mxu0 0.0
  %4232 = vmatprep.subr.mxu0 0.0
  %4233 = vmatpush1.msra.mxu0 0.0
  %4234 = vmatprep.subr.mxu0 0.0
  %4235 = vmatpush1.msra.mxu0 0.0
  %4236 = vmatprep.subr.mxu0 0.0
  %4237 = vmatpush1.msra.mxu0 0.0
  %4238 = vmatprep.subr.mxu0 0.0
  %4239 = vmatpush1.msra.mxu0 0.0
  %4240 = vmatprep.subr.mxu0 0.0
  %4241 = vmatpush1.msra.mxu0 0.0
  %4242 = vmatprep.subr.mxu0 0.0
  %4243 = vmatpush1.msra.mxu0 0.0
  %4244 = vmatprep.subr.mxu0 0.0
  %4245 = vmatpush1.msra.mxu0 0.0
  %4246 = vmatprep.subr.mxu0 0.0
  %4247 = vmatpush1.msra.mxu0 0.0
  %4248 = vmatprep.subr.mxu0 0.0
  %4249 = vmatpush1.msra.mxu0 0.0
  %4250 = vmatprep.subr.mxu0 0.0
  %4251 = vmatpush1.msra.mxu0 0.0
  %4252 = vmatprep.subr.mxu0 0.0
  %4253 = vmatpush1.msra.mxu0 0.0
  %4254 = vmatprep.subr.mxu0 0.0
  %4255 = vmatpush1.msra.mxu0 0.0
  %4256 = vmatprep.subr.mxu0 0.0
  %4257 = vmatpush1.msra.mxu0 0.0
  %4258 = vmatprep.subr.mxu0 0.0
  %4259 = vmatpush1.msra.mxu0 0.0
  %4260 = vmatprep.subr.mxu0 0.0
  %4261 = vmatpush1.msra.mxu0 0.0
  %4262 = vmatprep.subr.mxu0 0.0
  %4263 = vmatpush1.msra.mxu0 0.0
  %4264 = vmatprep.subr.mxu0 0.0
  %4265 = vmatpush1.msra.mxu0 0.0
  %4266 = vmatprep.subr.mxu0 0.0
  %4267 = vmatpush1.msra.mxu0 0.0
  %4268 = vmatprep.subr.mxu0 0.0
  %4269 = vmatpush1.msra.mxu0 0.0
  %4270 = vmatprep.subr.mxu0 0.0
  %4271 = vmatpush1.msra.mxu0 0.0
  %4272 = vmatprep.subr.mxu0 0.0
  %4273 = vmatpush1.msra.mxu0 0.0
  %4274 = vmatprep.subr.mxu0 0.0
  %4275 = vmatpush1.msra.mxu0 0.0
  %4276 = vmatprep.mubr.f32.mxu0 0.0
  %4277 = vmatmul.mubr.f32.gmra.mrb[0].mxu0 %v4210
  %v4278 = vpop.f32.mrb[0].mxu0
  %v4279 = vadd.f32 %v4058, %v4278
  %v4280 = vpop.f32.mrb[0].mxu0
  %4281 = vdwg.mxu0
  %v4283 = vsel %vm3529, %v4052, 0
  %4285 = vmatprep.subr.mxu0 0.0
  %4286 = vmatpush1.msra.mxu0 %v4064
  %4287 = vmatprep.subr.mxu0 0.0
  %4288 = vmatpush1.msra.mxu0 0.0
  %4289 = vmatprep.subr.mxu0 0.0
  %4290 = vmatpush1.msra.mxu0 0.0
  %4291 = vmatprep.subr.mxu0 0.0
  %4292 = vmatpush1.msra.mxu0 0.0
  %4293 = vmatprep.subr.mxu0 0.0
  %4294 = vmatpush1.msra.mxu0 0.0
  %4295 = vmatprep.subr.mxu0 0.0
  %4296 = vmatpush1.msra.mxu0 0.0
  %4297 = vmatprep.subr.mxu0 0.0
  %4298 = vmatpush1.msra.mxu0 0.0
  %4299 = vmatprep.subr.mxu0 0.0
  %4300 = vmatpush1.msra.mxu0 0.0
  %4301 = vmatprep.subr.mxu0 0.0
  %4302 = vmatpush1.msra.mxu0 0.0
  %4303 = vmatprep.subr.mxu0 0.0
  %4304 = vmatpush1.msra.mxu0 0.0
  %4305 = vmatprep.subr.mxu0 0.0
  %4306 = vmatpush1.msra.mxu0 0.0
  %4307 = vmatprep.subr.mxu0 0.0
  %4308 = vmatpush1.msra.mxu0 0.0
  %4309 = vmatprep.subr.mxu0 0.0
  %4310 = vmatpush1.msra.mxu0 0.0
  %4311 = vmatprep.subr.mxu0 0.0
  %4312 = vmatpush1.msra.mxu0 0.0
  %4313 = vmatprep.subr.mxu0 0.0
  %4314 = vmatpush1.msra.mxu0 0.0
  %4315 = vmatprep.subr.mxu0 0.0
  %4316 = vmatpush1.msra.mxu0 0.0
  %4317 = vmatprep.subr.mxu0 0.0
  %4318 = vmatpush1.msra.mxu0 0.0
  %4319 = vmatprep.subr.mxu0 0.0
  %4320 = vmatpush1.msra.mxu0 0.0
  %4321 = vmatprep.subr.mxu0 0.0
  %4322 = vmatpush1.msra.mxu0 0.0
  %4323 = vmatprep.subr.mxu0 0.0
  %4324 = vmatpush1.msra.mxu0 0.0
  %4325 = vmatprep.subr.mxu0 0.0
  %4326 = vmatpush1.msra.mxu0 0.0
  %4327 = vmatprep.subr.mxu0 0.0
  %4328 = vmatpush1.msra.mxu0 0.0
  %4329 = vmatprep.subr.mxu0 0.0
  %4330 = vmatpush1.msra.mxu0 0.0
  %4331 = vmatprep.subr.mxu0 0.0
  %4332 = vmatpush1.msra.mxu0 0.0
  %4333 = vmatprep.subr.mxu0 0.0
  %4334 = vmatpush1.msra.mxu0 0.0
  %4335 = vmatprep.subr.mxu0 0.0
  %4336 = vmatpush1.msra.mxu0 0.0
  %4337 = vmatprep.subr.mxu0 0.0
  %4338 = vmatpush1.msra.mxu0 0.0
  %4339 = vmatprep.subr.mxu0 0.0
  %4340 = vmatpush1.msra.mxu0 0.0
  %4341 = vmatprep.subr.mxu0 0.0
  %4342 = vmatpush1.msra.mxu0 0.0
  %4343 = vmatprep.subr.mxu0 0.0
  %4344 = vmatpush1.msra.mxu0 0.0
  %4345 = vmatprep.subr.mxu0 0.0
  %4346 = vmatpush1.msra.mxu0 0.0
  %4347 = vmatprep.subr.mxu0 0.0
  %4348 = vmatpush1.msra.mxu0 0.0
  %4349 = vmatprep.mubr.f32.mxu0 0.0
  %4350 = vmatmul.mubr.f32.gmra.mrb[0].mxu0 %v4283
  %v4351 = vpop.f32.mrb[0].mxu0
  %v4352 = vadd.f32 %v4058, %v4351
  %v4353 = vpop.f32.mrb[0].mxu0
  %4354 = vdwg.mxu0
  %v4355 = vld [vmem:[%s3 + $0x58] sm:$0x1]
  %v4356 = vld [vmem:[%s3 + $0x60] sm:$0x1]
  %vm4357 = vcmask 60416
  %v4358 = vsel %vm4357, %v4133, 0.0
  %4359 = vadd.xlane.f32.xlu0 %v4358
  %v4360 = vpop.xlane.xlu0 %4359
  %v4361 = vsel %vm4357, %v4206, 0.0
  %4362 = vadd.xlane.f32.xlu0 %v4361
  %v4363 = vpop.xlane.xlu0 %4362
  %v4364 = vsel %vm4357, %v4279, 0.0
  %4365 = vadd.xlane.f32.xlu0 %v4364
  %v4366 = vpop.xlane.xlu0 %4365
  %v4367 = vsel %vm4357, %v4352, 0.0
  %4368 = vadd.xlane.f32.xlu0 %v4367
  %v4369 = vpop.xlane.xlu0 %4368
  %v4370 = vmul.f32 %v4360, %v624
  %v4371 = vmul.f32 %v4363, %v624
  %v4372 = vmul.f32 %v4366, %v624
  %v4373 = vmul.f32 %v4369, %v624
  %v4374 = vsub.f32 %v4133, %v4370
  %v4375 = vsub.f32 %v4206, %v4371
  %v4376 = vsub.f32 %v4279, %v4372
  %v4377 = vsub.f32 %v4352, %v4373
  %v4378 = vmul.f32 %v4374, %v4374
  %v4379 = vmul.f32 %v4375, %v4375
  %v4380 = vmul.f32 %v4376, %v4376
  %v4381 = vmul.f32 %v4377, %v4377
  %v4382 = vsel %vm4357, %v4378, 0.0
  %4383 = vadd.xlane.f32.xlu0 %v4382
  %v4384 = vpop.xlane.xlu0 %4383
  %v4385 = vsel %vm4357, %v4379, 0.0
  %4386 = vadd.xlane.f32.xlu0 %v4385
  %v4387 = vpop.xlane.xlu0 %4386
  %v4388 = vsel %vm4357, %v4380, 0.0
  %4389 = vadd.xlane.f32.xlu0 %v4388
  %v4390 = vpop.xlane.xlu0 %4389
  %v4391 = vsel %vm4357, %v4381, 0.0
  %4392 = vadd.xlane.f32.xlu0 %v4391
  %v4393 = vpop.xlane.xlu0 %4392
  %v4394 = vmul.f32 %v4384, %v624
  %v4395 = vmul.f32 %v4387, %v624
  %v4396 = vmul.f32 %v4390, %v624
  %v4397 = vmul.f32 %v4393, %v624
  %v4398 = vadd.f32 %v4394, 1e-05
  %v4399 = vadd.f32 %v4395, 1e-05
  %v4400 = vadd.f32 %v4396, 1e-05
  %v4401 = vadd.f32 %v4397, 1e-05
  %v4402 = vrsqrt.pop %v4398
  %v4403 = vrsqrt.pop %v4399
  %v4404 = vrsqrt.pop %v4400
  %v4405 = vrsqrt.pop %v4401
  %v4406 = vmul.f32 %v4374, %v4402
  %v4407 = vmul.f32 %v4375, %v4403
  %v4408 = vmul.f32 %v4376, %v4404
  %v4409 = vmul.f32 %v4377, %v4405
  %v4410 = vlaneseq
  %v4411 = vshrl.u32 %v4410, 7
  %v4412 = vsub.s32 0, %v4411
  %v4413 = vrot.slane %v4355, %v4412
  %v4414 = vmul.f32 %v4406, %v4413
  %v4415 = vmul.f32 %v4407, %v4413
  %v4416 = vmul.f32 %v4408, %v4413
  %v4417 = vmul.f32 %v4409, %v4413
  %v4418 = vlaneseq
  %v4419 = vshrl.u32 %v4418, 7
  %v4420 = vsub.s32 0, %v4419
  %v4421 = vrot.slane %v4356, %v4420
  %v4422 = vadd.f32 %v4414, %v4421
  %v4423 = vadd.f32 %v4415, %v4421
  %v4424 = vadd.f32 %v4416, %v4421
  %v4425 = vadd.f32 %v4417, %v4421
  %v4426 = vmax.f32 %v4422, 0.0
  %v4427 = vmax.f32 %v4423, 0.0
  %v4428 = vmax.f32 %v4424, 0.0
  %v4429 = vmax.f32 %v4425, 0.0
  %v4430 = vld [vmem:[%s2 + $0x48] sm:$0xff]
  %v4431 = vld [vmem:[%s4 + $0x48] sm:$0xff]
  %vm4432 = vcmask 31744
  %v4434 = vsel %vm4432, %v4430, 0
  %vm4436 = vcmask 1043456
  %v4438 = vsel %vm4436, %v4426, 0
  %4440 = vmatprep.subr.mxu0 0.0
  %4441 = vmatpush1.msra.mxu0 %v4438
  %4442 = vmatprep.subr.mxu0 0.0
  %4443 = vmatpush1.msra.mxu0 0.0
  %4444 = vmatprep.subr.mxu0 0.0
  %4445 = vmatpush1.msra.mxu0 0.0
  %4446 = vmatprep.subr.mxu0 0.0
  %4447 = vmatpush1.msra.mxu0 0.0
  %4448 = vmatprep.subr.mxu0 0.0
  %4449 = vmatpush1.msra.mxu0 0.0
  %4450 = vmatprep.subr.mxu0 0.0
  %4451 = vmatpush1.msra.mxu0 0.0
  %4452 = vmatprep.subr.mxu0 0.0
  %4453 = vmatpush1.msra.mxu0 0.0
  %4454 = vmatprep.subr.mxu0 0.0
  %4455 = vmatpush1.msra.mxu0 0.0
  %4456 = vmatprep.subr.mxu0 0.0
  %4457 = vmatpush1.msra.mxu0 0.0
  %4458 = vmatprep.subr.mxu0 0.0
  %4459 = vmatpush1.msra.mxu0 0.0
  %4460 = vmatprep.subr.mxu0 0.0
  %4461 = vmatpush1.msra.mxu0 0.0
  %4462 = vmatprep.subr.mxu0 0.0
  %4463 = vmatpush1.msra.mxu0 0.0
  %4464 = vmatprep.subr.mxu0 0.0
  %4465 = vmatpush1.msra.mxu0 0.0
  %4466 = vmatprep.subr.mxu0 0.0
  %4467 = vmatpush1.msra.mxu0 0.0
  %4468 = vmatprep.subr.mxu0 0.0
  %4469 = vmatpush1.msra.mxu0 0.0
  %4470 = vmatprep.subr.mxu0 0.0
  %4471 = vmatpush1.msra.mxu0 0.0
  %4472 = vmatprep.subr.mxu0 0.0
  %4473 = vmatpush1.msra.mxu0 0.0
  %4474 = vmatprep.subr.mxu0 0.0
  %4475 = vmatpush1.msra.mxu0 0.0
  %4476 = vmatprep.subr.mxu0 0.0
  %4477 = vmatpush1.msra.mxu0 0.0
  %4478 = vmatprep.subr.mxu0 0.0
  %4479 = vmatpush1.msra.mxu0 0.0
  %4480 = vmatprep.subr.mxu0 0.0
  %4481 = vmatpush1.msra.mxu0 0.0
  %4482 = vmatprep.subr.mxu0 0.0
  %4483 = vmatpush1.msra.mxu0 0.0
  %4484 = vmatprep.subr.mxu0 0.0
  %4485 = vmatpush1.msra.mxu0 0.0
  %4486 = vmatprep.subr.mxu0 0.0
  %4487 = vmatpush1.msra.mxu0 0.0
  %4488 = vmatprep.subr.mxu0 0.0
  %4489 = vmatpush1.msra.mxu0 0.0
  %4490 = vmatprep.subr.mxu0 0.0
  %4491 = vmatpush1.msra.mxu0 0.0
  %4492 = vmatprep.subr.mxu0 0.0
  %4493 = vmatpush1.msra.mxu0 0.0
  %4494 = vmatprep.subr.mxu0 0.0
  %4495 = vmatpush1.msra.mxu0 0.0
  %4496 = vmatprep.subr.mxu0 0.0
  %4497 = vmatpush1.msra.mxu0 0.0
  %4498 = vmatprep.subr.mxu0 0.0
  %4499 = vmatpush1.msra.mxu0 0.0
  %4500 = vmatprep.subr.mxu0 0.0
  %4501 = vmatpush1.msra.mxu0 0.0
  %4502 = vmatprep.subr.mxu0 0.0
  %4503 = vmatpush1.msra.mxu0 0.0
  %4504 = vmatprep.mubr.f32.mxu0 0.0
  %4505 = vmatmul.mubr.f32.gmra.mrb[0].mxu0 %v4434
  %v4506 = vpop.f32.mrb[0].mxu0
  %v4507 = vadd.f32 %v4431, %v4506
  %v4508 = vpop.f32.mrb[0].mxu0
  %4509 = vdwg.mxu0
  %v4511 = vsel %vm4436, %v4427, 0
  %4513 = vmatprep.subr.mxu0 0.0
  %4514 = vmatpush1.msra.mxu0 %v4511
  %4515 = vmatprep.subr.mxu0 0.0
  %4516 = vmatpush1.msra.mxu0 0.0
  %4517 = vmatprep.subr.mxu0 0.0
  %4518 = vmatpush1.msra.mxu0 0.0
  %4519 = vmatprep.subr.mxu0 0.0
  %4520 = vmatpush1.msra.mxu0 0.0
  %4521 = vmatprep.subr.mxu0 0.0
  %4522 = vmatpush1.msra.mxu0 0.0
  %4523 = vmatprep.subr.mxu0 0.0
  %4524 = vmatpush1.msra.mxu0 0.0
  %4525 = vmatprep.subr.mxu0 0.0
  %4526 = vmatpush1.msra.mxu0 0.0
  %4527 = vmatprep.subr.mxu0 0.0
  %4528 = vmatpush1.msra.mxu0 0.0
  %4529 = vmatprep.subr.mxu0 0.0
  %4530 = vmatpush1.msra.mxu0 0.0
  %4531 = vmatprep.subr.mxu0 0.0
  %4532 = vmatpush1.msra.mxu0 0.0
  %4533 = vmatprep.subr.mxu0 0.0
  %4534 = vmatpush1.msra.mxu0 0.0
  %4535 = vmatprep.subr.mxu0 0.0
  %4536 = vmatpush1.msra.mxu0 0.0
  %4537 = vmatprep.subr.mxu0 0.0
  %4538 = vmatpush1.msra.mxu0 0.0
  %4539 = vmatprep.subr.mxu0 0.0
  %4540 = vmatpush1.msra.mxu0 0.0
  %4541 = vmatprep.subr.mxu0 0.0
  %4542 = vmatpush1.msra.mxu0 0.0
  %4543 = vmatprep.subr.mxu0 0.0
  %4544 = vmatpush1.msra.mxu0 0.0
  %4545 = vmatprep.subr.mxu0 0.0
  %4546 = vmatpush1.msra.mxu0 0.0
  %4547 = vmatprep.subr.mxu0 0.0
  %4548 = vmatpush1.msra.mxu0 0.0
  %4549 = vmatprep.subr.mxu0 0.0
  %4550 = vmatpush1.msra.mxu0 0.0
  %4551 = vmatprep.subr.mxu0 0.0
  %4552 = vmatpush1.msra.mxu0 0.0
  %4553 = vmatprep.subr.mxu0 0.0
  %4554 = vmatpush1.msra.mxu0 0.0
  %4555 = vmatprep.subr.mxu0 0.0
  %4556 = vmatpush1.msra.mxu0 0.0
  %4557 = vmatprep.subr.mxu0 0.0
  %4558 = vmatpush1.msra.mxu0 0.0
  %4559 = vmatprep.subr.mxu0 0.0
  %4560 = vmatpush1.msra.mxu0 0.0
  %4561 = vmatprep.subr.mxu0 0.0
  %4562 = vmatpush1.msra.mxu0 0.0
  %4563 = vmatprep.subr.mxu0 0.0
  %4564 = vmatpush1.msra.mxu0 0.0
  %4565 = vmatprep.subr.mxu0 0.0
  %4566 = vmatpush1.msra.mxu0 0.0
  %4567 = vmatprep.subr.mxu0 0.0
  %4568 = vmatpush1.msra.mxu0 0.0
  %4569 = vmatprep.subr.mxu0 0.0
  %4570 = vmatpush1.msra.mxu0 0.0
  %4571 = vmatprep.subr.mxu0 0.0
  %4572 = vmatpush1.msra.mxu0 0.0
  %4573 = vmatprep.subr.mxu0 0.0
  %4574 = vmatpush1.msra.mxu0 0.0
  %4575 = vmatprep.subr.mxu0 0.0
  %4576 = vmatpush1.msra.mxu0 0.0
  %4577 = vmatprep.mubr.f32.mxu0 0.0
  %4578 = vmatmul.mubr.f32.gmra.mrb[0].mxu0 %v4434
  %v4579 = vpop.f32.mrb[0].mxu0
  %v4580 = vadd.f32 %v4431, %v4579
  %v4581 = vpop.f32.mrb[0].mxu0
  %4582 = vdwg.mxu0
  %v4584 = vsel %vm4436, %v4428, 0
  %4586 = vmatprep.subr.mxu0 0.0
  %4587 = vmatpush1.msra.mxu0 %v4584
  %4588 = vmatprep.subr.mxu0 0.0
  %4589 = vmatpush1.msra.mxu0 0.0
  %4590 = vmatprep.subr.mxu0 0.0
  %4591 = vmatpush1.msra.mxu0 0.0
  %4592 = vmatprep.subr.mxu0 0.0
  %4593 = vmatpush1.msra.mxu0 0.0
  %4594 = vmatprep.subr.mxu0 0.0
  %4595 = vmatpush1.msra.mxu0 0.0
  %4596 = vmatprep.subr.mxu0 0.0
  %4597 = vmatpush1.msra.mxu0 0.0
  %4598 = vmatprep.subr.mxu0 0.0
  %4599 = vmatpush1.msra.mxu0 0.0
  %4600 = vmatprep.subr.mxu0 0.0
  %4601 = vmatpush1.msra.mxu0 0.0
  %4602 = vmatprep.subr.mxu0 0.0
  %4603 = vmatpush1.msra.mxu0 0.0
  %4604 = vmatprep.subr.mxu0 0.0
  %4605 = vmatpush1.msra.mxu0 0.0
  %4606 = vmatprep.subr.mxu0 0.0
  %4607 = vmatpush1.msra.mxu0 0.0
  %4608 = vmatprep.subr.mxu0 0.0
  %4609 = vmatpush1.msra.mxu0 0.0
  %4610 = vmatprep.subr.mxu0 0.0
  %4611 = vmatpush1.msra.mxu0 0.0
  %4612 = vmatprep.subr.mxu0 0.0
  %4613 = vmatpush1.msra.mxu0 0.0
  %4614 = vmatprep.subr.mxu0 0.0
  %4615 = vmatpush1.msra.mxu0 0.0
  %4616 = vmatprep.subr.mxu0 0.0
  %4617 = vmatpush1.msra.mxu0 0.0
  %4618 = vmatprep.subr.mxu0 0.0
  %4619 = vmatpush1.msra.mxu0 0.0
  %4620 = vmatprep.subr.mxu0 0.0
  %4621 = vmatpush1.msra.mxu0 0.0
  %4622 = vmatprep.subr.mxu0 0.0
  %4623 = vmatpush1.msra.mxu0 0.0
  %4624 = vmatprep.subr.mxu0 0.0
  %4625 = vmatpush1.msra.mxu0 0.0
  %4626 = vmatprep.subr.mxu0 0.0
  %4627 = vmatpush1.msra.mxu0 0.0
  %4628 = vmatprep.subr.mxu0 0.0
  %4629 = vmatpush1.msra.mxu0 0.0
  %4630 = vmatprep.subr.mxu0 0.0
  %4631 = vmatpush1.msra.mxu0 0.0
  %4632 = vmatprep.subr.mxu0 0.0
  %4633 = vmatpush1.msra.mxu0 0.0
  %4634 = vmatprep.subr.mxu0 0.0
  %4635 = vmatpush1.msra.mxu0 0.0
  %4636 = vmatprep.subr.mxu0 0.0
  %4637 = vmatpush1.msra.mxu0 0.0
  %4638 = vmatprep.subr.mxu0 0.0
  %4639 = vmatpush1.msra.mxu0 0.0
  %4640 = vmatprep.subr.mxu0 0.0
  %4641 = vmatpush1.msra.mxu0 0.0
  %4642 = vmatprep.subr.mxu0 0.0
  %4643 = vmatpush1.msra.mxu0 0.0
  %4644 = vmatprep.subr.mxu0 0.0
  %4645 = vmatpush1.msra.mxu0 0.0
  %4646 = vmatprep.subr.mxu0 0.0
  %4647 = vmatpush1.msra.mxu0 0.0
  %4648 = vmatprep.subr.mxu0 0.0
  %4649 = vmatpush1.msra.mxu0 0.0
  %4650 = vmatprep.mubr.f32.mxu0 0.0
  %4651 = vmatmul.mubr.f32.gmra.mrb[0].mxu0 %v4434
  %v4652 = vpop.f32.mrb[0].mxu0
  %v4653 = vadd.f32 %v4431, %v4652
  %v4654 = vpop.f32.mrb[0].mxu0
  %4655 = vdwg.mxu0
  %v4657 = vsel %vm4436, %v4429, 0
  %4659 = vmatprep.subr.mxu0 0.0
  %4660 = vmatpush1.msra.mxu0 %v4657
  %4661 = vmatprep.subr.mxu0 0.0
  %4662 = vmatpush1.msra.mxu0 0.0
  %4663 = vmatprep.subr.mxu0 0.0
  %4664 = vmatpush1.msra.mxu0 0.0
  %4665 = vmatprep.subr.mxu0 0.0
  %4666 = vmatpush1.msra.mxu0 0.0
  %4667 = vmatprep.subr.mxu0 0.0
  %4668 = vmatpush1.msra.mxu0 0.0
  %4669 = vmatprep.subr.mxu0 0.0
  %4670 = vmatpush1.msra.mxu0 0.0
  %4671 = vmatprep.subr.mxu0 0.0
  %4672 = vmatpush1.msra.mxu0 0.0
  %4673 = vmatprep.subr.mxu0 0.0
  %4674 = vmatpush1.msra.mxu0 0.0
  %4675 = vmatprep.subr.mxu0 0.0
  %4676 = vmatpush1.msra.mxu0 0.0
  %4677 = vmatprep.subr.mxu0 0.0
  %4678 = vmatpush1.msra.mxu0 0.0
  %4679 = vmatprep.subr.mxu0 0.0
  %4680 = vmatpush1.msra.mxu0 0.0
  %4681 = vmatprep.subr.mxu0 0.0
  %4682 = vmatpush1.msra.mxu0 0.0
  %4683 = vmatprep.subr.mxu0 0.0
  %4684 = vmatpush1.msra.mxu0 0.0
  %4685 = vmatprep.subr.mxu0 0.0
  %4686 = vmatpush1.msra.mxu0 0.0
  %4687 = vmatprep.subr.mxu0 0.0
  %4688 = vmatpush1.msra.mxu0 0.0
  %4689 = vmatprep.subr.mxu0 0.0
  %4690 = vmatpush1.msra.mxu0 0.0
  %4691 = vmatprep.subr.mxu0 0.0
  %4692 = vmatpush1.msra.mxu0 0.0
  %4693 = vmatprep.subr.mxu0 0.0
  %4694 = vmatpush1.msra.mxu0 0.0
  %4695 = vmatprep.subr.mxu0 0.0
  %4696 = vmatpush1.msra.mxu0 0.0
  %4697 = vmatprep.subr.mxu0 0.0
  %4698 = vmatpush1.msra.mxu0 0.0
  %4699 = vmatprep.subr.mxu0 0.0
  %4700 = vmatpush1.msra.mxu0 0.0
  %4701 = vmatprep.subr.mxu0 0.0
  %4702 = vmatpush1.msra.mxu0 0.0
  %4703 = vmatprep.subr.mxu0 0.0
  %4704 = vmatpush1.msra.mxu0 0.0
  %4705 = vmatprep.subr.mxu0 0.0
  %4706 = vmatpush1.msra.mxu0 0.0
  %4707 = vmatprep.subr.mxu0 0.0
  %4708 = vmatpush1.msra.mxu0 0.0
  %4709 = vmatprep.subr.mxu0 0.0
  %4710 = vmatpush1.msra.mxu0 0.0
  %4711 = vmatprep.subr.mxu0 0.0
  %4712 = vmatpush1.msra.mxu0 0.0
  %4713 = vmatprep.subr.mxu0 0.0
  %4714 = vmatpush1.msra.mxu0 0.0
  %4715 = vmatprep.subr.mxu0 0.0
  %4716 = vmatpush1.msra.mxu0 0.0
  %4717 = vmatprep.subr.mxu0 0.0
  %4718 = vmatpush1.msra.mxu0 0.0
  %4719 = vmatprep.subr.mxu0 0.0
  %4720 = vmatpush1.msra.mxu0 0.0
  %4721 = vmatprep.subr.mxu0 0.0
  %4722 = vmatpush1.msra.mxu0 0.0
  %4723 = vmatprep.mubr.f32.mxu0 0.0
  %4724 = vmatmul.mubr.f32.gmra.mrb[0].mxu0 %v4434
  %v4725 = vpop.f32.mrb[0].mxu0
  %v4726 = vadd.f32 %v4431, %v4725
  %v4727 = vpop.f32.mrb[0].mxu0
  %4728 = vdwg.mxu0
  %v4729 = vld [vmem:[%s4 + $0x50] sm:$0xff]
  %v4730 = vld [vmem:[%s4 + $0x58] sm:$0xff]
  %v4731 = vsel %vm527, %v4507, 0.0
  %v4732 = vrot.slane %v4731, 4
  %v4733 = vadd.f32 %v4731, %v4732
  %v4734 = vrot.slane %v4733, 2
  %v4735 = vadd.f32 %v4733, %v4734
  %v4736 = vrot.slane %v4735, 1
  %v4737 = vadd.f32 %v4735, %v4736
  %v4738 = vsel %vm527, %v4580, 0.0
  %v4739 = vrot.slane %v4738, 4
  %v4740 = vadd.f32 %v4738, %v4739
  %v4741 = vrot.slane %v4740, 2
  %v4742 = vadd.f32 %v4740, %v4741
  %v4743 = vrot.slane %v4742, 1
  %v4744 = vadd.f32 %v4742, %v4743
  %v4745 = vsel %vm527, %v4653, 0.0
  %v4746 = vrot.slane %v4745, 4
  %v4747 = vadd.f32 %v4745, %v4746
  %v4748 = vrot.slane %v4747, 2
  %v4749 = vadd.f32 %v4747, %v4748
  %v4750 = vrot.slane %v4749, 1
  %v4751 = vadd.f32 %v4749, %v4750
  %v4752 = vsel %vm527, %v4726, 0.0
  %v4753 = vrot.slane %v4752, 4
  %v4754 = vadd.f32 %v4752, %v4753
  %v4755 = vrot.slane %v4754, 2
  %v4756 = vadd.f32 %v4754, %v4755
  %v4757 = vrot.slane %v4756, 1
  %v4758 = vadd.f32 %v4756, %v4757
  %v4759 = vmul.f32 %v4737, %v624
  %v4760 = vmul.f32 %v4744, %v624
  %v4761 = vmul.f32 %v4751, %v624
  %v4762 = vmul.f32 %v4758, %v624
  %v4763 = vsub.f32 %v4507, %v4759
  %v4764 = vsub.f32 %v4580, %v4760
  %v4765 = vsub.f32 %v4653, %v4761
  %v4766 = vsub.f32 %v4726, %v4762
  %v4767 = vmul.f32 %v4763, %v4763
  %v4768 = vmul.f32 %v4764, %v4764
  %v4769 = vmul.f32 %v4765, %v4765
  %v4770 = vmul.f32 %v4766, %v4766
  %v4771 = vsel %vm527, %v4767, 0.0
  %v4772 = vrot.slane %v4771, 4
  %v4773 = vadd.f32 %v4771, %v4772
  %v4774 = vrot.slane %v4773, 2
  %v4775 = vadd.f32 %v4773, %v4774
  %v4776 = vrot.slane %v4775, 1
  %v4777 = vadd.f32 %v4775, %v4776
  %v4778 = vsel %vm527, %v4768, 0.0
  %v4779 = vrot.slane %v4778, 4
  %v4780 = vadd.f32 %v4778, %v4779
  %v4781 = vrot.slane %v4780, 2
  %v4782 = vadd.f32 %v4780, %v4781
  %v4783 = vrot.slane %v4782, 1
  %v4784 = vadd.f32 %v4782, %v4783
  %v4785 = vsel %vm527, %v4769, 0.0
  %v4786 = vrot.slane %v4785, 4
  %v4787 = vadd.f32 %v4785, %v4786
  %v4788 = vrot.slane %v4787, 2
  %v4789 = vadd.f32 %v4787, %v4788
  %v4790 = vrot.slane %v4789, 1
  %v4791 = vadd.f32 %v4789, %v4790
  %v4792 = vsel %vm527, %v4770, 0.0
  %v4793 = vrot.slane %v4792, 4
  %v4794 = vadd.f32 %v4792, %v4793
  %v4795 = vrot.slane %v4794, 2
  %v4796 = vadd.f32 %v4794, %v4795
  %v4797 = vrot.slane %v4796, 1
  %v4798 = vadd.f32 %v4796, %v4797
  %v4799 = vmul.f32 %v4777, %v624
  %v4800 = vmul.f32 %v4784, %v624
  %v4801 = vmul.f32 %v4791, %v624
  %v4802 = vmul.f32 %v4798, %v624
  %v4803 = vadd.f32 %v4799, 1e-05
  %v4804 = vadd.f32 %v4800, 1e-05
  %v4805 = vadd.f32 %v4801, 1e-05
  %v4806 = vadd.f32 %v4802, 1e-05
  %v4807 = vrsqrt.pop %v4803
  %v4808 = vrsqrt.pop %v4804
  %v4809 = vrsqrt.pop %v4805
  %v4810 = vrsqrt.pop %v4806
  %v4811 = vmul.f32 %v4763, %v4807
  %v4812 = vmul.f32 %v4764, %v4808
  %v4813 = vmul.f32 %v4765, %v4809
  %v4814 = vmul.f32 %v4766, %v4810
  %v4815 = vmul.f32 %v4811, %v4729
  %v4816 = vmul.f32 %v4812, %v4729
  %v4817 = vmul.f32 %v4813, %v4729
  %v4818 = vmul.f32 %v4814, %v4729
  %v4819 = vadd.f32 %v4815, %v4730
  %v4820 = vadd.f32 %v4816, %v4730
  %v4821 = vadd.f32 %v4817, %v4730
  %v4822 = vadd.f32 %v4818, %v4730
  %v4823 = vmax.f32 %v4819, 0.0
  %v4824 = vmax.f32 %v4820, 0.0
  %v4825 = vmax.f32 %v4821, 0.0
  %v4826 = vmax.f32 %v4822, 0.0
  %v4827 = vld [vmem:[%s2 + $0x50] sm:$0xff]
  %v4828 = vld [vmem:[%s2 + $0x58] sm:$0xff]
  %v4829 = vmul.f32 %v4823, %v4827
  %v4830 = vmul.f32 %v4824, %v4827
  %v4831 = vmul.f32 %v4825, %v4827
  %v4832 = vmul.f32 %v4826, %v4827
  %v4833 = vsel %vm527, %v4829, 0.0
  %4834 = vadd.xlane.f32.xlu0 %v4833
  %v4835 = vpop.xlane.xlu0 %4834
  %v4836 = vsel %vm527, %v4830, 0.0
  %4837 = vadd.xlane.f32.xlu0 %v4836
  %v4838 = vpop.xlane.xlu0 %4837
  %v4839 = vsel %vm527, %v4831, 0.0
  %4840 = vadd.xlane.f32.xlu0 %v4839
  %v4841 = vpop.xlane.xlu0 %4840
  %v4842 = vsel %vm527, %v4832, 0.0
  %4843 = vadd.xlane.f32.xlu0 %v4842
  %v4844 = vpop.xlane.xlu0 %4843
  %v4849 = vlaneseq
  %v4850 = vand.u32 %v4849, 127
  %v4851 = vlaneseq
  %v4852 = vshrl.u32 %v4851, 7
  %v4853 = vsub.s32 %v4850, %v4852
  %v4854 = vrot.slane %v4835, %v4853
  %v4855 = vlaneseq
  %v4856 = vshrl.u32 %v4855, 7
  %v4857 = vsub.s32 %v4850, %v4856
  %v4858 = vrot.slane %v4838, %v4857
  %v4859 = vlaneseq
  %v4860 = vshrl.u32 %v4859, 7
  %v4861 = vsub.s32 %v4850, %v4860
  %v4862 = vrot.slane %v4841, %v4861
  %v4863 = vlaneseq
  %v4864 = vshrl.u32 %v4863, 7
  %v4865 = vsub.s32 %v4850, %v4864
  %v4866 = vrot.slane %v4844, %v4865
  %vm4867 = vcmask 1041409
  %v4868 = vsel %vm4867, %v4858, %v4854
  %vm4869 = vcmask 1042434
  %v4870 = vsel %vm4869, %v4862, %v4868
  %vm4871 = vcmask 1043459
  %v4872 = vsel %vm4871, %v4866, %v4870
  %v4874 = vsel %vm4357, %v4872, 0.0
  %4875 = vadd.xlane.f32.xlu0 %v4874
  %v4876 = vpop.xlane.xlu0 %4875
  %v4877 = vmul.f32 %v4823, %v4828
  %v4878 = vmul.f32 %v4824, %v4828
  %v4879 = vmul.f32 %v4825, %v4828
  %v4880 = vmul.f32 %v4826, %v4828
  %v4881 = vsel %vm527, %v4877, 0.0
  %4882 = vadd.xlane.f32.xlu0 %v4881
  %v4883 = vpop.xlane.xlu0 %4882
  %v4884 = vsel %vm527, %v4878, 0.0
  %4885 = vadd.xlane.f32.xlu0 %v4884
  %v4886 = vpop.xlane.xlu0 %4885
  %v4887 = vsel %vm527, %v4879, 0.0
  %4888 = vadd.xlane.f32.xlu0 %v4887
  %v4889 = vpop.xlane.xlu0 %4888
  %v4890 = vsel %vm527, %v4880, 0.0
  %4891 = vadd.xlane.f32.xlu0 %v4890
  %v4892 = vpop.xlane.xlu0 %4891
  %v4897 = vlaneseq
  %v4898 = vshrl.u32 %v4897, 7
  %v4899 = vsub.s32 %v4850, %v4898
  %v4900 = vrot.slane %v4883, %v4899
  %v4901 = vlaneseq
  %v4902 = vshrl.u32 %v4901, 7
  %v4903 = vsub.s32 %v4850, %v4902
  %v4904 = vrot.slane %v4886, %v4903
  %v4905 = vlaneseq
  %v4906 = vshrl.u32 %v4905, 7
  %v4907 = vsub.s32 %v4850, %v4906
  %v4908 = vrot.slane %v4889, %v4907
  %v4909 = vlaneseq
  %v4910 = vshrl.u32 %v4909, 7
  %v4911 = vsub.s32 %v4850, %v4910
  %v4912 = vrot.slane %v4892, %v4911
  %v4913 = vsel %vm4867, %v4904, %v4900
  %v4914 = vsel %vm4869, %v4908, %v4913
  %v4915 = vsel %vm4871, %v4912, %v4914
  %v4917 = vsel %vm4357, %v4915, 0.0
  %4918 = vadd.xlane.f32.xlu0 %v4917
  %v4919 = vpop.xlane.xlu0 %4918
  %vm4920 = vcmask 7168
  %v4921 = vsel %vm4920, %v4876, %v4919
  %v4922 = vld [vmem:[%s3 + $0x68] sm:$0x1]
  %v4923 = vlaneseq
  %v4924 = vshrl.u32 %v4923, 7
  %v4925 = vsub.s32 0, %v4924
  %v4926 = vrot.slane %v4922, %v4925
  %v4927 = vadd.f32 %v4921, %v4926
  %v4928 = vxor.u32 %v4927, 2147483648
  %v4929 = vmul.f32 %v4928, 1.442695
  %v4930 = vpow.pop %v4929
  %v4931 = vadd.f32 %v4930, 1.0
  %v4932 = vrcp.pop %v4931
  %v4933 = vmul.f32 1.0, %v4932
  %4934 = vst.msk [vmem:[%s5] sm:$0xf] %vm3955, %v4933
  // Predicated region
  $region22: #{size_forward_pallas.1} parent=0 // pred_check
    _
  $region23: #{size_forward_pallas.1} parent=0 // pred_check_branch
    %4936 = sbr.rel (0) target = $region25
  $region24: #{size_forward_pallas.1} parent=0 // pred_region
    _
  $region25: #{size_forward_pallas.1} parent=0 // pred_fallthru
    _
  // Predicated region
  $region26: #{size_forward_pallas.1} parent=0 // pred_check
    _
  $region27: #{size_forward_pallas.1} parent=0 // pred_check_branch
    %4938 = sbr.rel (0) target = $region29
  $region28: #{size_forward_pallas.1} parent=0 // pred_region
    _
  $region29: #{size_forward_pallas.1} parent=0 // pred_fallthru
    _

</llo_original>
